<compile_context>
chip_gen: v7x
topology: tpu7x:2x2x1
jax: 0.10.0
libtpu: 0.0.40
codegen_flags: <defaults>
</compile_context>

<pallas_src>
import functools

import jax
import jax.numpy as jnp
from jax import lax
from jax.experimental import pallas as pl
from jax.experimental.pallas import tpu as pltpu

_NEG = -1.0e30  # pushes padded points out of the per-pillar max (applied post-matmul)


def _round_up(x, m):
    return (x + m - 1) // m * m


def _pfn_kernel(side_ref, feat_ref, wcat_ref, w2_ref, bias_ref, out_ref,
                *, n_points, n_valid):
    """One tile of pillars.

    side_ref : [TP, 4]          f32   (num_points, x_center, y_center, 0)
    feat_ref : [TP, N*D]        bf16  flattened raw point features (lane = point*D + chan)
    wcat_ref : [N*D, N*C + C]   bf16  fused weight: block-diag per-point + tiled W_cluster
    w2_ref   : [2, C]           f32   scale-folded f_center weight rows
    bias_ref : [1, C]           f32   folded BatchNorm bias
    out_ref  : [TP, C]          f32
    """
    tp = feat_ref.shape[0]
    c = out_ref.shape[-1]
    n = n_points

    nvox = side_ref[:, 0:1]                       # [TP, 1] valid points per pillar (f32)
    offx = side_ref[:, 1:2]                       # [TP, 1] pillar x center
    offy = side_ref[:, 2:3]                       # [TP, 1] pillar y center
    nvox_i = nvox.astype(jnp.int32)               # [TP, 1] int copy for the lane mask

    # Single bf16 MXU call (f32 accumulation).  Per pillar it produces:
    #   lanes [0, N*C)    per-point linear outputs (BN scale folded into the weight)
    #   lanes [N*C, +C)   sum over ALL N point slots of xyz @ W_cluster
    #                     (the reference uses the unmasked sum for points_mean)
    big = jnp.dot(feat_ref[...], wcat_ref[...], preferred_element_type=jnp.float32)

    y = big[:, : n * c]                           # [TP, N*C]
    corr_sum = big[:, n * c:]                     # [TP, C]

    # Post-matmul padded-point mask: point p owns lanes [p*C, (p+1)*C); valid iff p < nvox,
    # i.e. lane < nvox*C.  (Replaces the old sentinel rows that doubled the contraction K.)
    lane_i = lax.broadcasted_iota(jnp.int32, (tp, n * c), 1)
    y = jnp.where(lane_i < nvox_i * c, y, _NEG)

    # Max over the point axis via a lane-halving tree (n is a power of two).
    m = y
    width = n * c
    while width > c:
        width //= 2
        m = jnp.maximum(m[:, :width], m[:, width:])            # -> [TP, C]

    # Per-pillar correction: points_mean @ W_cluster + pillar_center @ W_center.
    # Divide stays on [TP, 1] only, negligible vs. the matmul.
    inv_n = 1.0 / jnp.maximum(nvox, 1.0)   # guard empty pillars (reference would give NaN)
    corr = corr_sum * inv_n + offx * w2_ref[0:1, :] + offy * w2_ref[1:2, :]
    pre = m - corr

    # Reference: padded rows contribute relu(bn_bias) to the channel max; equivalently,
    # include 0 in the pre-bias max whenever the pillar actually has padded points.
    pre = jnp.where(nvox < float(n_valid), jnp.maximum(pre, 0.0), pre)

    # Folded BN bias + ReLU after the max (monotone => identical result).
    out_ref[...] = jnp.maximum(pre + bias_ref[...], 0.0)


def pillar_feature_net(features, num_voxels, coors, w, scale, bias,
                       *, voxel_size=(0.2, 0.2, 4.0),
                       pc_range=(0.0, -40.0, -3.0, 70.4, 40.0, 1.0),
                       tile_p=1024):
    """features: [P,N,D] f32, num_voxels: [P] i32, coors: [P,4] i32 (batch,z,y,x),
       w: [D+5, C] f32 Linear weight stored [in, out], scale/bias: [C] folded BatchNorm."""
    P, N, D = features.shape
    C = w.shape[1]
    assert w.shape[0] == D + 5 and D >= 3
    n_valid = N

    features = features.astype(jnp.float32)

    # Pad the point axis to a power of two (for the in-kernel tree max); the extra zero
    # points never win the max (masked) and add zero to the unmasked xyz sum.
    n_pad = max(1, 1 << (N - 1).bit_length()) if N > 1 else 1
    if n_pad != N:
        features = jnp.pad(features, ((0, 0), (0, n_pad - N), (0, 0)))
        N = n_pad

    # Pillar tile: as big as sensible (amortizes ~0.35us/step), multiple of 8, auto-shrunk
    # so the "parallel" grid has >= 4 steps (both v7x TensorCores get >= 2 steps each).
    tile = max(8, min(_round_up(tile_p, 8), _round_up(P, 8)))
    while tile > 64 and pl.cdiv(P, tile) < 4:
        tile //= 2
    tile = _round_up(tile, 8)
    p_pad = _round_up(P, tile)
    if p_pad != P:
        features = jnp.pad(features, ((0, p_pad - P), (0, 0), (0, 0)))
        num_voxels = jnp.pad(num_voxels, (0, p_pad - P))
        coors = jnp.pad(coors, ((0, p_pad - P), (0, 0)))

    vx, vy = float(voxel_size[0]), float(voxel_size[1])
    x_offset = vx / 2.0 + float(pc_range[0])
    y_offset = vy / 2.0 + float(pc_range[1])

    # Lane-dense bf16 feature layout: one pillar per row (halves the per-tile feature DMA).
    feat_flat = features.reshape(p_pad, N * D).astype(jnp.bfloat16)

    # Merged per-pillar sidecar: valid-point count + pillar (x, y) center (kept in f32).
    nvox_f = num_voxels.astype(jnp.float32)
    offx = coors[:, 3].astype(jnp.float32) * vx + x_offset
    offy = coors[:, 2].astype(jnp.float32) * vy + y_offset
    side = jnp.stack([nvox_f, offx, offy, jnp.zeros_like(nvox_f)], axis=-1)   # [P, 4]

    # Fold BN scale into the Linear weight, then use linearity:
    #   aug @ W = feat @ (W_feat + pad(W_cluster) + pad(W_center))
    #             - (points_mean @ W_cluster + pillar_center @ W_center)
    ws = w.astype(jnp.float32) * scale.reshape(1, C).astype(jnp.float32)
    w_feat, w_clu, w_ctr = ws[:D], ws[D:D + 3], ws[D + 3:D + 5]
    w_clu_pad = jnp.concatenate([w_clu, jnp.zeros((D - 3, C), jnp.float32)], axis=0)
    w_ctr_pad = jnp.concatenate([w_ctr, jnp.zeros((D - 2, C), jnp.float32)], axis=0)
    w_point = w_feat + w_clu_pad + w_ctr_pad                               # [D, C]

    # Fused weight for one [TP, N*D] @ [N*D, N*C + C] MXU call (bf16 operands, f32 acc):
    #   cols [0, N*C)   block-diag per-point weight   -> per-point outputs
    #   cols [N*C, +C)  tiled W_cluster               -> unmasked sum_xyz @ W_cluster
    eye_n = jnp.eye(N, dtype=jnp.float32)
    w_big = jnp.kron(eye_n, w_point)                                       # [N*D, N*C]
    g_sum = jnp.tile(w_clu_pad, (N, 1))                                    # [N*D, C]
    w_cat = jnp.concatenate([w_big, g_sum], axis=1).astype(jnp.bfloat16)   # [N*D, N*C+C]

    bias2d = bias.reshape(1, C).astype(jnp.float32)
    w2 = w_ctr.astype(jnp.float32)                                         # [2, C]

    grid = (p_pad // tile,)
    kernel = functools.partial(_pfn_kernel, n_points=N, n_valid=n_valid)
    out = pl.pallas_call(
        kernel,
        out_shape=jax.ShapeDtypeStruct((p_pad, C), jnp.float32),
        grid=grid,
        in_specs=[
            pl.BlockSpec((tile, 4), lambda i: (i, 0)),                # per-pillar sidecar
            pl.BlockSpec((tile, N * D), lambda i: (i, 0)),            # dense bf16 features
            pl.BlockSpec((N * D, N * C + C), lambda i: (0, 0)),       # fused weight (resident)
            pl.BlockSpec((2, C), lambda i: (0, 0)),                   # W_center rows
            pl.BlockSpec((1, C), lambda i: (0, 0)),                   # folded BN bias
        ],
        out_specs=pl.BlockSpec((tile, C), lambda i: (i, 0)),
        compiler_params=pltpu.CompilerParams(
            dimension_semantics=("parallel",),
            vmem_limit_bytes=48 * 1024 * 1024),
    )(side, feat_flat, w_cat, w2, bias2d)
    return out[:P]


def pillar_feature_net_ref(features, num_voxels, coors, w, scale, bias,
                           voxel_size=(0.2, 0.2, 4.0),
                           pc_range=(0.0, -40.0, -3.0, 70.4, 40.0, 1.0)):
    """Pure-JAX reference mirroring the PyTorch forward (inference-mode BN)."""
    vx, vy = voxel_size[0], voxel_size[1]
    x_offset = vx / 2.0 + pc_range[0]
    y_offset = vy / 2.0 + pc_range[1]
    nv = num_voxels.astype(jnp.float32).reshape(-1, 1, 1)
    points_mean = jnp.sum(features[:, :, :3], axis=1, keepdims=True) / nv
    f_cluster = features[:, :, :3] - points_mean
    fcx = features[:, :, 0] - (coors[:, 3].astype(jnp.float32)[:, None] * vx + x_offset)
    fcy = features[:, :, 1] - (coors[:, 2].astype(jnp.float32)[:, None] * vy + y_offset)
    f_center = jnp.stack([fcx, fcy], axis=-1)
    aug = jnp.concatenate([features, f_cluster, f_center], axis=-1)
    N = features.shape[1]
    mask = (jnp.arange(N)[None, :] < num_voxels[:, None]).astype(jnp.float32)[..., None]
    aug = aug * mask
    x = aug @ w
    x = x * scale.reshape(1, 1, -1) + bias.reshape(1, 1, -1)
    x = jnp.maximum(x, 0.0)
    return jnp.max(x, axis=1)


if __name__ == "__main__":
    key = jax.random.PRNGKey(0)
    P, N, D, C = 1024, 32, 4, 64     # pillars, points/pillar, input feats, num_filters[-1]

    k1, k2, k3, k4, k5, k6, k7 = jax.random.split(key, 7)
    features = jax.random.normal(k1, (P, N, D), jnp.float32)
    num_voxels = jax.random.randint(k2, (P,), 1, N + 1, dtype=jnp.int32)
    coors = jax.random.randint(k3, (P, 4), 0, 200, dtype=jnp.int32)   # (batch, z, y, x)

    # Linear(9 -> 64, bias=False) weight, stored as [in, out].
    w = 0.1 * jax.random.normal(k4, (D + 5, C), jnp.float32)
    # BatchNorm1d(64, eps=1e-3) parameters (inference, folded).
    gamma = 1.0 + 0.1 * jax.random.normal(k5, (C,), jnp.float32)
    beta = 0.1 * jax.random.normal(k6, (C,), jnp.float32)
    running_mean = 0.05 * jax.random.normal(k7, (C,), jnp.float32)
    running_var = jnp.ones((C,), jnp.float32)
    eps = 1e-3
    scale = gamma / jnp.sqrt(running_var + eps)
    bias = beta - running_mean * scale

    out = pillar_feature_net(features, num_voxels, coors, w, scale, bias)
    out = jax.block_until_ready(out)
    assert out.shape == (P, C), out.shape

    ref = pillar_feature_net_ref(features, num_voxels, coors, w, scale, bias)
    # Tolerance reflects bf16 MXU operands (f32 accumulation): ~2^-9 relative per operand,
    # amplified by the unmasked points_mean sum (96 terms / num_voxels) for nvox=1 pillars.
    max_err = float(jnp.max(jnp.abs(out - ref)))
    assert jnp.allclose(out, ref, rtol=5e-2, atol=5e-2), max_err

    print("KERNEL_OK")
</pallas_src>

<mosaic_0001>
module attributes {stable_mosaic.version = 11 : i64} {
  func.func @_pfn_kernel(%arg0: i32, %arg1: memref<256x4xf32, #tpu.memory_space<vmem>>, %arg2: memref<256x128xbf16, #tpu.memory_space<vmem>>, %arg3: memref<128x2112xbf16, #tpu.memory_space<vmem>>, %arg4: memref<2x64xf32, #tpu.memory_space<vmem>>, %arg5: memref<1x64xf32, #tpu.memory_space<vmem>>, %arg6: memref<256x64xf32, #tpu.memory_space<vmem>>) attributes {dimension_semantics = [#tpu.dimension_semantics<parallel>], iteration_bounds = array<i64: 4>, scalar_prefetch = 0 : i64, scratch_operands = 0 : i64, tpu.core_type = #tpu.core_type<tc>, window_params = [{transform_indices = @transform_0, window_bounds = array<i64: 256, 4>}, {transform_indices = @transform_1, window_bounds = array<i64: 256, 128>}, {pipeline_mode = #tpu.pipeline_mode<synchronous>, transform_indices = @transform_2, window_bounds = array<i64: 128, 2112>}, {pipeline_mode = #tpu.pipeline_mode<synchronous>, transform_indices = @transform_3, window_bounds = array<i64: 2, 64>}, {pipeline_mode = #tpu.pipeline_mode<synchronous>, transform_indices = @transform_4, window_bounds = array<i64: 1, 64>}, {transform_indices = @transform_5, window_bounds = array<i64: 256, 64>}]} {
    %c0 = arith.constant 0 : index
    %c0_0 = arith.constant 0 : index
    %0 = vector.load %arg1[%c0, %c0_0] : memref<256x4xf32, #tpu.memory_space<vmem>>, vector<256x1xf32>
    %c0_1 = arith.constant 0 : index
    %c1 = arith.constant 1 : index
    %1 = vector.load %arg1[%c0_1, %c1] : memref<256x4xf32, #tpu.memory_space<vmem>>, vector<256x1xf32>
    %c0_2 = arith.constant 0 : index
    %c2 = arith.constant 2 : index
    %2 = vector.load %arg1[%c0_2, %c2] : memref<256x4xf32, #tpu.memory_space<vmem>>, vector<256x1xf32>
    %3 = arith.fptosi %0 : vector<256x1xf32> to vector<256x1xi32>
    %c0_3 = arith.constant 0 : index
    %c0_4 = arith.constant 0 : index
    %4 = vector.load %arg2[%c0_3, %c0_4] : memref<256x128xbf16, #tpu.memory_space<vmem>>, vector<256x128xbf16>
    %c0_5 = arith.constant 0 : index
    %c0_6 = arith.constant 0 : index
    %5 = vector.load %arg3[%c0_5, %c0_6] : memref<128x2112xbf16, #tpu.memory_space<vmem>>, vector<128x2112xbf16>
    %cst = arith.constant dense<0.000000e+00> : vector<256x2112xf32>
    %6 = tpu.matmul %4, %5, %cst {dimension_numbers = #tpu.dot_dimension_numbers<[1], [0], [0], [1], [0, 0, 1, 1], [], []>} : vector<256x128xbf16>, vector<128x2112xbf16>, vector<256x2112xf32> -> vector<256x2112xf32>
    %7 = vector.extract_strided_slice %6 {offsets = [0, 0], sizes = [256, 2048], strides = [1, 1]} : vector<256x2112xf32> to vector<256x2048xf32>
    %8 = vector.extract_strided_slice %6 {offsets = [0, 2048], sizes = [256, 64], strides = [1, 1]} : vector<256x2112xf32> to vector<256x64xf32>
    %9 = tpu.iota {dimensions = array<i32: 1>} : vector<256x2048xi32>
    %c64_i32 = arith.constant 64 : i32
    %10 = vector.broadcast %c64_i32 : i32 to vector<256x1xi32>
    %11 = arith.muli %3, %10 : vector<256x1xi32>
    %12 = vector.broadcast %11 : vector<256x1xi32> to vector<256x2048xi32>
    %13 = arith.cmpi slt, %9, %12 : vector<256x2048xi32>
    %cst_7 = arith.constant -1.000000e+30 : f32
    %14 = vector.broadcast %cst_7 : f32 to vector<256x2048xf32>
    %15 = arith.select %13, %7, %14 : vector<256x2048xi1>, vector<256x2048xf32>
    %16 = vector.extract_strided_slice %15 {offsets = [0, 0], sizes = [256, 1024], strides = [1, 1]} : vector<256x2048xf32> to vector<256x1024xf32>
    %17 = vector.extract_strided_slice %15 {offsets = [0, 1024], sizes = [256, 1024], strides = [1, 1]} : vector<256x2048xf32> to vector<256x1024xf32>
    %18 = arith.maximumf %16, %17 : vector<256x1024xf32>
    %19 = vector.extract_strided_slice %18 {offsets = [0, 0], sizes = [256, 512], strides = [1, 1]} : vector<256x1024xf32> to vector<256x512xf32>
    %20 = vector.extract_strided_slice %18 {offsets = [0, 512], sizes = [256, 512], strides = [1, 1]} : vector<256x1024xf32> to vector<256x512xf32>
    %21 = arith.maximumf %19, %20 : vector<256x512xf32>
    %22 = vector.extract_strided_slice %21 {offsets = [0, 0], sizes = [256, 256], strides = [1, 1]} : vector<256x512xf32> to vector<256x256xf32>
    %23 = vector.extract_strided_slice %21 {offsets = [0, 256], sizes = [256, 256], strides = [1, 1]} : vector<256x512xf32> to vector<256x256xf32>
    %24 = arith.maximumf %22, %23 : vector<256x256xf32>
    %25 = vector.extract_strided_slice %24 {offsets = [0, 0], sizes = [256, 128], strides = [1, 1]} : vector<256x256xf32> to vector<256x128xf32>
    %26 = vector.extract_strided_slice %24 {offsets = [0, 128], sizes = [256, 128], strides = [1, 1]} : vector<256x256xf32> to vector<256x128xf32>
    %27 = arith.maximumf %25, %26 : vector<256x128xf32>
    %28 = vector.extract_strided_slice %27 {offsets = [0, 0], sizes = [256, 64], strides = [1, 1]} : vector<256x128xf32> to vector<256x64xf32>
    %29 = vector.extract_strided_slice %27 {offsets = [0, 64], sizes = [256, 64], strides = [1, 1]} : vector<256x128xf32> to vector<256x64xf32>
    %30 = arith.maximumf %28, %29 : vector<256x64xf32>
    %cst_8 = arith.constant 1.000000e+00 : f32
    %31 = vector.broadcast %cst_8 : f32 to vector<256x1xf32>
    %32 = arith.maximumf %0, %31 : vector<256x1xf32>
    %cst_9 = arith.constant 1.000000e+00 : f32
    %33 = vector.broadcast %cst_9 : f32 to vector<256x1xf32>
    %34 = arith.divf %33, %32 : vector<256x1xf32>
    %35 = vector.broadcast %34 : vector<256x1xf32> to vector<256x64xf32>
    %36 = arith.mulf %8, %35 : vector<256x64xf32>
    %c0_10 = arith.constant 0 : index
    %c0_11 = arith.constant 0 : index
    %37 = vector.load %arg4[%c0_10, %c0_11] : memref<2x64xf32, #tpu.memory_space<vmem>>, vector<1x64xf32>
    %38 = vector.broadcast %1 : vector<256x1xf32> to vector<256x64xf32>
    %39 = vector.broadcast %37 : vector<1x64xf32> to vector<256x64xf32>
    %40 = arith.mulf %38, %39 : vector<256x64xf32>
    %41 = arith.addf %36, %40 : vector<256x64xf32>
    %c1_12 = arith.constant 1 : index
    %c0_13 = arith.constant 0 : index
    %42 = vector.load %arg4[%c1_12, %c0_13] : memref<2x64xf32, #tpu.memory_space<vmem>>, vector<1x64xf32>
    %43 = vector.broadcast %2 : vector<256x1xf32> to vector<256x64xf32>
    %44 = vector.broadcast %42 : vector<1x64xf32> to vector<256x64xf32>
    %45 = arith.mulf %43, %44 : vector<256x64xf32>
    %46 = arith.addf %41, %45 : vector<256x64xf32>
    %47 = arith.subf %30, %46 : vector<256x64xf32>
    %cst_14 = arith.constant 3.200000e+01 : f32
    %48 = vector.broadcast %cst_14 : f32 to vector<256x1xf32>
    %49 = arith.cmpf olt, %0, %48 : vector<256x1xf32>
    %cst_15 = arith.constant 0.000000e+00 : f32
    %50 = vector.broadcast %cst_15 : f32 to vector<256x64xf32>
    %51 = arith.maximumf %47, %50 : vector<256x64xf32>
    %52 = vector.shape_cast %49 : vector<256x1xi1> to vector<256x1xi1>
    %53 = vector.broadcast %52 : vector<256x1xi1> to vector<256x64xi1>
    %54 = arith.select %53, %51, %47 : vector<256x64xi1>, vector<256x64xf32>
    %c0_16 = arith.constant 0 : index
    %c0_17 = arith.constant 0 : index
    %55 = vector.load %arg5[%c0_16, %c0_17] : memref<1x64xf32, #tpu.memory_space<vmem>>, vector<1x64xf32>
    %56 = vector.broadcast %55 : vector<1x64xf32> to vector<256x64xf32>
    %57 = arith.addf %54, %56 : vector<256x64xf32>
    %cst_18 = arith.constant 0.000000e+00 : f32
    %58 = vector.broadcast %cst_18 : f32 to vector<256x64xf32>
    %59 = arith.maximumf %57, %58 : vector<256x64xf32>
    %c0_19 = arith.constant 0 : index
    %c0_20 = arith.constant 0 : index
    %60 = vector.load %arg6[%c0_19, %c0_20] : memref<256x64xf32, #tpu.memory_space<vmem>>, vector<256x64xf32>
    tpu.vector_store %arg6[%c0_19, %c0_20], %59 {strides = array<i32>} : memref<256x64xf32, #tpu.memory_space<vmem>>, vector<256x64xf32>,
    return
  }
  func.func @transform_0(%arg0: i32) -> (i32, i32) {
    %c0_i32 = arith.constant 0 : i32
    %c0_i32_0 = arith.constant 0 : i32
    return %arg0, %c0_i32 : i32, i32
  }
  func.func @transform_1(%arg0: i32) -> (i32, i32) {
    %c0_i32 = arith.constant 0 : i32
    %c0_i32_0 = arith.constant 0 : i32
    return %arg0, %c0_i32 : i32, i32
  }
  func.func @transform_2(%arg0: i32) -> (i32, i32) {
    %c0_i32 = arith.constant 0 : i32
    %c0_i32_0 = arith.constant 0 : i32
    %c0_i32_1 = arith.constant 0 : i32
    return %c0_i32, %c0_i32_0 : i32, i32
  }
  func.func @transform_3(%arg0: i32) -> (i32, i32) {
    %c0_i32 = arith.constant 0 : i32
    %c0_i32_0 = arith.constant 0 : i32
    %c0_i32_1 = arith.constant 0 : i32
    return %c0_i32, %c0_i32_0 : i32, i32
  }
  func.func @transform_4(%arg0: i32) -> (i32, i32) {
    %c0_i32 = arith.constant 0 : i32
    %c0_i32_0 = arith.constant 0 : i32
    %c0_i32_1 = arith.constant 0 : i32
    return %c0_i32, %c0_i32_0 : i32, i32
  }
  func.func @transform_5(%arg0: i32) -> (i32, i32) {
    %c0_i32 = arith.constant 0 : i32
    %c0_i32_0 = arith.constant 0 : i32
    return %arg0, %c0_i32 : i32, i32
  }
}

</mosaic_0001>

<llo_original>
// kernel: tpu_custom_call.1
$region0: #{tpu_custom_call.1}
  #allocation0 [shape = 'u32[]', space=smem, size = 0x4, offset = 0x4, fixed_abs, tag = 'smem constant byte address 0x4 - core index']
  #allocation1 [shape = 'u32[144,128]{1,0:T(1,128)}', space=vmem, size = 0x12000, scoped, tag = 'internal scratch']
  %s0 = inlined_call_operand.vmem [shape: f32[1024,4], index: 0, kind: input, shape index: {}]
  %s1 = inlined_call_operand.vmem [shape: bf16[1024,128], index: 1, kind: input, shape index: {}]
  %s2 = inlined_call_operand.vmem [shape: bf16[128,2112], index: 2, kind: input, shape index: {}]
  %s3 = inlined_call_operand.vmem [shape: f32[2,64], index: 3, kind: input, shape index: {}]
  %s4 = inlined_call_operand.vmem [shape: f32[1,64], index: 4, kind: input, shape index: {}]
  %s5 = inlined_call_operand.vmem [shape: f32[1024,64], index: 5, kind: output, shape index: {}]
  %s6 = sld [smem:[#allocation0]]
  $region53: #{tpu_custom_call.1} parent=0
    _
  %s8 = ssub.s32 1, %s6
  %s9 = scalar_select 0, %s8, %s6
  loop: start=0, step=1, limit=6
  $region2: #{tpu_custom_call.1} parent=0 // loop_pre_header
    _
  $region3: #{tpu_custom_call.1} parent=0 // loop_header
    %s11 = sphi 0, %s15
    %p12 = scmp.ge.s32.totalorder %s11, 6
    %s21 = sphi 0, %s23
    %s24 = sphi 0, %s21
    %s25 = sphi 0, %s24
    %s41 = sphi 0, %s25
    %s47 = sphi 0, %s49
    %s50 = sphi 0, %s47
    %s51 = sphi 0, %s50
    %s67 = sphi 0, %s51
    %s71 = sphi 0, %s71
    %s73 = sphi 0, %s71
    %s74 = sphi 0, %s73
    %s88 = sphi 0, %s74
    %s92 = sphi 0, %s92
    %s94 = sphi 0, %s92
    %s95 = sphi 0, %s94
    %s109 = sphi 0, %s95
    %s113 = sphi 0, %s113
    %s115 = sphi 0, %s113
    %s116 = sphi 0, %s115
    %s130 = sphi 0, %s116
    %s136 = sphi 0, %s138
    %s139 = sphi 0, %s136
    %s140 = sphi 0, %s139
    %s156 = sphi 0, %s140
  $region4: #{tpu_custom_call.1} parent=0 // loop_header_branch
    %14 = sbr.rel (%p12) target = $region8
  $region5: #{tpu_custom_call.1} parent=0 // loop_body
    %s16 = ssub.s32 %s11, 1
    %s17 = ssub.s32 %s11, 2
    %s18 = sadd.s32 %s11, 1
    %s19 = ssub.s32 %s11, %s18
    %p20 = scmp.eq.s32.totalorder %s19, 0
    %s22 = sadd.s32 %s21, 1
    %s23 = scalar_select %p20, %s21, %s22
    %p26 = pneg %p20
    %p27 = scmp.eq.s32.totalorder %s11, 3
    %p28 = por %p26, %p27
    %p29 = scmp.ne.s32.totalorder %s21, %s24
    %p30 = scmp.eq.s32.totalorder %s11, 0
    %p31 = por %p29, %p30
    %p32 = scmp.ne.s32.totalorder %s21, %s24
    %p33 = scmp.eq.s32.totalorder %s16, 3
    %p34 = por %p32, %p33
    %p35 = scmp.ne.s32.totalorder %s24, %s25
    %p36 = scmp.eq.s32.totalorder %s16, 0
    %p37 = por %p35, %p36
    %p38 = scmp.ne.s32.totalorder %s24, %s25
    %p39 = scmp.eq.s32.totalorder %s17, 3
    %p40 = por %p38, %p39
    %p42 = scmp.ne.s32.totalorder %s25, %s41
    %p43 = scmp.eq.s32.totalorder %s17, 0
    %p44 = por %p42, %p43
    %s45 = ssub.s32 %s11, %s18
    %p46 = scmp.eq.s32.totalorder %s45, 0
    %s48 = sadd.s32 %s47, 1
    %s49 = scalar_select %p46, %s47, %s48
    %p52 = pneg %p46
    %p53 = scmp.eq.s32.totalorder %s11, 3
    %p54 = por %p52, %p53
    %p55 = scmp.ne.s32.totalorder %s47, %s50
    %p56 = scmp.eq.s32.totalorder %s11, 0
    %p57 = por %p55, %p56
    %p58 = scmp.ne.s32.totalorder %s47, %s50
    %p59 = scmp.eq.s32.totalorder %s16, 3
    %p60 = por %p58, %p59
    %p61 = scmp.ne.s32.totalorder %s50, %s51
    %p62 = scmp.eq.s32.totalorder %s16, 0
    %p63 = por %p61, %p62
    %p64 = scmp.ne.s32.totalorder %s50, %s51
    %p65 = scmp.eq.s32.totalorder %s17, 3
    %p66 = por %p64, %p65
    %p68 = scmp.ne.s32.totalorder %s51, %s67
    %p69 = scmp.eq.s32.totalorder %s17, 0
    %p70 = por %p68, %p69
    %s72 = sadd.s32 %s71, 1
    %p75 = scmp.eq.s32.totalorder %s11, 3
    %p76 = scmp.ne.s32.totalorder %s71, %s73
    %p77 = scmp.eq.s32.totalorder %s11, 0
    %p78 = por %p76, %p77
    %p79 = scmp.ne.s32.totalorder %s71, %s73
    %p80 = scmp.eq.s32.totalorder %s16, 3
    %p81 = por %p79, %p80
    %p82 = scmp.ne.s32.totalorder %s73, %s74
    %p83 = scmp.eq.s32.totalorder %s16, 0
    %p84 = por %p82, %p83
    %p85 = scmp.ne.s32.totalorder %s73, %s74
    %p86 = scmp.eq.s32.totalorder %s17, 3
    %p87 = por %p85, %p86
    %p89 = scmp.ne.s32.totalorder %s74, %s88
    %p90 = scmp.eq.s32.totalorder %s17, 0
    %p91 = por %p89, %p90
    %s93 = sadd.s32 %s92, 1
    %p96 = scmp.eq.s32.totalorder %s11, 3
    %p97 = scmp.ne.s32.totalorder %s92, %s94
    %p98 = scmp.eq.s32.totalorder %s11, 0
    %p99 = por %p97, %p98
    %p100 = scmp.ne.s32.totalorder %s92, %s94
    %p101 = scmp.eq.s32.totalorder %s16, 3
    %p102 = por %p100, %p101
    %p103 = scmp.ne.s32.totalorder %s94, %s95
    %p104 = scmp.eq.s32.totalorder %s16, 0
    %p105 = por %p103, %p104
    %p106 = scmp.ne.s32.totalorder %s94, %s95
    %p107 = scmp.eq.s32.totalorder %s17, 3
    %p108 = por %p106, %p107
    %p110 = scmp.ne.s32.totalorder %s95, %s109
    %p111 = scmp.eq.s32.totalorder %s17, 0
    %p112 = por %p110, %p111
    %s114 = sadd.s32 %s113, 1
    %p117 = scmp.eq.s32.totalorder %s11, 3
    %p118 = scmp.ne.s32.totalorder %s113, %s115
    %p119 = scmp.eq.s32.totalorder %s11, 0
    %p120 = por %p118, %p119
    %p121 = scmp.ne.s32.totalorder %s113, %s115
    %p122 = scmp.eq.s32.totalorder %s16, 3
    %p123 = por %p121, %p122
    %p124 = scmp.ne.s32.totalorder %s115, %s116
    %p125 = scmp.eq.s32.totalorder %s16, 0
    %p126 = por %p124, %p125
    %p127 = scmp.ne.s32.totalorder %s115, %s116
    %p128 = scmp.eq.s32.totalorder %s17, 3
    %p129 = por %p127, %p128
    %p131 = scmp.ne.s32.totalorder %s116, %s130
    %p132 = scmp.eq.s32.totalorder %s17, 0
    %p133 = por %p131, %p132
    %s134 = ssub.s32 %s11, %s18
    %p135 = scmp.eq.s32.totalorder %s134, 0
    %s137 = sadd.s32 %s136, 1
    %s138 = scalar_select %p135, %s136, %s137
    %p141 = pneg %p135
    %p142 = scmp.eq.s32.totalorder %s11, 3
    %p143 = por %p141, %p142
    %p144 = scmp.ne.s32.totalorder %s136, %s139
    %p145 = scmp.eq.s32.totalorder %s11, 0
    %p146 = por %p144, %p145
    %p147 = scmp.ne.s32.totalorder %s136, %s139
    %p148 = scmp.eq.s32.totalorder %s16, 3
    %p149 = por %p147, %p148
    %p150 = scmp.ne.s32.totalorder %s139, %s140
    %p151 = scmp.eq.s32.totalorder %s16, 0
    %p152 = por %p150, %p151
    %p153 = scmp.ne.s32.totalorder %s139, %s140
    %p154 = scmp.eq.s32.totalorder %s17, 3
    %p155 = por %p153, %p154
    %p157 = scmp.ne.s32.totalorder %s140, %s156
    %p158 = scmp.eq.s32.totalorder %s17, 0
    %p159 = por %p157, %p158
    %p160 = scmp.le.s32.totalorder 1, %s11
    %p161 = scmp.lt.s32.totalorder %s11, 5
    %p162 = pnand %p160, %p161
    %p163 = pneg %p162
    // Predicated region
    $region9: #{tpu_custom_call.1} parent=5 // pred_check
      _
    $region10: #{tpu_custom_call.1} parent=5 // pred_check_branch
      %165 = sbr.rel (%p162) target = $region12
    $region11: #{tpu_custom_call.1} parent=5 // pred_region
      %s166 = ssub.s32 %s11, 1
      // Predicated region
      $region13: #{tpu_custom_call.1} parent=11 // pred_check
        %p167 = pneg %p84
      $region14: #{tpu_custom_call.1} parent=11 // pred_check_branch
        %169 = sbr.rel (%p167) target = $region16
      $region15: #{tpu_custom_call.1} parent=11 // pred_region
        _
      $region16: #{tpu_custom_call.1} parent=11 // pred_fallthru
        _
      // Predicated region
      $region17: #{tpu_custom_call.1} parent=11 // pred_check
        %p170 = pneg %p105
      $region18: #{tpu_custom_call.1} parent=11 // pred_check_branch
        %172 = sbr.rel (%p170) target = $region20
      $region19: #{tpu_custom_call.1} parent=11 // pred_region
        _
      $region20: #{tpu_custom_call.1} parent=11 // pred_fallthru
        _
      // Predicated region
      $region21: #{tpu_custom_call.1} parent=11 // pred_check
        %p173 = pneg %p126
      $region22: #{tpu_custom_call.1} parent=11 // pred_check_branch
        %175 = sbr.rel (%p173) target = $region24
      $region23: #{tpu_custom_call.1} parent=11 // pred_region
        _
      $region24: #{tpu_custom_call.1} parent=11 // pred_fallthru
        _
    $region12: #{tpu_custom_call.1} parent=5 // pred_fallthru
      _
    %p176 = scmp.lt.s32.totalorder %s11, 4
    // Predicated region
    $region25: #{tpu_custom_call.1} parent=5 // pred_check
      %p177 = pneg %p176
    $region26: #{tpu_custom_call.1} parent=5 // pred_check_branch
      %179 = sbr.rel (%p177) target = $region28
    $region27: #{tpu_custom_call.1} parent=5 // pred_region
      // Predicated region
      $region29: #{tpu_custom_call.1} parent=27 // pred_check
        %p180 = pneg %p31
      $region30: #{tpu_custom_call.1} parent=27 // pred_check_branch
        %182 = sbr.rel (%p180) target = $region32
      $region31: #{tpu_custom_call.1} parent=27 // pred_region
        %s183 = smul.u32 32, %s11
        %p184 = scmp.lt.s32.totalorder %s183, 127
        %s185 = scalar_select %p184, %s183, 127
        %s186 = smul.addr %s185, 8
        %s187 = scalar_lea.vmem %s0, %s186
        %s188 = smul.u32 32, %s11
      $region32: #{tpu_custom_call.1} parent=27 // pred_fallthru
        _
      // Predicated region
      $region33: #{tpu_custom_call.1} parent=27 // pred_check
        %p189 = pneg %p57
      $region34: #{tpu_custom_call.1} parent=27 // pred_check_branch
        %191 = sbr.rel (%p189) target = $region36
      $region35: #{tpu_custom_call.1} parent=27 // pred_region
        %s192 = smul.u32 32, %s11
        %p193 = scmp.lt.s32.totalorder %s192, 127
        %s194 = scalar_select %p193, %s192, 127
        %s195 = smul.addr %s194, 4
        %s196 = scalar_lea.vmem %s1, %s195
        %s197 = smul.u32 32, %s11
      $region36: #{tpu_custom_call.1} parent=27 // pred_fallthru
        _
    $region28: #{tpu_custom_call.1} parent=5 // pred_fallthru
      _
    %p198 = scmp.le.s32.totalorder 1, %s11
    %p199 = scmp.lt.s32.totalorder %s11, 5
    %p200 = pnand %p198, %p199
    %p201 = pneg %p200
    // Predicated region
    $region37: #{tpu_custom_call.1} parent=5 // pred_check
      _
    $region38: #{tpu_custom_call.1} parent=5 // pred_check_branch
      %203 = sbr.rel (%p200) target = $region40
    $region39: #{tpu_custom_call.1} parent=5 // pred_region
      %s204 = ssub.s32 %s11, 1
      %s205 = smul.u32 32, %s16
      %p206 = scmp.lt.s32.totalorder %s205, 127
      %s207 = scalar_select %p206, %s205, 127
      %s208 = smul.addr %s207, 8
      %s209 = scalar_lea.vmem %s0, %s208
      %p210 = pneg %p37
      %p211 = pneg %p34
      %s212 = smul.u32 32, %s16
      %p213 = scmp.lt.s32.totalorder %s212, 127
      %s214 = scalar_select %p213, %s212, 127
      %s215 = smul.addr %s214, 4
      %s216 = scalar_lea.vmem %s1, %s215
      %p217 = pneg %p63
      %p218 = pneg %p60
      %p219 = pneg %p84
      %p220 = pneg %p81
      %p221 = pneg %p105
      %p222 = pneg %p102
      %p223 = pneg %p126
      %p224 = pneg %p123
      %p225 = pneg %p152
      %p226 = pneg %p149
      %s227 = smul.u32 32, %s16
      %p228 = scmp.lt.s32.totalorder %s227, 127
      %s229 = scalar_select %p228, %s227, 127
      %s230 = smul.addr %s229, 8
      %s231 = scalar_lea.vmem %s5, %s230
      %s232 = smul.u32 32, %s16
      %p233 = scmp.lt.s32.totalorder %s232, 127
      %s234 = scalar_select %p233, %s232, 127
      %s235 = smul.addr %s234, 8
      %s236 = scalar_lea.vmem %s0, %s235
      %s237 = smul.u32 32, %s16
      %s238 = smul.u32 32, %s16
      %p239 = scmp.lt.s32.totalorder %s238, 127
      %s240 = scalar_select %p239, %s238, 127
      %s241 = smul.addr %s240, 4
      %s242 = scalar_lea.vmem %s1, %s241
      %s243 = smul.u32 32, %s16
      %s244 = smul.u32 32, %s16
      %p245 = scmp.lt.s32.totalorder %s244, 127
      %s246 = scalar_select %p245, %s244, 127
      %s247 = smul.addr %s246, 8
      %s248 = scalar_lea.vmem %s5, %s247
      %s249 = smul.u32 32, %s16
      %v251 = vld [vmem:[%s236] sm:$0xff]
      %v252 = vld [vmem:[%s236 + $0x8] sm:$0xff]
      %v253 = vld [vmem:[%s236 + $0x10] sm:$0xff]
      %v254 = vld [vmem:[%s236 + $0x18] sm:$0xff]
      %v255 = vld [vmem:[%s236 + $0x20] sm:$0xff]
      %v256 = vld [vmem:[%s236 + $0x28] sm:$0xff]
      %v257 = vld [vmem:[%s236 + $0x30] sm:$0xff]
      %v258 = vld [vmem:[%s236 + $0x38] sm:$0xff]
      %v259 = vld [vmem:[%s236 + $0x40] sm:$0xff]
      %v260 = vld [vmem:[%s236 + $0x48] sm:$0xff]
      %v261 = vld [vmem:[%s236 + $0x50] sm:$0xff]
      %v262 = vld [vmem:[%s236 + $0x58] sm:$0xff]
      %v263 = vld [vmem:[%s236 + $0x60] sm:$0xff]
      %v264 = vld [vmem:[%s236 + $0x68] sm:$0xff]
      %v265 = vld [vmem:[%s236 + $0x70] sm:$0xff]
      %v266 = vld [vmem:[%s236 + $0x78] sm:$0xff]
      %v267 = vld [vmem:[%s236 + $0x80] sm:$0xff]
      %v268 = vld [vmem:[%s236 + $0x88] sm:$0xff]
      %v269 = vld [vmem:[%s236 + $0x90] sm:$0xff]
      %v270 = vld [vmem:[%s236 + $0x98] sm:$0xff]
      %v271 = vld [vmem:[%s236 + $0xa0] sm:$0xff]
      %v272 = vld [vmem:[%s236 + $0xa8] sm:$0xff]
      %v273 = vld [vmem:[%s236 + $0xb0] sm:$0xff]
      %v274 = vld [vmem:[%s236 + $0xb8] sm:$0xff]
      %v275 = vld [vmem:[%s236 + $0xc0] sm:$0xff]
      %v276 = vld [vmem:[%s236 + $0xc8] sm:$0xff]
      %v277 = vld [vmem:[%s236 + $0xd0] sm:$0xff]
      %v278 = vld [vmem:[%s236 + $0xd8] sm:$0xff]
      %v279 = vld [vmem:[%s236 + $0xe0] sm:$0xff]
      %v280 = vld [vmem:[%s236 + $0xe8] sm:$0xff]
      %v281 = vld [vmem:[%s236 + $0xf0] sm:$0xff]
      %v282 = vld [vmem:[%s236 + $0xf8] sm:$0xff]
      %v283 = vcvt.f32.s32.to.zero.pseudo %v251
      %v284 = vcvt.f32.s32.to.zero.pseudo %v252
      %v285 = vcvt.f32.s32.to.zero.pseudo %v253
      %v286 = vcvt.f32.s32.to.zero.pseudo %v254
      %v287 = vcvt.f32.s32.to.zero.pseudo %v255
      %v288 = vcvt.f32.s32.to.zero.pseudo %v256
      %v289 = vcvt.f32.s32.to.zero.pseudo %v257
      %v290 = vcvt.f32.s32.to.zero.pseudo %v258
      %v291 = vcvt.f32.s32.to.zero.pseudo %v259
      %v292 = vcvt.f32.s32.to.zero.pseudo %v260
      %v293 = vcvt.f32.s32.to.zero.pseudo %v261
      %v294 = vcvt.f32.s32.to.zero.pseudo %v262
      %v295 = vcvt.f32.s32.to.zero.pseudo %v263
      %v296 = vcvt.f32.s32.to.zero.pseudo %v264
      %v297 = vcvt.f32.s32.to.zero.pseudo %v265
      %v298 = vcvt.f32.s32.to.zero.pseudo %v266
      %v299 = vcvt.f32.s32.to.zero.pseudo %v267
      %v300 = vcvt.f32.s32.to.zero.pseudo %v268
      %v301 = vcvt.f32.s32.to.zero.pseudo %v269
      %v302 = vcvt.f32.s32.to.zero.pseudo %v270
      %v303 = vcvt.f32.s32.to.zero.pseudo %v271
      %v304 = vcvt.f32.s32.to.zero.pseudo %v272
      %v305 = vcvt.f32.s32.to.zero.pseudo %v273
      %v306 = vcvt.f32.s32.to.zero.pseudo %v274
      %v307 = vcvt.f32.s32.to.zero.pseudo %v275
      %v308 = vcvt.f32.s32.to.zero.pseudo %v276
      %v309 = vcvt.f32.s32.to.zero.pseudo %v277
      %v310 = vcvt.f32.s32.to.zero.pseudo %v278
      %v311 = vcvt.f32.s32.to.zero.pseudo %v279
      %v312 = vcvt.f32.s32.to.zero.pseudo %v280
      %v313 = vcvt.f32.s32.to.zero.pseudo %v281
      %v314 = vcvt.f32.s32.to.zero.pseudo %v282
      %v315 = vld [vmem:[%s242] sm:$0xf]
      %v316 = vld [vmem:[%s242 + $0x4] sm:$0xf]
      %v317 = vld [vmem:[%s242 + $0x8] sm:$0xf]
      %v318 = vld [vmem:[%s242 + $0xc] sm:$0xf]
      %v319 = vld [vmem:[%s242 + $0x10] sm:$0xf]
      %v320 = vld [vmem:[%s242 + $0x14] sm:$0xf]
      %v321 = vld [vmem:[%s242 + $0x18] sm:$0xf]
      %v322 = vld [vmem:[%s242 + $0x1c] sm:$0xf]
      %v323 = vld [vmem:[%s242 + $0x20] sm:$0xf]
      %v324 = vld [vmem:[%s242 + $0x24] sm:$0xf]
      %v325 = vld [vmem:[%s242 + $0x28] sm:$0xf]
      %v326 = vld [vmem:[%s242 + $0x2c] sm:$0xf]
      %v327 = vld [vmem:[%s242 + $0x30] sm:$0xf]
      %v328 = vld [vmem:[%s242 + $0x34] sm:$0xf]
      %v329 = vld [vmem:[%s242 + $0x38] sm:$0xf]
      %v330 = vld [vmem:[%s242 + $0x3c] sm:$0xf]
      %v331 = vld [vmem:[%s242 + $0x40] sm:$0xf]
      %v332 = vld [vmem:[%s242 + $0x44] sm:$0xf]
      %v333 = vld [vmem:[%s242 + $0x48] sm:$0xf]
      %v334 = vld [vmem:[%s242 + $0x4c] sm:$0xf]
      %v335 = vld [vmem:[%s242 + $0x50] sm:$0xf]
      %v336 = vld [vmem:[%s242 + $0x54] sm:$0xf]
      %v337 = vld [vmem:[%s242 + $0x58] sm:$0xf]
      %v338 = vld [vmem:[%s242 + $0x5c] sm:$0xf]
      %v339 = vld [vmem:[%s242 + $0x60] sm:$0xf]
      %v340 = vld [vmem:[%s242 + $0x64] sm:$0xf]
      %v341 = vld [vmem:[%s242 + $0x68] sm:$0xf]
      %v342 = vld [vmem:[%s242 + $0x6c] sm:$0xf]
      %v343 = vld [vmem:[%s242 + $0x70] sm:$0xf]
      %v344 = vld [vmem:[%s242 + $0x74] sm:$0xf]
      %v345 = vld [vmem:[%s242 + $0x78] sm:$0xf]
      %v346 = vld [vmem:[%s242 + $0x7c] sm:$0xf]
      %v347 = vld [vmem:[%s2] sm:$0xff]
      %v348 = vld [vmem:[%s2 + $0x8] sm:$0xff]
      %v349 = vld [vmem:[%s2 + $0x10] sm:$0xff]
      %v350 = vld [vmem:[%s2 + $0x18] sm:$0xff]
      %v351 = vld [vmem:[%s2 + $0x20] sm:$0xff]
      %v352 = vld [vmem:[%s2 + $0x28] sm:$0xff]
      %v353 = vld [vmem:[%s2 + $0x30] sm:$0xff]
      %v354 = vld [vmem:[%s2 + $0x38] sm:$0xff]
      %v355 = vld [vmem:[%s2 + $0x40] sm:$0xf]
      %v356 = vld [vmem:[%s2 + $0x44] sm:$0xff]
      %v357 = vld [vmem:[%s2 + $0x4c] sm:$0xff]
      %v358 = vld [vmem:[%s2 + $0x54] sm:$0xff]
      %v359 = vld [vmem:[%s2 + $0x5c] sm:$0xff]
      %v360 = vld [vmem:[%s2 + $0x64] sm:$0xff]
      %v361 = vld [vmem:[%s2 + $0x6c] sm:$0xff]
      %v362 = vld [vmem:[%s2 + $0x74] sm:$0xff]
      %v363 = vld [vmem:[%s2 + $0x7c] sm:$0xff]
      %v364 = vld [vmem:[%s2 + $0x84] sm:$0xf]
      %v365 = vld [vmem:[%s2 + $0x88] sm:$0xff]
      %v366 = vld [vmem:[%s2 + $0x90] sm:$0xff]
      %v367 = vld [vmem:[%s2 + $0x98] sm:$0xff]
      %v368 = vld [vmem:[%s2 + $0xa0] sm:$0xff]
      %v369 = vld [vmem:[%s2 + $0xa8] sm:$0xff]
      %v370 = vld [vmem:[%s2 + $0xb0] sm:$0xff]
      %v371 = vld [vmem:[%s2 + $0xb8] sm:$0xff]
      %v372 = vld [vmem:[%s2 + $0xc0] sm:$0xff]
      %v373 = vld [vmem:[%s2 + $0xc8] sm:$0xf]
      %v374 = vld [vmem:[%s2 + $0xcc] sm:$0xff]
      %v375 = vld [vmem:[%s2 + $0xd4] sm:$0xff]
      %v376 = vld [vmem:[%s2 + $0xdc] sm:$0xff]
      %v377 = vld [vmem:[%s2 + $0xe4] sm:$0xff]
      %v378 = vld [vmem:[%s2 + $0xec] sm:$0xff]
      %v379 = vld [vmem:[%s2 + $0xf4] sm:$0xff]
      %v380 = vld [vmem:[%s2 + $0xfc] sm:$0xff]
      %v381 = vld [vmem:[%s2 + $0x104] sm:$0xff]
      %v382 = vld [vmem:[%s2 + $0x10c] sm:$0xf]
      %v383 = vld [vmem:[%s2 + $0x110] sm:$0xff]
      %v384 = vld [vmem:[%s2 + $0x118] sm:$0xff]
      %v385 = vld [vmem:[%s2 + $0x120] sm:$0xff]
      %v386 = vld [vmem:[%s2 + $0x128] sm:$0xff]
      %v387 = vld [vmem:[%s2 + $0x130] sm:$0xff]
      %v388 = vld [vmem:[%s2 + $0x138] sm:$0xff]
      %v389 = vld [vmem:[%s2 + $0x140] sm:$0xff]
      %v390 = vld [vmem:[%s2 + $0x148] sm:$0xff]
      %v391 = vld [vmem:[%s2 + $0x150] sm:$0xf]
      %v392 = vld [vmem:[%s2 + $0x154] sm:$0xff]
      %v393 = vld [vmem:[%s2 + $0x15c] sm:$0xff]
      %v394 = vld [vmem:[%s2 + $0x164] sm:$0xff]
      %v395 = vld [vmem:[%s2 + $0x16c] sm:$0xff]
      %v396 = vld [vmem:[%s2 + $0x174] sm:$0xff]
      %v397 = vld [vmem:[%s2 + $0x17c] sm:$0xff]
      %v398 = vld [vmem:[%s2 + $0x184] sm:$0xff]
      %v399 = vld [vmem:[%s2 + $0x18c] sm:$0xff]
      %v400 = vld [vmem:[%s2 + $0x194] sm:$0xf]
      %v401 = vld [vmem:[%s2 + $0x198] sm:$0xff]
      %v402 = vld [vmem:[%s2 + $0x1a0] sm:$0xff]
      %v403 = vld [vmem:[%s2 + $0x1a8] sm:$0xff]
      %v404 = vld [vmem:[%s2 + $0x1b0] sm:$0xff]
      %v405 = vld [vmem:[%s2 + $0x1b8] sm:$0xff]
      %v406 = vld [vmem:[%s2 + $0x1c0] sm:$0xff]
      %v407 = vld [vmem:[%s2 + $0x1c8] sm:$0xff]
      %v408 = vld [vmem:[%s2 + $0x1d0] sm:$0xff]
      %v409 = vld [vmem:[%s2 + $0x1d8] sm:$0xf]
      %v410 = vld [vmem:[%s2 + $0x1dc] sm:$0xff]
      %v411 = vld [vmem:[%s2 + $0x1e4] sm:$0xff]
      %v412 = vld [vmem:[%s2 + $0x1ec] sm:$0xff]
      %v413 = vld [vmem:[%s2 + $0x1f4] sm:$0xff]
      %v414 = vld [vmem:[%s2 + $0x1fc] sm:$0xff]
      %v415 = vld [vmem:[%s2 + $0x204] sm:$0xff]
      %v416 = vld [vmem:[%s2 + $0x20c] sm:$0xff]
      %v417 = vld [vmem:[%s2 + $0x214] sm:$0xff]
      %v418 = vld [vmem:[%s2 + $0x21c] sm:$0xf]
      %v419 = vld [vmem:[%s2 + $0x220] sm:$0xff]
      %v420 = vld [vmem:[%s2 + $0x228] sm:$0xff]
      %v421 = vld [vmem:[%s2 + $0x230] sm:$0xff]
      %v422 = vld [vmem:[%s2 + $0x238] sm:$0xff]
      %v423 = vld [vmem:[%s2 + $0x240] sm:$0xff]
      %v424 = vld [vmem:[%s2 + $0x248] sm:$0xff]
      %v425 = vld [vmem:[%s2 + $0x250] sm:$0xff]
      %v426 = vld [vmem:[%s2 + $0x258] sm:$0xff]
      %v427 = vld [vmem:[%s2 + $0x260] sm:$0xf]
      %v428 = vld [vmem:[%s2 + $0x264] sm:$0xff]
      %v429 = vld [vmem:[%s2 + $0x26c] sm:$0xff]
      %v430 = vld [vmem:[%s2 + $0x274] sm:$0xff]
      %v431 = vld [vmem:[%s2 + $0x27c] sm:$0xff]
      %v432 = vld [vmem:[%s2 + $0x284] sm:$0xff]
      %v433 = vld [vmem:[%s2 + $0x28c] sm:$0xff]
      %v434 = vld [vmem:[%s2 + $0x294] sm:$0xff]
      %v435 = vld [vmem:[%s2 + $0x29c] sm:$0xff]
      %v436 = vld [vmem:[%s2 + $0x2a4] sm:$0xf]
      %v437 = vld [vmem:[%s2 + $0x2a8] sm:$0xff]
      %v438 = vld [vmem:[%s2 + $0x2b0] sm:$0xff]
      %v439 = vld [vmem:[%s2 + $0x2b8] sm:$0xff]
      %v440 = vld [vmem:[%s2 + $0x2c0] sm:$0xff]
      %v441 = vld [vmem:[%s2 + $0x2c8] sm:$0xff]
      %v442 = vld [vmem:[%s2 + $0x2d0] sm:$0xff]
      %v443 = vld [vmem:[%s2 + $0x2d8] sm:$0xff]
      %v444 = vld [vmem:[%s2 + $0x2e0] sm:$0xff]
      %v445 = vld [vmem:[%s2 + $0x2e8] sm:$0xf]
      %v446 = vld [vmem:[%s2 + $0x2ec] sm:$0xff]
      %v447 = vld [vmem:[%s2 + $0x2f4] sm:$0xff]
      %v448 = vld [vmem:[%s2 + $0x2fc] sm:$0xff]
      %v449 = vld [vmem:[%s2 + $0x304] sm:$0xff]
      %v450 = vld [vmem:[%s2 + $0x30c] sm:$0xff]
      %v451 = vld [vmem:[%s2 + $0x314] sm:$0xff]
      %v452 = vld [vmem:[%s2 + $0x31c] sm:$0xff]
      %v453 = vld [vmem:[%s2 + $0x324] sm:$0xff]
      %v454 = vld [vmem:[%s2 + $0x32c] sm:$0xf]
      %v455 = vld [vmem:[%s2 + $0x330] sm:$0xff]
      %v456 = vld [vmem:[%s2 + $0x338] sm:$0xff]
      %v457 = vld [vmem:[%s2 + $0x340] sm:$0xff]
      %v458 = vld [vmem:[%s2 + $0x348] sm:$0xff]
      %v459 = vld [vmem:[%s2 + $0x350] sm:$0xff]
      %v460 = vld [vmem:[%s2 + $0x358] sm:$0xff]
      %v461 = vld [vmem:[%s2 + $0x360] sm:$0xff]
      %v462 = vld [vmem:[%s2 + $0x368] sm:$0xff]
      %v463 = vld [vmem:[%s2 + $0x370] sm:$0xf]
      %v464 = vld [vmem:[%s2 + $0x374] sm:$0xff]
      %v465 = vld [vmem:[%s2 + $0x37c] sm:$0xff]
      %v466 = vld [vmem:[%s2 + $0x384] sm:$0xff]
      %v467 = vld [vmem:[%s2 + $0x38c] sm:$0xff]
      %v468 = vld [vmem:[%s2 + $0x394] sm:$0xff]
      %v469 = vld [vmem:[%s2 + $0x39c] sm:$0xff]
      %v470 = vld [vmem:[%s2 + $0x3a4] sm:$0xff]
      %v471 = vld [vmem:[%s2 + $0x3ac] sm:$0xff]
      %v472 = vld [vmem:[%s2 + $0x3b4] sm:$0xf]
      %v473 = vld [vmem:[%s2 + $0x3b8] sm:$0xff]
      %v474 = vld [vmem:[%s2 + $0x3c0] sm:$0xff]
      %v475 = vld [vmem:[%s2 + $0x3c8] sm:$0xff]
      %v476 = vld [vmem:[%s2 + $0x3d0] sm:$0xff]
      %v477 = vld [vmem:[%s2 + $0x3d8] sm:$0xff]
      %v478 = vld [vmem:[%s2 + $0x3e0] sm:$0xff]
      %v479 = vld [vmem:[%s2 + $0x3e8] sm:$0xff]
      %v480 = vld [vmem:[%s2 + $0x3f0] sm:$0xff]
      %v481 = vld [vmem:[%s2 + $0x3f8] sm:$0xf]
      %v482 = vld [vmem:[%s2 + $0x3fc] sm:$0xff]
      %v483 = vld [vmem:[%s2 + $0x404] sm:$0xff]
      %v484 = vld [vmem:[%s2 + $0x40c] sm:$0xff]
      %v485 = vld [vmem:[%s2 + $0x414] sm:$0xff]
      %v486 = vld [vmem:[%s2 + $0x41c] sm:$0xff]
      %v487 = vld [vmem:[%s2 + $0x424] sm:$0xff]
      %v488 = vld [vmem:[%s2 + $0x42c] sm:$0xff]
      %v489 = vld [vmem:[%s2 + $0x434] sm:$0xff]
      %v490 = vld [vmem:[%s2 + $0x43c] sm:$0xf]
      %v523 = vunpack.c.l.b16 %v315
      %v524 = vunpack.c.l.b16 %v316
      %v525 = vunpack.c.l.b16 %v317
      %v526 = vunpack.c.l.b16 %v318
      %v527 = vunpack.c.l.b16 %v319
      %v528 = vunpack.c.l.b16 %v320
      %v529 = vunpack.c.l.b16 %v321
      %v530 = vunpack.c.l.b16 %v322
      %v531 = vunpack.c.l.b16 %v323
      %v532 = vunpack.c.l.b16 %v324
      %v533 = vunpack.c.l.b16 %v325
      %v534 = vunpack.c.l.b16 %v326
      %v535 = vunpack.c.l.b16 %v327
      %v536 = vunpack.c.l.b16 %v328
      %v537 = vunpack.c.l.b16 %v329
      %v538 = vunpack.c.l.b16 %v330
      %v539 = vunpack.c.l.b16 %v331
      %v540 = vunpack.c.l.b16 %v332
      %v541 = vunpack.c.l.b16 %v333
      %v542 = vunpack.c.l.b16 %v334
      %v543 = vunpack.c.l.b16 %v335
      %v544 = vunpack.c.l.b16 %v336
      %v545 = vunpack.c.l.b16 %v337
      %v546 = vunpack.c.l.b16 %v338
      %v547 = vunpack.c.l.b16 %v339
      %v548 = vunpack.c.l.b16 %v340
      %v549 = vunpack.c.l.b16 %v341
      %v550 = vunpack.c.l.b16 %v342
      %v551 = vunpack.c.l.b16 %v343
      %v552 = vunpack.c.l.b16 %v344
      %v553 = vunpack.c.l.b16 %v345
      %v554 = vunpack.c.l.b16 %v346
      %v555 = vpack.c.b16 %v524, %v523
      %v556 = vpack.c.b16 %v526, %v525
      %v557 = vpack.c.b16 %v528, %v527
      %v558 = vpack.c.b16 %v530, %v529
      %v559 = vpack.c.b16 %v532, %v531
      %v560 = vpack.c.b16 %v534, %v533
      %v561 = vpack.c.b16 %v536, %v535
      %v562 = vpack.c.b16 %v538, %v537
      %v563 = vpack.c.b16 %v540, %v539
      %v564 = vpack.c.b16 %v542, %v541
      %v565 = vpack.c.b16 %v544, %v543
      %v566 = vpack.c.b16 %v546, %v545
      %v567 = vpack.c.b16 %v548, %v547
      %v568 = vpack.c.b16 %v550, %v549
      %v569 = vpack.c.b16 %v552, %v551
      %v570 = vpack.c.b16 %v554, %v553
      %v731 = vunpack.c.l.b16 %v347
      %v732 = vunpack.c.h.b16 %v347
      %v733 = vunpack.c.l.b16 %v348
      %v734 = vunpack.c.h.b16 %v348
      %v735 = vunpack.c.l.b16 %v349
      %v736 = vunpack.c.h.b16 %v349
      %v737 = vunpack.c.l.b16 %v350
      %v738 = vunpack.c.h.b16 %v350
      %v739 = vunpack.c.l.b16 %v351
      %v740 = vunpack.c.h.b16 %v351
      %v741 = vunpack.c.l.b16 %v352
      %v742 = vunpack.c.h.b16 %v352
      %v743 = vunpack.c.l.b16 %v353
      %v744 = vunpack.c.h.b16 %v353
      %v745 = vunpack.c.l.b16 %v354
      %v746 = vunpack.c.h.b16 %v354
      %v747 = vunpack.c.l.b16 %v355
      %v748 = vunpack.c.l.b16 %v356
      %v749 = vunpack.c.h.b16 %v356
      %v750 = vunpack.c.l.b16 %v357
      %v751 = vunpack.c.h.b16 %v357
      %v752 = vunpack.c.l.b16 %v358
      %v753 = vunpack.c.h.b16 %v358
      %v754 = vunpack.c.l.b16 %v359
      %v755 = vunpack.c.h.b16 %v359
      %v756 = vunpack.c.l.b16 %v360
      %v757 = vunpack.c.h.b16 %v360
      %v758 = vunpack.c.l.b16 %v361
      %v759 = vunpack.c.h.b16 %v361
      %v760 = vunpack.c.l.b16 %v362
      %v761 = vunpack.c.h.b16 %v362
      %v762 = vunpack.c.l.b16 %v363
      %v763 = vunpack.c.h.b16 %v363
      %v764 = vunpack.c.l.b16 %v364
      %v765 = vunpack.c.l.b16 %v365
      %v766 = vunpack.c.h.b16 %v365
      %v767 = vunpack.c.l.b16 %v366
      %v768 = vunpack.c.h.b16 %v366
      %v769 = vunpack.c.l.b16 %v367
      %v770 = vunpack.c.h.b16 %v367
      %v771 = vunpack.c.l.b16 %v368
      %v772 = vunpack.c.h.b16 %v368
      %v773 = vunpack.c.l.b16 %v369
      %v774 = vunpack.c.h.b16 %v369
      %v775 = vunpack.c.l.b16 %v370
      %v776 = vunpack.c.h.b16 %v370
      %v777 = vunpack.c.l.b16 %v371
      %v778 = vunpack.c.h.b16 %v371
      %v779 = vunpack.c.l.b16 %v372
      %v780 = vunpack.c.h.b16 %v372
      %v781 = vunpack.c.l.b16 %v373
      %v782 = vunpack.c.l.b16 %v374
      %v783 = vunpack.c.h.b16 %v374
      %v784 = vunpack.c.l.b16 %v375
      %v785 = vunpack.c.h.b16 %v375
      %v786 = vunpack.c.l.b16 %v376
      %v787 = vunpack.c.h.b16 %v376
      %v788 = vunpack.c.l.b16 %v377
      %v789 = vunpack.c.h.b16 %v377
      %v790 = vunpack.c.l.b16 %v378
      %v791 = vunpack.c.h.b16 %v378
      %v792 = vunpack.c.l.b16 %v379
      %v793 = vunpack.c.h.b16 %v379
      %v794 = vunpack.c.l.b16 %v380
      %v795 = vunpack.c.h.b16 %v380
      %v796 = vunpack.c.l.b16 %v381
      %v797 = vunpack.c.h.b16 %v381
      %v798 = vunpack.c.l.b16 %v382
      %v799 = vunpack.c.l.b16 %v383
      %v800 = vunpack.c.h.b16 %v383
      %v801 = vunpack.c.l.b16 %v384
      %v802 = vunpack.c.h.b16 %v384
      %v803 = vunpack.c.l.b16 %v385
      %v804 = vunpack.c.h.b16 %v385
      %v805 = vunpack.c.l.b16 %v386
      %v806 = vunpack.c.h.b16 %v386
      %v807 = vunpack.c.l.b16 %v387
      %v808 = vunpack.c.h.b16 %v387
      %v809 = vunpack.c.l.b16 %v388
      %v810 = vunpack.c.h.b16 %v388
      %v811 = vunpack.c.l.b16 %v389
      %v812 = vunpack.c.h.b16 %v389
      %v813 = vunpack.c.l.b16 %v390
      %v814 = vunpack.c.h.b16 %v390
      %v815 = vunpack.c.l.b16 %v391
      %v816 = vunpack.c.l.b16 %v392
      %v817 = vunpack.c.h.b16 %v392
      %v818 = vunpack.c.l.b16 %v393
      %v819 = vunpack.c.h.b16 %v393
      %v820 = vunpack.c.l.b16 %v394
      %v821 = vunpack.c.h.b16 %v394
      %v822 = vunpack.c.l.b16 %v395
      %v823 = vunpack.c.h.b16 %v395
      %v824 = vunpack.c.l.b16 %v396
      %v825 = vunpack.c.h.b16 %v396
      %v826 = vunpack.c.l.b16 %v397
      %v827 = vunpack.c.h.b16 %v397
      %v828 = vunpack.c.l.b16 %v398
      %v829 = vunpack.c.h.b16 %v398
      %v830 = vunpack.c.l.b16 %v399
      %v831 = vunpack.c.h.b16 %v399
      %v832 = vunpack.c.l.b16 %v400
      %v833 = vunpack.c.l.b16 %v401
      %v834 = vunpack.c.h.b16 %v401
      %v835 = vunpack.c.l.b16 %v402
      %v836 = vunpack.c.h.b16 %v402
      %v837 = vunpack.c.l.b16 %v403
      %v838 = vunpack.c.h.b16 %v403
      %v839 = vunpack.c.l.b16 %v404
      %v840 = vunpack.c.h.b16 %v404
      %v841 = vunpack.c.l.b16 %v405
      %v842 = vunpack.c.h.b16 %v405
      %v843 = vunpack.c.l.b16 %v406
      %v844 = vunpack.c.h.b16 %v406
      %v845 = vunpack.c.l.b16 %v407
      %v846 = vunpack.c.h.b16 %v407
      %v847 = vunpack.c.l.b16 %v408
      %v848 = vunpack.c.h.b16 %v408
      %v849 = vunpack.c.l.b16 %v409
      %v850 = vunpack.c.l.b16 %v410
      %v851 = vunpack.c.h.b16 %v410
      %v852 = vunpack.c.l.b16 %v411
      %v853 = vunpack.c.h.b16 %v411
      %v854 = vunpack.c.l.b16 %v412
      %v855 = vunpack.c.h.b16 %v412
      %v856 = vunpack.c.l.b16 %v413
      %v857 = vunpack.c.h.b16 %v413
      %v858 = vunpack.c.l.b16 %v414
      %v859 = vunpack.c.h.b16 %v414
      %v860 = vunpack.c.l.b16 %v415
      %v861 = vunpack.c.h.b16 %v415
      %v862 = vunpack.c.l.b16 %v416
      %v863 = vunpack.c.h.b16 %v416
      %v864 = vunpack.c.l.b16 %v417
      %v865 = vunpack.c.h.b16 %v417
      %v866 = vunpack.c.l.b16 %v418
      %v867 = vunpack.c.l.b16 %v419
      %v868 = vunpack.c.h.b16 %v419
      %v869 = vunpack.c.l.b16 %v420
      %v870 = vunpack.c.h.b16 %v420
      %v871 = vunpack.c.l.b16 %v421
      %v872 = vunpack.c.h.b16 %v421
      %v873 = vunpack.c.l.b16 %v422
      %v874 = vunpack.c.h.b16 %v422
      %v875 = vunpack.c.l.b16 %v423
      %v876 = vunpack.c.h.b16 %v423
      %v877 = vunpack.c.l.b16 %v424
      %v878 = vunpack.c.h.b16 %v424
      %v879 = vunpack.c.l.b16 %v425
      %v880 = vunpack.c.h.b16 %v425
      %v881 = vunpack.c.l.b16 %v426
      %v882 = vunpack.c.h.b16 %v426
      %v883 = vunpack.c.l.b16 %v427
      %v884 = vunpack.c.l.b16 %v428
      %v885 = vunpack.c.h.b16 %v428
      %v886 = vunpack.c.l.b16 %v429
      %v887 = vunpack.c.h.b16 %v429
      %v888 = vunpack.c.l.b16 %v430
      %v889 = vunpack.c.h.b16 %v430
      %v890 = vunpack.c.l.b16 %v431
      %v891 = vunpack.c.h.b16 %v431
      %v892 = vunpack.c.l.b16 %v432
      %v893 = vunpack.c.h.b16 %v432
      %v894 = vunpack.c.l.b16 %v433
      %v895 = vunpack.c.h.b16 %v433
      %v896 = vunpack.c.l.b16 %v434
      %v897 = vunpack.c.h.b16 %v434
      %v898 = vunpack.c.l.b16 %v435
      %v899 = vunpack.c.h.b16 %v435
      %v900 = vunpack.c.l.b16 %v436
      %v901 = vunpack.c.l.b16 %v437
      %v902 = vunpack.c.h.b16 %v437
      %v903 = vunpack.c.l.b16 %v438
      %v904 = vunpack.c.h.b16 %v438
      %v905 = vunpack.c.l.b16 %v439
      %v906 = vunpack.c.h.b16 %v439
      %v907 = vunpack.c.l.b16 %v440
      %v908 = vunpack.c.h.b16 %v440
      %v909 = vunpack.c.l.b16 %v441
      %v910 = vunpack.c.h.b16 %v441
      %v911 = vunpack.c.l.b16 %v442
      %v912 = vunpack.c.h.b16 %v442
      %v913 = vunpack.c.l.b16 %v443
      %v914 = vunpack.c.h.b16 %v443
      %v915 = vunpack.c.l.b16 %v444
      %v916 = vunpack.c.h.b16 %v444
      %v917 = vunpack.c.l.b16 %v445
      %v918 = vunpack.c.l.b16 %v446
      %v919 = vunpack.c.h.b16 %v446
      %v920 = vunpack.c.l.b16 %v447
      %v921 = vunpack.c.h.b16 %v447
      %v922 = vunpack.c.l.b16 %v448
      %v923 = vunpack.c.h.b16 %v448
      %v924 = vunpack.c.l.b16 %v449
      %v925 = vunpack.c.h.b16 %v449
      %v926 = vunpack.c.l.b16 %v450
      %v927 = vunpack.c.h.b16 %v450
      %v928 = vunpack.c.l.b16 %v451
      %v929 = vunpack.c.h.b16 %v451
      %v930 = vunpack.c.l.b16 %v452
      %v931 = vunpack.c.h.b16 %v452
      %v932 = vunpack.c.l.b16 %v453
      %v933 = vunpack.c.h.b16 %v453
      %v934 = vunpack.c.l.b16 %v454
      %v935 = vunpack.c.l.b16 %v455
      %v936 = vunpack.c.h.b16 %v455
      %v937 = vunpack.c.l.b16 %v456
      %v938 = vunpack.c.h.b16 %v456
      %v939 = vunpack.c.l.b16 %v457
      %v940 = vunpack.c.h.b16 %v457
      %v941 = vunpack.c.l.b16 %v458
      %v942 = vunpack.c.h.b16 %v458
      %v943 = vunpack.c.l.b16 %v459
      %v944 = vunpack.c.h.b16 %v459
      %v945 = vunpack.c.l.b16 %v460
      %v946 = vunpack.c.h.b16 %v460
      %v947 = vunpack.c.l.b16 %v461
      %v948 = vunpack.c.h.b16 %v461
      %v949 = vunpack.c.l.b16 %v462
      %v950 = vunpack.c.h.b16 %v462
      %v951 = vunpack.c.l.b16 %v463
      %v952 = vunpack.c.l.b16 %v464
      %v953 = vunpack.c.h.b16 %v464
      %v954 = vunpack.c.l.b16 %v465
      %v955 = vunpack.c.h.b16 %v465
      %v956 = vunpack.c.l.b16 %v466
      %v957 = vunpack.c.h.b16 %v466
      %v958 = vunpack.c.l.b16 %v467
      %v959 = vunpack.c.h.b16 %v467
      %v960 = vunpack.c.l.b16 %v468
      %v961 = vunpack.c.h.b16 %v468
      %v962 = vunpack.c.l.b16 %v469
      %v963 = vunpack.c.h.b16 %v469
      %v964 = vunpack.c.l.b16 %v470
      %v965 = vunpack.c.h.b16 %v470
      %v966 = vunpack.c.l.b16 %v471
      %v967 = vunpack.c.h.b16 %v471
      %v968 = vunpack.c.l.b16 %v472
      %v969 = vunpack.c.l.b16 %v473
      %v970 = vunpack.c.h.b16 %v473
      %v971 = vunpack.c.l.b16 %v474
      %v972 = vunpack.c.h.b16 %v474
      %v973 = vunpack.c.l.b16 %v475
      %v974 = vunpack.c.h.b16 %v475
      %v975 = vunpack.c.l.b16 %v476
      %v976 = vunpack.c.h.b16 %v476
      %v977 = vunpack.c.l.b16 %v477
      %v978 = vunpack.c.h.b16 %v477
      %v979 = vunpack.c.l.b16 %v478
      %v980 = vunpack.c.h.b16 %v478
      %v981 = vunpack.c.l.b16 %v479
      %v982 = vunpack.c.h.b16 %v479
      %v983 = vunpack.c.l.b16 %v480
      %v984 = vunpack.c.h.b16 %v480
      %v985 = vunpack.c.l.b16 %v481
      %v986 = vunpack.c.l.b16 %v482
      %v987 = vunpack.c.h.b16 %v482
      %v988 = vunpack.c.l.b16 %v483
      %v989 = vunpack.c.h.b16 %v483
      %v990 = vunpack.c.l.b16 %v484
      %v991 = vunpack.c.h.b16 %v484
      %v992 = vunpack.c.l.b16 %v485
      %v993 = vunpack.c.h.b16 %v485
      %v994 = vunpack.c.l.b16 %v486
      %v995 = vunpack.c.h.b16 %v486
      %v996 = vunpack.c.l.b16 %v487
      %v997 = vunpack.c.h.b16 %v487
      %v998 = vunpack.c.l.b16 %v488
      %v999 = vunpack.c.h.b16 %v488
      %v1000 = vunpack.c.l.b16 %v489
      %v1001 = vunpack.c.h.b16 %v489
      %v1002 = vunpack.c.l.b16 %v490
      %v1003 = vpack.c.b16 %v748, %v731
      %v1004 = vpack.c.b16 %v749, %v732
      %v1005 = vpack.c.b16 %v750, %v733
      %v1006 = vpack.c.b16 %v751, %v734
      %v1007 = vpack.c.b16 %v752, %v735
      %v1008 = vpack.c.b16 %v753, %v736
      %v1009 = vpack.c.b16 %v754, %v737
      %v1010 = vpack.c.b16 %v755, %v738
      %v1011 = vpack.c.b16 %v756, %v739
      %v1012 = vpack.c.b16 %v757, %v740
      %v1013 = vpack.c.b16 %v758, %v741
      %v1014 = vpack.c.b16 %v759, %v742
      %v1015 = vpack.c.b16 %v760, %v743
      %v1016 = vpack.c.b16 %v761, %v744
      %v1017 = vpack.c.b16 %v762, %v745
      %v1018 = vpack.c.b16 %v763, %v746
      %v1019 = vpack.c.b16 %v764, %v747
      %v1020 = vpack.c.b16 %v782, %v765
      %v1021 = vpack.c.b16 %v783, %v766
      %v1022 = vpack.c.b16 %v784, %v767
      %v1023 = vpack.c.b16 %v785, %v768
      %v1024 = vpack.c.b16 %v786, %v769
      %v1025 = vpack.c.b16 %v787, %v770
      %v1026 = vpack.c.b16 %v788, %v771
      %v1027 = vpack.c.b16 %v789, %v772
      %v1028 = vpack.c.b16 %v790, %v773
      %v1029 = vpack.c.b16 %v791, %v774
      %v1030 = vpack.c.b16 %v792, %v775
      %v1031 = vpack.c.b16 %v793, %v776
      %v1032 = vpack.c.b16 %v794, %v777
      %v1033 = vpack.c.b16 %v795, %v778
      %v1034 = vpack.c.b16 %v796, %v779
      %v1035 = vpack.c.b16 %v797, %v780
      %v1036 = vpack.c.b16 %v798, %v781
      %v1037 = vpack.c.b16 %v816, %v799
      %v1038 = vpack.c.b16 %v817, %v800
      %v1039 = vpack.c.b16 %v818, %v801
      %v1040 = vpack.c.b16 %v819, %v802
      %v1041 = vpack.c.b16 %v820, %v803
      %v1042 = vpack.c.b16 %v821, %v804
      %v1043 = vpack.c.b16 %v822, %v805
      %v1044 = vpack.c.b16 %v823, %v806
      %v1045 = vpack.c.b16 %v824, %v807
      %v1046 = vpack.c.b16 %v825, %v808
      %v1047 = vpack.c.b16 %v826, %v809
      %v1048 = vpack.c.b16 %v827, %v810
      %v1049 = vpack.c.b16 %v828, %v811
      %v1050 = vpack.c.b16 %v829, %v812
      %v1051 = vpack.c.b16 %v830, %v813
      %v1052 = vpack.c.b16 %v831, %v814
      %v1053 = vpack.c.b16 %v832, %v815
      %v1054 = vpack.c.b16 %v850, %v833
      %v1055 = vpack.c.b16 %v851, %v834
      %v1056 = vpack.c.b16 %v852, %v835
      %v1057 = vpack.c.b16 %v853, %v836
      %v1058 = vpack.c.b16 %v854, %v837
      %v1059 = vpack.c.b16 %v855, %v838
      %v1060 = vpack.c.b16 %v856, %v839
      %v1061 = vpack.c.b16 %v857, %v840
      %v1062 = vpack.c.b16 %v858, %v841
      %v1063 = vpack.c.b16 %v859, %v842
      %v1064 = vpack.c.b16 %v860, %v843
      %v1065 = vpack.c.b16 %v861, %v844
      %v1066 = vpack.c.b16 %v862, %v845
      %v1067 = vpack.c.b16 %v863, %v846
      %v1068 = vpack.c.b16 %v864, %v847
      %v1069 = vpack.c.b16 %v865, %v848
      %v1070 = vpack.c.b16 %v866, %v849
      %v1071 = vpack.c.b16 %v884, %v867
      %v1072 = vpack.c.b16 %v885, %v868
      %v1073 = vpack.c.b16 %v886, %v869
      %v1074 = vpack.c.b16 %v887, %v870
      %v1075 = vpack.c.b16 %v888, %v871
      %v1076 = vpack.c.b16 %v889, %v872
      %v1077 = vpack.c.b16 %v890, %v873
      %v1078 = vpack.c.b16 %v891, %v874
      %v1079 = vpack.c.b16 %v892, %v875
      %v1080 = vpack.c.b16 %v893, %v876
      %v1081 = vpack.c.b16 %v894, %v877
      %v1082 = vpack.c.b16 %v895, %v878
      %v1083 = vpack.c.b16 %v896, %v879
      %v1084 = vpack.c.b16 %v897, %v880
      %v1085 = vpack.c.b16 %v898, %v881
      %v1086 = vpack.c.b16 %v899, %v882
      %v1087 = vpack.c.b16 %v900, %v883
      %v1088 = vpack.c.b16 %v918, %v901
      %v1089 = vpack.c.b16 %v919, %v902
      %v1090 = vpack.c.b16 %v920, %v903
      %v1091 = vpack.c.b16 %v921, %v904
      %v1092 = vpack.c.b16 %v922, %v905
      %v1093 = vpack.c.b16 %v923, %v906
      %v1094 = vpack.c.b16 %v924, %v907
      %v1095 = vpack.c.b16 %v925, %v908
      %v1096 = vpack.c.b16 %v926, %v909
      %v1097 = vpack.c.b16 %v927, %v910
      %v1098 = vpack.c.b16 %v928, %v911
      %v1099 = vpack.c.b16 %v929, %v912
      %v1100 = vpack.c.b16 %v930, %v913
      %v1101 = vpack.c.b16 %v931, %v914
      %v1102 = vpack.c.b16 %v932, %v915
      %v1103 = vpack.c.b16 %v933, %v916
      %v1104 = vpack.c.b16 %v934, %v917
      %v1105 = vpack.c.b16 %v952, %v935
      %v1106 = vpack.c.b16 %v953, %v936
      %v1107 = vpack.c.b16 %v954, %v937
      %v1108 = vpack.c.b16 %v955, %v938
      %v1109 = vpack.c.b16 %v956, %v939
      %v1110 = vpack.c.b16 %v957, %v940
      %v1111 = vpack.c.b16 %v958, %v941
      %v1112 = vpack.c.b16 %v959, %v942
      %v1113 = vpack.c.b16 %v960, %v943
      %v1114 = vpack.c.b16 %v961, %v944
      %v1115 = vpack.c.b16 %v962, %v945
      %v1116 = vpack.c.b16 %v963, %v946
      %v1117 = vpack.c.b16 %v964, %v947
      %v1118 = vpack.c.b16 %v965, %v948
      %v1119 = vpack.c.b16 %v966, %v949
      %v1120 = vpack.c.b16 %v967, %v950
      %v1121 = vpack.c.b16 %v968, %v951
      %v1122 = vpack.c.b16 %v986, %v969
      %v1123 = vpack.c.b16 %v987, %v970
      %v1124 = vpack.c.b16 %v988, %v971
      %v1125 = vpack.c.b16 %v989, %v972
      %v1126 = vpack.c.b16 %v990, %v973
      %v1127 = vpack.c.b16 %v991, %v974
      %v1128 = vpack.c.b16 %v992, %v975
      %v1129 = vpack.c.b16 %v993, %v976
      %v1130 = vpack.c.b16 %v994, %v977
      %v1131 = vpack.c.b16 %v995, %v978
      %v1132 = vpack.c.b16 %v996, %v979
      %v1133 = vpack.c.b16 %v997, %v980
      %v1134 = vpack.c.b16 %v998, %v981
      %v1135 = vpack.c.b16 %v999, %v982
      %v1136 = vpack.c.b16 %v1000, %v983
      %v1137 = vpack.c.b16 %v1001, %v984
      %v1138 = vpack.c.b16 %v1002, %v985
      %1275 = vmatprep.subr.bf16.mxu0 %v1004
      %1276 = vmatpush1.bf16.msra.mxu0 %v1003
      %1277 = vmatprep.subr.bf16.mxu0 %v1021
      %1278 = vmatpush1.bf16.msra.mxu0 %v1020
      %1279 = vmatprep.subr.bf16.mxu0 %v1038
      %1280 = vmatpush1.bf16.msra.mxu0 %v1037
      %1281 = vmatprep.subr.bf16.mxu0 %v1055
      %1282 = vmatpush1.bf16.msra.mxu0 %v1054
      %1283 = vmatprep.subr.bf16.mxu0 %v1072
      %1284 = vmatpush1.bf16.msra.mxu0 %v1071
      %1285 = vmatprep.subr.bf16.mxu0 %v1089
      %1286 = vmatpush1.bf16.msra.mxu0 %v1088
      %1287 = vmatprep.subr.bf16.mxu0 %v1106
      %1288 = vmatpush1.bf16.msra.mxu0 %v1105
      %1289 = vmatprep.subr.bf16.mxu0 %v1123
      %1290 = vmatpush1.bf16.msra.mxu0 %v1122
      %1291 = vmatprep.subr.bf16.mxu0 0
      %1292 = vmatpush1.bf16.msra.mxu0 0
      %1293 = vmatprep.subr.bf16.mxu0 0
      %1294 = vmatpush1.bf16.msra.mxu0 0
      %1295 = vmatprep.subr.bf16.mxu0 0
      %1296 = vmatpush1.bf16.msra.mxu0 0
      %1297 = vmatprep.subr.bf16.mxu0 0
      %1298 = vmatpush1.bf16.msra.mxu0 0
      %1299 = vmatprep.subr.bf16.mxu0 0
      %1300 = vmatpush1.bf16.msra.mxu0 0
      %1301 = vmatprep.subr.bf16.mxu0 0
      %1302 = vmatpush1.bf16.msra.mxu0 0
      %1303 = vmatprep.subr.bf16.mxu0 0
      %1304 = vmatpush1.bf16.msra.mxu0 0
      %1305 = vmatprep.subr.bf16.mxu0 0
      %1306 = vmatpush1.bf16.msra.mxu0 0
      %1307 = vmatprep.mubr.bf16.mxu0 0
      %1308 = vmatmul.mubr.bf16.gmra.mrb[0].mxu0 %v555
      %v1309 = vpop.f32.mrb[0].mxu0
      %v1310 = vadd.f32 0.0, %v1309
      %v1311 = vpop.f32.mrb[0].mxu0
      %v1312 = vadd.f32 0.0, %v1311
      %v1313 = vpop.f32.mrb[0].mxu0
      %v1314 = vadd.f32 0.0, %v1313
      %v1315 = vpop.f32.mrb[0].mxu0
      %v1316 = vadd.f32 0.0, %v1315
      %1317 = vmatprep.mubr.bf16.mxu0 0
      %1318 = vmatmul.mubr.bf16.gmra.mrb[0].mxu0 %v556
      %v1319 = vpop.f32.mrb[0].mxu0
      %v1320 = vadd.f32 0.0, %v1319
      %v1321 = vpop.f32.mrb[0].mxu0
      %v1322 = vadd.f32 0.0, %v1321
      %v1323 = vpop.f32.mrb[0].mxu0
      %v1324 = vadd.f32 0.0, %v1323
      %v1325 = vpop.f32.mrb[0].mxu0
      %v1326 = vadd.f32 0.0, %v1325
      %1327 = vmatprep.mubr.bf16.mxu0 0
      %1328 = vmatmul.mubr.bf16.gmra.mrb[0].mxu0 %v557
      %v1329 = vpop.f32.mrb[0].mxu0
      %v1330 = vadd.f32 0.0, %v1329
      %v1331 = vpop.f32.mrb[0].mxu0
      %v1332 = vadd.f32 0.0, %v1331
      %v1333 = vpop.f32.mrb[0].mxu0
      %v1334 = vadd.f32 0.0, %v1333
      %v1335 = vpop.f32.mrb[0].mxu0
      %v1336 = vadd.f32 0.0, %v1335
      %1337 = vmatprep.mubr.bf16.mxu0 0
      %1338 = vmatmul.mubr.bf16.gmra.mrb[0].mxu0 %v558
      %v1339 = vpop.f32.mrb[0].mxu0
      %v1340 = vadd.f32 0.0, %v1339
      %v1341 = vpop.f32.mrb[0].mxu0
      %v1342 = vadd.f32 0.0, %v1341
      %v1343 = vpop.f32.mrb[0].mxu0
      %v1344 = vadd.f32 0.0, %v1343
      %v1345 = vpop.f32.mrb[0].mxu0
      %v1346 = vadd.f32 0.0, %v1345
      %1347 = vmatprep.mubr.bf16.mxu0 0
      %1348 = vmatmul.mubr.bf16.gmra.mrb[0].mxu0 %v559
      %v1349 = vpop.f32.mrb[0].mxu0
      %v1350 = vadd.f32 0.0, %v1349
      %v1351 = vpop.f32.mrb[0].mxu0
      %v1352 = vadd.f32 0.0, %v1351
      %v1353 = vpop.f32.mrb[0].mxu0
      %v1354 = vadd.f32 0.0, %v1353
      %v1355 = vpop.f32.mrb[0].mxu0
      %v1356 = vadd.f32 0.0, %v1355
      %1357 = vmatprep.mubr.bf16.mxu0 0
      %1358 = vmatmul.mubr.bf16.gmra.mrb[0].mxu0 %v560
      %v1359 = vpop.f32.mrb[0].mxu0
      %v1360 = vadd.f32 0.0, %v1359
      %v1361 = vpop.f32.mrb[0].mxu0
      %v1362 = vadd.f32 0.0, %v1361
      %v1363 = vpop.f32.mrb[0].mxu0
      %v1364 = vadd.f32 0.0, %v1363
      %v1365 = vpop.f32.mrb[0].mxu0
      %v1366 = vadd.f32 0.0, %v1365
      %1367 = vmatprep.mubr.bf16.mxu0 0
      %1368 = vmatmul.mubr.bf16.gmra.mrb[0].mxu0 %v561
      %v1369 = vpop.f32.mrb[0].mxu0
      %v1370 = vadd.f32 0.0, %v1369
      %v1371 = vpop.f32.mrb[0].mxu0
      %v1372 = vadd.f32 0.0, %v1371
      %v1373 = vpop.f32.mrb[0].mxu0
      %v1374 = vadd.f32 0.0, %v1373
      %v1375 = vpop.f32.mrb[0].mxu0
      %v1376 = vadd.f32 0.0, %v1375
      %1377 = vmatprep.mubr.bf16.mxu0 0
      %1378 = vmatmul.mubr.bf16.gmra.mrb[0].mxu0 %v562
      %v1379 = vpop.f32.mrb[0].mxu0
      %v1380 = vadd.f32 0.0, %v1379
      %v1381 = vpop.f32.mrb[0].mxu0
      %v1382 = vadd.f32 0.0, %v1381
      %v1383 = vpop.f32.mrb[0].mxu0
      %v1384 = vadd.f32 0.0, %v1383
      %v1385 = vpop.f32.mrb[0].mxu0
      %v1386 = vadd.f32 0.0, %v1385
      %1387 = vmatprep.mubr.bf16.mxu0 0
      %1388 = vmatmul.mubr.bf16.gmra.mrb[0].mxu0 %v563
      %v1389 = vpop.f32.mrb[0].mxu0
      %v1390 = vadd.f32 0.0, %v1389
      %v1391 = vpop.f32.mrb[0].mxu0
      %v1392 = vadd.f32 0.0, %v1391
      %v1393 = vpop.f32.mrb[0].mxu0
      %v1394 = vadd.f32 0.0, %v1393
      %v1395 = vpop.f32.mrb[0].mxu0
      %v1396 = vadd.f32 0.0, %v1395
      %1397 = vmatprep.mubr.bf16.mxu0 0
      %1398 = vmatmul.mubr.bf16.gmra.mrb[0].mxu0 %v564
      %v1399 = vpop.f32.mrb[0].mxu0
      %v1400 = vadd.f32 0.0, %v1399
      %v1401 = vpop.f32.mrb[0].mxu0
      %v1402 = vadd.f32 0.0, %v1401
      %v1403 = vpop.f32.mrb[0].mxu0
      %v1404 = vadd.f32 0.0, %v1403
      %v1405 = vpop.f32.mrb[0].mxu0
      %v1406 = vadd.f32 0.0, %v1405
      %1407 = vmatprep.mubr.bf16.mxu0 0
      %1408 = vmatmul.mubr.bf16.gmra.mrb[0].mxu0 %v565
      %v1409 = vpop.f32.mrb[0].mxu0
      %v1410 = vadd.f32 0.0, %v1409
      %v1411 = vpop.f32.mrb[0].mxu0
      %v1412 = vadd.f32 0.0, %v1411
      %v1413 = vpop.f32.mrb[0].mxu0
      %v1414 = vadd.f32 0.0, %v1413
      %v1415 = vpop.f32.mrb[0].mxu0
      %v1416 = vadd.f32 0.0, %v1415
      %1417 = vmatprep.mubr.bf16.mxu0 0
      %1418 = vmatmul.mubr.bf16.gmra.mrb[0].mxu0 %v566
      %v1419 = vpop.f32.mrb[0].mxu0
      %v1420 = vadd.f32 0.0, %v1419
      %v1421 = vpop.f32.mrb[0].mxu0
      %v1422 = vadd.f32 0.0, %v1421
      %v1423 = vpop.f32.mrb[0].mxu0
      %v1424 = vadd.f32 0.0, %v1423
      %v1425 = vpop.f32.mrb[0].mxu0
      %v1426 = vadd.f32 0.0, %v1425
      %1427 = vmatprep.mubr.bf16.mxu0 0
      %1428 = vmatmul.mubr.bf16.gmra.mrb[0].mxu0 %v567
      %v1429 = vpop.f32.mrb[0].mxu0
      %v1430 = vadd.f32 0.0, %v1429
      %v1431 = vpop.f32.mrb[0].mxu0
      %v1432 = vadd.f32 0.0, %v1431
      %v1433 = vpop.f32.mrb[0].mxu0
      %v1434 = vadd.f32 0.0, %v1433
      %v1435 = vpop.f32.mrb[0].mxu0
      %v1436 = vadd.f32 0.0, %v1435
      %1437 = vmatprep.mubr.bf16.mxu0 0
      %1438 = vmatmul.mubr.bf16.gmra.mrb[0].mxu0 %v568
      %v1439 = vpop.f32.mrb[0].mxu0
      %v1440 = vadd.f32 0.0, %v1439
      %v1441 = vpop.f32.mrb[0].mxu0
      %v1442 = vadd.f32 0.0, %v1441
      %v1443 = vpop.f32.mrb[0].mxu0
      %v1444 = vadd.f32 0.0, %v1443
      %v1445 = vpop.f32.mrb[0].mxu0
      %v1446 = vadd.f32 0.0, %v1445
      %1447 = vmatprep.mubr.bf16.mxu0 0
      %1448 = vmatmul.mubr.bf16.gmra.mrb[0].mxu0 %v569
      %v1449 = vpop.f32.mrb[0].mxu0
      %v1450 = vadd.f32 0.0, %v1449
      %v1451 = vpop.f32.mrb[0].mxu0
      %v1452 = vadd.f32 0.0, %v1451
      %v1453 = vpop.f32.mrb[0].mxu0
      %v1454 = vadd.f32 0.0, %v1453
      %v1455 = vpop.f32.mrb[0].mxu0
      %v1456 = vadd.f32 0.0, %v1455
      %1457 = vmatprep.mubr.bf16.mxu0 0
      %1458 = vmatmul.mubr.bf16.gmra.mrb[0].mxu0 %v570
      %v1459 = vpop.f32.mrb[0].mxu0
      %v1460 = vadd.f32 0.0, %v1459
      %v1461 = vpop.f32.mrb[0].mxu0
      %v1462 = vadd.f32 0.0, %v1461
      %v1463 = vpop.f32.mrb[0].mxu0
      %v1464 = vadd.f32 0.0, %v1463
      %v1465 = vpop.f32.mrb[0].mxu0
      %v1466 = vadd.f32 0.0, %v1465
      %1467 = vdwg.mxu0
      %1468 = vmatprep.subr.bf16.mxu0 %v1006
      %1469 = vmatpush1.bf16.msra.mxu0 %v1005
      %1470 = vmatprep.subr.bf16.mxu0 %v1023
      %1471 = vmatpush1.bf16.msra.mxu0 %v1022
      %1472 = vmatprep.subr.bf16.mxu0 %v1040
      %1473 = vmatpush1.bf16.msra.mxu0 %v1039
      %1474 = vmatprep.subr.bf16.mxu0 %v1057
      %1475 = vmatpush1.bf16.msra.mxu0 %v1056
      %1476 = vmatprep.subr.bf16.mxu0 %v1074
      %1477 = vmatpush1.bf16.msra.mxu0 %v1073
      %1478 = vmatprep.subr.bf16.mxu0 %v1091
      %1479 = vmatpush1.bf16.msra.mxu0 %v1090
      %1480 = vmatprep.subr.bf16.mxu0 %v1108
      %1481 = vmatpush1.bf16.msra.mxu0 %v1107
      %1482 = vmatprep.subr.bf16.mxu0 %v1125
      %1483 = vmatpush1.bf16.msra.mxu0 %v1124
      %1484 = vmatprep.subr.bf16.mxu0 0
      %1485 = vmatpush1.bf16.msra.mxu0 0
      %1486 = vmatprep.subr.bf16.mxu0 0
      %1487 = vmatpush1.bf16.msra.mxu0 0
      %1488 = vmatprep.subr.bf16.mxu0 0
      %1489 = vmatpush1.bf16.msra.mxu0 0
      %1490 = vmatprep.subr.bf16.mxu0 0
      %1491 = vmatpush1.bf16.msra.mxu0 0
      %1492 = vmatprep.subr.bf16.mxu0 0
      %1493 = vmatpush1.bf16.msra.mxu0 0
      %1494 = vmatprep.subr.bf16.mxu0 0
      %1495 = vmatpush1.bf16.msra.mxu0 0
      %1496 = vmatprep.subr.bf16.mxu0 0
      %1497 = vmatpush1.bf16.msra.mxu0 0
      %1498 = vmatprep.subr.bf16.mxu0 0
      %1499 = vmatpush1.bf16.msra.mxu0 0
      %1500 = vmatprep.mubr.bf16.mxu0 0
      %1501 = vmatmul.mubr.bf16.gmra.mrb[0].mxu0 %v555
      %v1502 = vpop.f32.mrb[0].mxu0
      %v1503 = vadd.f32 0.0, %v1502
      %v1504 = vpop.f32.mrb[0].mxu0
      %v1505 = vadd.f32 0.0, %v1504
      %v1506 = vpop.f32.mrb[0].mxu0
      %v1507 = vadd.f32 0.0, %v1506
      %v1508 = vpop.f32.mrb[0].mxu0
      %v1509 = vadd.f32 0.0, %v1508
      %1510 = vmatprep.mubr.bf16.mxu0 0
      %1511 = vmatmul.mubr.bf16.gmra.mrb[0].mxu0 %v556
      %v1512 = vpop.f32.mrb[0].mxu0
      %v1513 = vadd.f32 0.0, %v1512
      %v1514 = vpop.f32.mrb[0].mxu0
      %v1515 = vadd.f32 0.0, %v1514
      %v1516 = vpop.f32.mrb[0].mxu0
      %v1517 = vadd.f32 0.0, %v1516
      %v1518 = vpop.f32.mrb[0].mxu0
      %v1519 = vadd.f32 0.0, %v1518
      %1520 = vmatprep.mubr.bf16.mxu0 0
      %1521 = vmatmul.mubr.bf16.gmra.mrb[0].mxu0 %v557
      %v1522 = vpop.f32.mrb[0].mxu0
      %v1523 = vadd.f32 0.0, %v1522
      %v1524 = vpop.f32.mrb[0].mxu0
      %v1525 = vadd.f32 0.0, %v1524
      %v1526 = vpop.f32.mrb[0].mxu0
      %v1527 = vadd.f32 0.0, %v1526
      %v1528 = vpop.f32.mrb[0].mxu0
      %v1529 = vadd.f32 0.0, %v1528
      %1530 = vmatprep.mubr.bf16.mxu0 0
      %1531 = vmatmul.mubr.bf16.gmra.mrb[0].mxu0 %v558
      %v1532 = vpop.f32.mrb[0].mxu0
      %v1533 = vadd.f32 0.0, %v1532
      %v1534 = vpop.f32.mrb[0].mxu0
      %v1535 = vadd.f32 0.0, %v1534
      %v1536 = vpop.f32.mrb[0].mxu0
      %v1537 = vadd.f32 0.0, %v1536
      %v1538 = vpop.f32.mrb[0].mxu0
      %v1539 = vadd.f32 0.0, %v1538
      %1540 = vmatprep.mubr.bf16.mxu0 0
      %1541 = vmatmul.mubr.bf16.gmra.mrb[0].mxu0 %v559
      %v1542 = vpop.f32.mrb[0].mxu0
      %v1543 = vadd.f32 0.0, %v1542
      %v1544 = vpop.f32.mrb[0].mxu0
      %v1545 = vadd.f32 0.0, %v1544
      %v1546 = vpop.f32.mrb[0].mxu0
      %v1547 = vadd.f32 0.0, %v1546
      %v1548 = vpop.f32.mrb[0].mxu0
      %v1549 = vadd.f32 0.0, %v1548
      %1550 = vmatprep.mubr.bf16.mxu0 0
      %1551 = vmatmul.mubr.bf16.gmra.mrb[0].mxu0 %v560
      %v1552 = vpop.f32.mrb[0].mxu0
      %v1553 = vadd.f32 0.0, %v1552
      %v1554 = vpop.f32.mrb[0].mxu0
      %v1555 = vadd.f32 0.0, %v1554
      %v1556 = vpop.f32.mrb[0].mxu0
      %v1557 = vadd.f32 0.0, %v1556
      %v1558 = vpop.f32.mrb[0].mxu0
      %v1559 = vadd.f32 0.0, %v1558
      %1560 = vmatprep.mubr.bf16.mxu0 0
      %1561 = vmatmul.mubr.bf16.gmra.mrb[0].mxu0 %v561
      %v1562 = vpop.f32.mrb[0].mxu0
      %v1563 = vadd.f32 0.0, %v1562
      %v1564 = vpop.f32.mrb[0].mxu0
      %v1565 = vadd.f32 0.0, %v1564
      %v1566 = vpop.f32.mrb[0].mxu0
      %v1567 = vadd.f32 0.0, %v1566
      %v1568 = vpop.f32.mrb[0].mxu0
      %v1569 = vadd.f32 0.0, %v1568
      %1570 = vmatprep.mubr.bf16.mxu0 0
      %1571 = vmatmul.mubr.bf16.gmra.mrb[0].mxu0 %v562
      %v1572 = vpop.f32.mrb[0].mxu0
      %v1573 = vadd.f32 0.0, %v1572
      %v1574 = vpop.f32.mrb[0].mxu0
      %v1575 = vadd.f32 0.0, %v1574
      %v1576 = vpop.f32.mrb[0].mxu0
      %v1577 = vadd.f32 0.0, %v1576
      %v1578 = vpop.f32.mrb[0].mxu0
      %v1579 = vadd.f32 0.0, %v1578
      %1580 = vmatprep.mubr.bf16.mxu0 0
      %1581 = vmatmul.mubr.bf16.gmra.mrb[0].mxu0 %v563
      %v1582 = vpop.f32.mrb[0].mxu0
      %v1583 = vadd.f32 0.0, %v1582
      %v1584 = vpop.f32.mrb[0].mxu0
      %v1585 = vadd.f32 0.0, %v1584
      %v1586 = vpop.f32.mrb[0].mxu0
      %v1587 = vadd.f32 0.0, %v1586
      %v1588 = vpop.f32.mrb[0].mxu0
      %v1589 = vadd.f32 0.0, %v1588
      %1590 = vmatprep.mubr.bf16.mxu0 0
      %1591 = vmatmul.mubr.bf16.gmra.mrb[0].mxu0 %v564
      %v1592 = vpop.f32.mrb[0].mxu0
      %v1593 = vadd.f32 0.0, %v1592
      %v1594 = vpop.f32.mrb[0].mxu0
      %v1595 = vadd.f32 0.0, %v1594
      %v1596 = vpop.f32.mrb[0].mxu0
      %v1597 = vadd.f32 0.0, %v1596
      %v1598 = vpop.f32.mrb[0].mxu0
      %v1599 = vadd.f32 0.0, %v1598
      %1600 = vmatprep.mubr.bf16.mxu0 0
      %1601 = vmatmul.mubr.bf16.gmra.mrb[0].mxu0 %v565
      %v1602 = vpop.f32.mrb[0].mxu0
      %v1603 = vadd.f32 0.0, %v1602
      %v1604 = vpop.f32.mrb[0].mxu0
      %v1605 = vadd.f32 0.0, %v1604
      %v1606 = vpop.f32.mrb[0].mxu0
      %v1607 = vadd.f32 0.0, %v1606
      %v1608 = vpop.f32.mrb[0].mxu0
      %v1609 = vadd.f32 0.0, %v1608
      %1610 = vmatprep.mubr.bf16.mxu0 0
      %1611 = vmatmul.mubr.bf16.gmra.mrb[0].mxu0 %v566
      %v1612 = vpop.f32.mrb[0].mxu0
      %v1613 = vadd.f32 0.0, %v1612
      %v1614 = vpop.f32.mrb[0].mxu0
      %v1615 = vadd.f32 0.0, %v1614
      %v1616 = vpop.f32.mrb[0].mxu0
      %v1617 = vadd.f32 0.0, %v1616
      %v1618 = vpop.f32.mrb[0].mxu0
      %v1619 = vadd.f32 0.0, %v1618
      %1620 = vmatprep.mubr.bf16.mxu0 0
      %1621 = vmatmul.mubr.bf16.gmra.mrb[0].mxu0 %v567
      %v1622 = vpop.f32.mrb[0].mxu0
      %v1623 = vadd.f32 0.0, %v1622
      %v1624 = vpop.f32.mrb[0].mxu0
      %v1625 = vadd.f32 0.0, %v1624
      %v1626 = vpop.f32.mrb[0].mxu0
      %v1627 = vadd.f32 0.0, %v1626
      %v1628 = vpop.f32.mrb[0].mxu0
      %v1629 = vadd.f32 0.0, %v1628
      %1630 = vmatprep.mubr.bf16.mxu0 0
      %1631 = vmatmul.mubr.bf16.gmra.mrb[0].mxu0 %v568
      %v1632 = vpop.f32.mrb[0].mxu0
      %v1633 = vadd.f32 0.0, %v1632
      %v1634 = vpop.f32.mrb[0].mxu0
      %v1635 = vadd.f32 0.0, %v1634
      %v1636 = vpop.f32.mrb[0].mxu0
      %v1637 = vadd.f32 0.0, %v1636
      %v1638 = vpop.f32.mrb[0].mxu0
      %v1639 = vadd.f32 0.0, %v1638
      %1640 = vmatprep.mubr.bf16.mxu0 0
      %1641 = vmatmul.mubr.bf16.gmra.mrb[0].mxu0 %v569
      %v1642 = vpop.f32.mrb[0].mxu0
      %v1643 = vadd.f32 0.0, %v1642
      %v1644 = vpop.f32.mrb[0].mxu0
      %v1645 = vadd.f32 0.0, %v1644
      %v1646 = vpop.f32.mrb[0].mxu0
      %v1647 = vadd.f32 0.0, %v1646
      %v1648 = vpop.f32.mrb[0].mxu0
      %v1649 = vadd.f32 0.0, %v1648
      %1650 = vmatprep.mubr.bf16.mxu0 0
      %1651 = vmatmul.mubr.bf16.gmra.mrb[0].mxu0 %v570
      %v1652 = vpop.f32.mrb[0].mxu0
      %v1653 = vadd.f32 0.0, %v1652
      %v1654 = vpop.f32.mrb[0].mxu0
      %v1655 = vadd.f32 0.0, %v1654
      %v1656 = vpop.f32.mrb[0].mxu0
      %v1657 = vadd.f32 0.0, %v1656
      %v1658 = vpop.f32.mrb[0].mxu0
      %v1659 = vadd.f32 0.0, %v1658
      %1660 = vdwg.mxu0
      %1661 = vmatprep.subr.bf16.mxu0 %v1008
      %1662 = vmatpush1.bf16.msra.mxu0 %v1007
      %1663 = vmatprep.subr.bf16.mxu0 %v1025
      %1664 = vmatpush1.bf16.msra.mxu0 %v1024
      %1665 = vmatprep.subr.bf16.mxu0 %v1042
      %1666 = vmatpush1.bf16.msra.mxu0 %v1041
      %1667 = vmatprep.subr.bf16.mxu0 %v1059
      %1668 = vmatpush1.bf16.msra.mxu0 %v1058
      %1669 = vmatprep.subr.bf16.mxu0 %v1076
      %1670 = vmatpush1.bf16.msra.mxu0 %v1075
      %1671 = vmatprep.subr.bf16.mxu0 %v1093
      %1672 = vmatpush1.bf16.msra.mxu0 %v1092
      %1673 = vmatprep.subr.bf16.mxu0 %v1110
      %1674 = vmatpush1.bf16.msra.mxu0 %v1109
      %1675 = vmatprep.subr.bf16.mxu0 %v1127
      %1676 = vmatpush1.bf16.msra.mxu0 %v1126
      %1677 = vmatprep.subr.bf16.mxu0 0
      %1678 = vmatpush1.bf16.msra.mxu0 0
      %1679 = vmatprep.subr.bf16.mxu0 0
      %1680 = vmatpush1.bf16.msra.mxu0 0
      %1681 = vmatprep.subr.bf16.mxu0 0
      %1682 = vmatpush1.bf16.msra.mxu0 0
      %1683 = vmatprep.subr.bf16.mxu0 0
      %1684 = vmatpush1.bf16.msra.mxu0 0
      %1685 = vmatprep.subr.bf16.mxu0 0
      %1686 = vmatpush1.bf16.msra.mxu0 0
      %1687 = vmatprep.subr.bf16.mxu0 0
      %1688 = vmatpush1.bf16.msra.mxu0 0
      %1689 = vmatprep.subr.bf16.mxu0 0
      %1690 = vmatpush1.bf16.msra.mxu0 0
      %1691 = vmatprep.subr.bf16.mxu0 0
      %1692 = vmatpush1.bf16.msra.mxu0 0
      %1693 = vmatprep.mubr.bf16.mxu0 0
      %1694 = vmatmul.mubr.bf16.gmra.mrb[0].mxu0 %v555
      %v1695 = vpop.f32.mrb[0].mxu0
      %v1696 = vadd.f32 0.0, %v1695
      %v1697 = vpop.f32.mrb[0].mxu0
      %v1698 = vadd.f32 0.0, %v1697
      %v1699 = vpop.f32.mrb[0].mxu0
      %v1700 = vadd.f32 0.0, %v1699
      %v1701 = vpop.f32.mrb[0].mxu0
      %v1702 = vadd.f32 0.0, %v1701
      %1703 = vmatprep.mubr.bf16.mxu0 0
      %1704 = vmatmul.mubr.bf16.gmra.mrb[0].mxu0 %v556
      %v1705 = vpop.f32.mrb[0].mxu0
      %v1706 = vadd.f32 0.0, %v1705
      %v1707 = vpop.f32.mrb[0].mxu0
      %v1708 = vadd.f32 0.0, %v1707
      %v1709 = vpop.f32.mrb[0].mxu0
      %v1710 = vadd.f32 0.0, %v1709
      %v1711 = vpop.f32.mrb[0].mxu0
      %v1712 = vadd.f32 0.0, %v1711
      %1713 = vmatprep.mubr.bf16.mxu0 0
      %1714 = vmatmul.mubr.bf16.gmra.mrb[0].mxu0 %v557
      %v1715 = vpop.f32.mrb[0].mxu0
      %v1716 = vadd.f32 0.0, %v1715
      %v1717 = vpop.f32.mrb[0].mxu0
      %v1718 = vadd.f32 0.0, %v1717
      %v1719 = vpop.f32.mrb[0].mxu0
      %v1720 = vadd.f32 0.0, %v1719
      %v1721 = vpop.f32.mrb[0].mxu0
      %v1722 = vadd.f32 0.0, %v1721
      %1723 = vmatprep.mubr.bf16.mxu0 0
      %1724 = vmatmul.mubr.bf16.gmra.mrb[0].mxu0 %v558
      %v1725 = vpop.f32.mrb[0].mxu0
      %v1726 = vadd.f32 0.0, %v1725
      %v1727 = vpop.f32.mrb[0].mxu0
      %v1728 = vadd.f32 0.0, %v1727
      %v1729 = vpop.f32.mrb[0].mxu0
      %v1730 = vadd.f32 0.0, %v1729
      %v1731 = vpop.f32.mrb[0].mxu0
      %v1732 = vadd.f32 0.0, %v1731
      %1733 = vmatprep.mubr.bf16.mxu0 0
      %1734 = vmatmul.mubr.bf16.gmra.mrb[0].mxu0 %v559
      %v1735 = vpop.f32.mrb[0].mxu0
      %v1736 = vadd.f32 0.0, %v1735
      %v1737 = vpop.f32.mrb[0].mxu0
      %v1738 = vadd.f32 0.0, %v1737
      %v1739 = vpop.f32.mrb[0].mxu0
      %v1740 = vadd.f32 0.0, %v1739
      %v1741 = vpop.f32.mrb[0].mxu0
      %v1742 = vadd.f32 0.0, %v1741
      %1743 = vmatprep.mubr.bf16.mxu0 0
      %1744 = vmatmul.mubr.bf16.gmra.mrb[0].mxu0 %v560
      %v1745 = vpop.f32.mrb[0].mxu0
      %v1746 = vadd.f32 0.0, %v1745
      %v1747 = vpop.f32.mrb[0].mxu0
      %v1748 = vadd.f32 0.0, %v1747
      %v1749 = vpop.f32.mrb[0].mxu0
      %v1750 = vadd.f32 0.0, %v1749
      %v1751 = vpop.f32.mrb[0].mxu0
      %v1752 = vadd.f32 0.0, %v1751
      %1753 = vmatprep.mubr.bf16.mxu0 0
      %1754 = vmatmul.mubr.bf16.gmra.mrb[0].mxu0 %v561
      %v1755 = vpop.f32.mrb[0].mxu0
      %v1756 = vadd.f32 0.0, %v1755
      %v1757 = vpop.f32.mrb[0].mxu0
      %v1758 = vadd.f32 0.0, %v1757
      %v1759 = vpop.f32.mrb[0].mxu0
      %v1760 = vadd.f32 0.0, %v1759
      %v1761 = vpop.f32.mrb[0].mxu0
      %v1762 = vadd.f32 0.0, %v1761
      %1763 = vmatprep.mubr.bf16.mxu0 0
      %1764 = vmatmul.mubr.bf16.gmra.mrb[0].mxu0 %v562
      %v1765 = vpop.f32.mrb[0].mxu0
      %v1766 = vadd.f32 0.0, %v1765
      %v1767 = vpop.f32.mrb[0].mxu0
      %v1768 = vadd.f32 0.0, %v1767
      %v1769 = vpop.f32.mrb[0].mxu0
      %v1770 = vadd.f32 0.0, %v1769
      %v1771 = vpop.f32.mrb[0].mxu0
      %v1772 = vadd.f32 0.0, %v1771
      %1773 = vmatprep.mubr.bf16.mxu0 0
      %1774 = vmatmul.mubr.bf16.gmra.mrb[0].mxu0 %v563
      %v1775 = vpop.f32.mrb[0].mxu0
      %v1776 = vadd.f32 0.0, %v1775
      %v1777 = vpop.f32.mrb[0].mxu0
      %v1778 = vadd.f32 0.0, %v1777
      %v1779 = vpop.f32.mrb[0].mxu0
      %v1780 = vadd.f32 0.0, %v1779
      %v1781 = vpop.f32.mrb[0].mxu0
      %v1782 = vadd.f32 0.0, %v1781
      %1783 = vmatprep.mubr.bf16.mxu0 0
      %1784 = vmatmul.mubr.bf16.gmra.mrb[0].mxu0 %v564
      %v1785 = vpop.f32.mrb[0].mxu0
      %v1786 = vadd.f32 0.0, %v1785
      %v1787 = vpop.f32.mrb[0].mxu0
      %v1788 = vadd.f32 0.0, %v1787
      %v1789 = vpop.f32.mrb[0].mxu0
      %v1790 = vadd.f32 0.0, %v1789
      %v1791 = vpop.f32.mrb[0].mxu0
      %v1792 = vadd.f32 0.0, %v1791
      %1793 = vmatprep.mubr.bf16.mxu0 0
      %1794 = vmatmul.mubr.bf16.gmra.mrb[0].mxu0 %v565
      %v1795 = vpop.f32.mrb[0].mxu0
      %v1796 = vadd.f32 0.0, %v1795
      %v1797 = vpop.f32.mrb[0].mxu0
      %v1798 = vadd.f32 0.0, %v1797
      %v1799 = vpop.f32.mrb[0].mxu0
      %v1800 = vadd.f32 0.0, %v1799
      %v1801 = vpop.f32.mrb[0].mxu0
      %v1802 = vadd.f32 0.0, %v1801
      %1803 = vmatprep.mubr.bf16.mxu0 0
      %1804 = vmatmul.mubr.bf16.gmra.mrb[0].mxu0 %v566
      %v1805 = vpop.f32.mrb[0].mxu0
      %v1806 = vadd.f32 0.0, %v1805
      %v1807 = vpop.f32.mrb[0].mxu0
      %v1808 = vadd.f32 0.0, %v1807
      %v1809 = vpop.f32.mrb[0].mxu0
      %v1810 = vadd.f32 0.0, %v1809
      %v1811 = vpop.f32.mrb[0].mxu0
      %v1812 = vadd.f32 0.0, %v1811
      %1813 = vmatprep.mubr.bf16.mxu0 0
      %1814 = vmatmul.mubr.bf16.gmra.mrb[0].mxu0 %v567
      %v1815 = vpop.f32.mrb[0].mxu0
      %v1816 = vadd.f32 0.0, %v1815
      %v1817 = vpop.f32.mrb[0].mxu0
      %v1818 = vadd.f32 0.0, %v1817
      %v1819 = vpop.f32.mrb[0].mxu0
      %v1820 = vadd.f32 0.0, %v1819
      %v1821 = vpop.f32.mrb[0].mxu0
      %v1822 = vadd.f32 0.0, %v1821
      %1823 = vmatprep.mubr.bf16.mxu0 0
      %1824 = vmatmul.mubr.bf16.gmra.mrb[0].mxu0 %v568
      %v1825 = vpop.f32.mrb[0].mxu0
      %v1826 = vadd.f32 0.0, %v1825
      %v1827 = vpop.f32.mrb[0].mxu0
      %v1828 = vadd.f32 0.0, %v1827
      %v1829 = vpop.f32.mrb[0].mxu0
      %v1830 = vadd.f32 0.0, %v1829
      %v1831 = vpop.f32.mrb[0].mxu0
      %v1832 = vadd.f32 0.0, %v1831
      %1833 = vmatprep.mubr.bf16.mxu0 0
      %1834 = vmatmul.mubr.bf16.gmra.mrb[0].mxu0 %v569
      %v1835 = vpop.f32.mrb[0].mxu0
      %v1836 = vadd.f32 0.0, %v1835
      %v1837 = vpop.f32.mrb[0].mxu0
      %v1838 = vadd.f32 0.0, %v1837
      %v1839 = vpop.f32.mrb[0].mxu0
      %v1840 = vadd.f32 0.0, %v1839
      %v1841 = vpop.f32.mrb[0].mxu0
      %v1842 = vadd.f32 0.0, %v1841
      %1843 = vmatprep.mubr.bf16.mxu0 0
      %1844 = vmatmul.mubr.bf16.gmra.mrb[0].mxu0 %v570
      %v1845 = vpop.f32.mrb[0].mxu0
      %v1846 = vadd.f32 0.0, %v1845
      %v1847 = vpop.f32.mrb[0].mxu0
      %v1848 = vadd.f32 0.0, %v1847
      %v1849 = vpop.f32.mrb[0].mxu0
      %v1850 = vadd.f32 0.0, %v1849
      %v1851 = vpop.f32.mrb[0].mxu0
      %v1852 = vadd.f32 0.0, %v1851
      %1853 = vdwg.mxu0
      %1854 = vmatprep.subr.bf16.mxu0 %v1010
      %1855 = vmatpush1.bf16.msra.mxu0 %v1009
      %1856 = vmatprep.subr.bf16.mxu0 %v1027
      %1857 = vmatpush1.bf16.msra.mxu0 %v1026
      %1858 = vmatprep.subr.bf16.mxu0 %v1044
      %1859 = vmatpush1.bf16.msra.mxu0 %v1043
      %1860 = vmatprep.subr.bf16.mxu0 %v1061
      %1861 = vmatpush1.bf16.msra.mxu0 %v1060
      %1862 = vmatprep.subr.bf16.mxu0 %v1078
      %1863 = vmatpush1.bf16.msra.mxu0 %v1077
      %1864 = vmatprep.subr.bf16.mxu0 %v1095
      %1865 = vmatpush1.bf16.msra.mxu0 %v1094
      %1866 = vmatprep.subr.bf16.mxu0 %v1112
      %1867 = vmatpush1.bf16.msra.mxu0 %v1111
      %1868 = vmatprep.subr.bf16.mxu0 %v1129
      %1869 = vmatpush1.bf16.msra.mxu0 %v1128
      %1870 = vmatprep.subr.bf16.mxu0 0
      %1871 = vmatpush1.bf16.msra.mxu0 0
      %1872 = vmatprep.subr.bf16.mxu0 0
      %1873 = vmatpush1.bf16.msra.mxu0 0
      %1874 = vmatprep.subr.bf16.mxu0 0
      %1875 = vmatpush1.bf16.msra.mxu0 0
      %1876 = vmatprep.subr.bf16.mxu0 0
      %1877 = vmatpush1.bf16.msra.mxu0 0
      %1878 = vmatprep.subr.bf16.mxu0 0
      %1879 = vmatpush1.bf16.msra.mxu0 0
      %1880 = vmatprep.subr.bf16.mxu0 0
      %1881 = vmatpush1.bf16.msra.mxu0 0
      %1882 = vmatprep.subr.bf16.mxu0 0
      %1883 = vmatpush1.bf16.msra.mxu0 0
      %1884 = vmatprep.subr.bf16.mxu0 0
      %1885 = vmatpush1.bf16.msra.mxu0 0
      %1886 = vmatprep.mubr.bf16.mxu0 0
      %1887 = vmatmul.mubr.bf16.gmra.mrb[0].mxu0 %v555
      %v1888 = vpop.f32.mrb[0].mxu0
      %v1889 = vadd.f32 0.0, %v1888
      %v1890 = vpop.f32.mrb[0].mxu0
      %v1891 = vadd.f32 0.0, %v1890
      %v1892 = vpop.f32.mrb[0].mxu0
      %v1893 = vadd.f32 0.0, %v1892
      %v1894 = vpop.f32.mrb[0].mxu0
      %v1895 = vadd.f32 0.0, %v1894
      %1896 = vmatprep.mubr.bf16.mxu0 0
      %1897 = vmatmul.mubr.bf16.gmra.mrb[0].mxu0 %v556
      %v1898 = vpop.f32.mrb[0].mxu0
      %v1899 = vadd.f32 0.0, %v1898
      %v1900 = vpop.f32.mrb[0].mxu0
      %v1901 = vadd.f32 0.0, %v1900
      %v1902 = vpop.f32.mrb[0].mxu0
      %v1903 = vadd.f32 0.0, %v1902
      %v1904 = vpop.f32.mrb[0].mxu0
      %v1905 = vadd.f32 0.0, %v1904
      %1906 = vmatprep.mubr.bf16.mxu0 0
      %1907 = vmatmul.mubr.bf16.gmra.mrb[0].mxu0 %v557
      %v1908 = vpop.f32.mrb[0].mxu0
      %v1909 = vadd.f32 0.0, %v1908
      %v1910 = vpop.f32.mrb[0].mxu0
      %v1911 = vadd.f32 0.0, %v1910
      %v1912 = vpop.f32.mrb[0].mxu0
      %v1913 = vadd.f32 0.0, %v1912
      %v1914 = vpop.f32.mrb[0].mxu0
      %v1915 = vadd.f32 0.0, %v1914
      %1916 = vmatprep.mubr.bf16.mxu0 0
      %1917 = vmatmul.mubr.bf16.gmra.mrb[0].mxu0 %v558
      %v1918 = vpop.f32.mrb[0].mxu0
      %v1919 = vadd.f32 0.0, %v1918
      %v1920 = vpop.f32.mrb[0].mxu0
      %v1921 = vadd.f32 0.0, %v1920
      %v1922 = vpop.f32.mrb[0].mxu0
      %v1923 = vadd.f32 0.0, %v1922
      %v1924 = vpop.f32.mrb[0].mxu0
      %v1925 = vadd.f32 0.0, %v1924
      %1926 = vmatprep.mubr.bf16.mxu0 0
      %1927 = vmatmul.mubr.bf16.gmra.mrb[0].mxu0 %v559
      %v1928 = vpop.f32.mrb[0].mxu0
      %v1929 = vadd.f32 0.0, %v1928
      %v1930 = vpop.f32.mrb[0].mxu0
      %v1931 = vadd.f32 0.0, %v1930
      %v1932 = vpop.f32.mrb[0].mxu0
      %v1933 = vadd.f32 0.0, %v1932
      %v1934 = vpop.f32.mrb[0].mxu0
      %v1935 = vadd.f32 0.0, %v1934
      %1936 = vmatprep.mubr.bf16.mxu0 0
      %1937 = vmatmul.mubr.bf16.gmra.mrb[0].mxu0 %v560
      %v1938 = vpop.f32.mrb[0].mxu0
      %v1939 = vadd.f32 0.0, %v1938
      %v1940 = vpop.f32.mrb[0].mxu0
      %v1941 = vadd.f32 0.0, %v1940
      %v1942 = vpop.f32.mrb[0].mxu0
      %v1943 = vadd.f32 0.0, %v1942
      %v1944 = vpop.f32.mrb[0].mxu0
      %v1945 = vadd.f32 0.0, %v1944
      %1946 = vmatprep.mubr.bf16.mxu0 0
      %1947 = vmatmul.mubr.bf16.gmra.mrb[0].mxu0 %v561
      %v1948 = vpop.f32.mrb[0].mxu0
      %v1949 = vadd.f32 0.0, %v1948
      %v1950 = vpop.f32.mrb[0].mxu0
      %v1951 = vadd.f32 0.0, %v1950
      %v1952 = vpop.f32.mrb[0].mxu0
      %v1953 = vadd.f32 0.0, %v1952
      %v1954 = vpop.f32.mrb[0].mxu0
      %v1955 = vadd.f32 0.0, %v1954
      %1956 = vmatprep.mubr.bf16.mxu0 0
      %1957 = vmatmul.mubr.bf16.gmra.mrb[0].mxu0 %v562
      %v1958 = vpop.f32.mrb[0].mxu0
      %v1959 = vadd.f32 0.0, %v1958
      %v1960 = vpop.f32.mrb[0].mxu0
      %v1961 = vadd.f32 0.0, %v1960
      %v1962 = vpop.f32.mrb[0].mxu0
      %v1963 = vadd.f32 0.0, %v1962
      %v1964 = vpop.f32.mrb[0].mxu0
      %v1965 = vadd.f32 0.0, %v1964
      %1966 = vmatprep.mubr.bf16.mxu0 0
      %1967 = vmatmul.mubr.bf16.gmra.mrb[0].mxu0 %v563
      %v1968 = vpop.f32.mrb[0].mxu0
      %v1969 = vadd.f32 0.0, %v1968
      %v1970 = vpop.f32.mrb[0].mxu0
      %v1971 = vadd.f32 0.0, %v1970
      %v1972 = vpop.f32.mrb[0].mxu0
      %v1973 = vadd.f32 0.0, %v1972
      %v1974 = vpop.f32.mrb[0].mxu0
      %v1975 = vadd.f32 0.0, %v1974
      %1976 = vmatprep.mubr.bf16.mxu0 0
      %1977 = vmatmul.mubr.bf16.gmra.mrb[0].mxu0 %v564
      %v1978 = vpop.f32.mrb[0].mxu0
      %v1979 = vadd.f32 0.0, %v1978
      %v1980 = vpop.f32.mrb[0].mxu0
      %v1981 = vadd.f32 0.0, %v1980
      %v1982 = vpop.f32.mrb[0].mxu0
      %v1983 = vadd.f32 0.0, %v1982
      %v1984 = vpop.f32.mrb[0].mxu0
      %v1985 = vadd.f32 0.0, %v1984
      %1986 = vmatprep.mubr.bf16.mxu0 0
      %1987 = vmatmul.mubr.bf16.gmra.mrb[0].mxu0 %v565
      %v1988 = vpop.f32.mrb[0].mxu0
      %v1989 = vadd.f32 0.0, %v1988
      %v1990 = vpop.f32.mrb[0].mxu0
      %v1991 = vadd.f32 0.0, %v1990
      %v1992 = vpop.f32.mrb[0].mxu0
      %v1993 = vadd.f32 0.0, %v1992
      %v1994 = vpop.f32.mrb[0].mxu0
      %v1995 = vadd.f32 0.0, %v1994
      %1996 = vmatprep.mubr.bf16.mxu0 0
      %1997 = vmatmul.mubr.bf16.gmra.mrb[0].mxu0 %v566
      %v1998 = vpop.f32.mrb[0].mxu0
      %v1999 = vadd.f32 0.0, %v1998
      %v2000 = vpop.f32.mrb[0].mxu0
      %v2001 = vadd.f32 0.0, %v2000
      %v2002 = vpop.f32.mrb[0].mxu0
      %v2003 = vadd.f32 0.0, %v2002
      %v2004 = vpop.f32.mrb[0].mxu0
      %v2005 = vadd.f32 0.0, %v2004
      %2006 = vmatprep.mubr.bf16.mxu0 0
      %2007 = vmatmul.mubr.bf16.gmra.mrb[0].mxu0 %v567
      %v2008 = vpop.f32.mrb[0].mxu0
      %v2009 = vadd.f32 0.0, %v2008
      %v2010 = vpop.f32.mrb[0].mxu0
      %v2011 = vadd.f32 0.0, %v2010
      %v2012 = vpop.f32.mrb[0].mxu0
      %v2013 = vadd.f32 0.0, %v2012
      %v2014 = vpop.f32.mrb[0].mxu0
      %v2015 = vadd.f32 0.0, %v2014
      %2016 = vmatprep.mubr.bf16.mxu0 0
      %2017 = vmatmul.mubr.bf16.gmra.mrb[0].mxu0 %v568
      %v2018 = vpop.f32.mrb[0].mxu0
      %v2019 = vadd.f32 0.0, %v2018
      %v2020 = vpop.f32.mrb[0].mxu0
      %v2021 = vadd.f32 0.0, %v2020
      %v2022 = vpop.f32.mrb[0].mxu0
      %v2023 = vadd.f32 0.0, %v2022
      %v2024 = vpop.f32.mrb[0].mxu0
      %v2025 = vadd.f32 0.0, %v2024
      %2026 = vmatprep.mubr.bf16.mxu0 0
      %2027 = vmatmul.mubr.bf16.gmra.mrb[0].mxu0 %v569
      %v2028 = vpop.f32.mrb[0].mxu0
      %v2029 = vadd.f32 0.0, %v2028
      %v2030 = vpop.f32.mrb[0].mxu0
      %v2031 = vadd.f32 0.0, %v2030
      %v2032 = vpop.f32.mrb[0].mxu0
      %v2033 = vadd.f32 0.0, %v2032
      %v2034 = vpop.f32.mrb[0].mxu0
      %v2035 = vadd.f32 0.0, %v2034
      %2036 = vmatprep.mubr.bf16.mxu0 0
      %2037 = vmatmul.mubr.bf16.gmra.mrb[0].mxu0 %v570
      %v2038 = vpop.f32.mrb[0].mxu0
      %v2039 = vadd.f32 0.0, %v2038
      %v2040 = vpop.f32.mrb[0].mxu0
      %v2041 = vadd.f32 0.0, %v2040
      %v2042 = vpop.f32.mrb[0].mxu0
      %v2043 = vadd.f32 0.0, %v2042
      %v2044 = vpop.f32.mrb[0].mxu0
      %v2045 = vadd.f32 0.0, %v2044
      %2046 = vdwg.mxu0
      %2047 = vmatprep.subr.bf16.mxu0 %v1012
      %2048 = vmatpush1.bf16.msra.mxu0 %v1011
      %2049 = vmatprep.subr.bf16.mxu0 %v1029
      %2050 = vmatpush1.bf16.msra.mxu0 %v1028
      %2051 = vmatprep.subr.bf16.mxu0 %v1046
      %2052 = vmatpush1.bf16.msra.mxu0 %v1045
      %2053 = vmatprep.subr.bf16.mxu0 %v1063
      %2054 = vmatpush1.bf16.msra.mxu0 %v1062
      %2055 = vmatprep.subr.bf16.mxu0 %v1080
      %2056 = vmatpush1.bf16.msra.mxu0 %v1079
      %2057 = vmatprep.subr.bf16.mxu0 %v1097
      %2058 = vmatpush1.bf16.msra.mxu0 %v1096
      %2059 = vmatprep.subr.bf16.mxu0 %v1114
      %2060 = vmatpush1.bf16.msra.mxu0 %v1113
      %2061 = vmatprep.subr.bf16.mxu0 %v1131
      %2062 = vmatpush1.bf16.msra.mxu0 %v1130
      %2063 = vmatprep.subr.bf16.mxu0 0
      %2064 = vmatpush1.bf16.msra.mxu0 0
      %2065 = vmatprep.subr.bf16.mxu0 0
      %2066 = vmatpush1.bf16.msra.mxu0 0
      %2067 = vmatprep.subr.bf16.mxu0 0
      %2068 = vmatpush1.bf16.msra.mxu0 0
      %2069 = vmatprep.subr.bf16.mxu0 0
      %2070 = vmatpush1.bf16.msra.mxu0 0
      %2071 = vmatprep.subr.bf16.mxu0 0
      %2072 = vmatpush1.bf16.msra.mxu0 0
      %2073 = vmatprep.subr.bf16.mxu0 0
      %2074 = vmatpush1.bf16.msra.mxu0 0
      %2075 = vmatprep.subr.bf16.mxu0 0
      %2076 = vmatpush1.bf16.msra.mxu0 0
      %2077 = vmatprep.subr.bf16.mxu0 0
      %2078 = vmatpush1.bf16.msra.mxu0 0
      %2079 = vmatprep.mubr.bf16.mxu0 0
      %2080 = vmatmul.mubr.bf16.gmra.mrb[0].mxu0 %v555
      %v2081 = vpop.f32.mrb[0].mxu0
      %v2082 = vadd.f32 0.0, %v2081
      %v2083 = vpop.f32.mrb[0].mxu0
      %v2084 = vadd.f32 0.0, %v2083
      %v2085 = vpop.f32.mrb[0].mxu0
      %v2086 = vadd.f32 0.0, %v2085
      %v2087 = vpop.f32.mrb[0].mxu0
      %v2088 = vadd.f32 0.0, %v2087
      %2089 = vmatprep.mubr.bf16.mxu0 0
      %2090 = vmatmul.mubr.bf16.gmra.mrb[0].mxu0 %v556
      %v2091 = vpop.f32.mrb[0].mxu0
      %v2092 = vadd.f32 0.0, %v2091
      %v2093 = vpop.f32.mrb[0].mxu0
      %v2094 = vadd.f32 0.0, %v2093
      %v2095 = vpop.f32.mrb[0].mxu0
      %v2096 = vadd.f32 0.0, %v2095
      %v2097 = vpop.f32.mrb[0].mxu0
      %v2098 = vadd.f32 0.0, %v2097
      %2099 = vmatprep.mubr.bf16.mxu0 0
      %2100 = vmatmul.mubr.bf16.gmra.mrb[0].mxu0 %v557
      %v2101 = vpop.f32.mrb[0].mxu0
      %v2102 = vadd.f32 0.0, %v2101
      %v2103 = vpop.f32.mrb[0].mxu0
      %v2104 = vadd.f32 0.0, %v2103
      %v2105 = vpop.f32.mrb[0].mxu0
      %v2106 = vadd.f32 0.0, %v2105
      %v2107 = vpop.f32.mrb[0].mxu0
      %v2108 = vadd.f32 0.0, %v2107
      %2109 = vmatprep.mubr.bf16.mxu0 0
      %2110 = vmatmul.mubr.bf16.gmra.mrb[0].mxu0 %v558
      %v2111 = vpop.f32.mrb[0].mxu0
      %v2112 = vadd.f32 0.0, %v2111
      %v2113 = vpop.f32.mrb[0].mxu0
      %v2114 = vadd.f32 0.0, %v2113
      %v2115 = vpop.f32.mrb[0].mxu0
      %v2116 = vadd.f32 0.0, %v2115
      %v2117 = vpop.f32.mrb[0].mxu0
      %v2118 = vadd.f32 0.0, %v2117
      %2119 = vmatprep.mubr.bf16.mxu0 0
      %2120 = vmatmul.mubr.bf16.gmra.mrb[0].mxu0 %v559
      %v2121 = vpop.f32.mrb[0].mxu0
      %v2122 = vadd.f32 0.0, %v2121
      %v2123 = vpop.f32.mrb[0].mxu0
      %v2124 = vadd.f32 0.0, %v2123
      %v2125 = vpop.f32.mrb[0].mxu0
      %v2126 = vadd.f32 0.0, %v2125
      %v2127 = vpop.f32.mrb[0].mxu0
      %v2128 = vadd.f32 0.0, %v2127
      %2129 = vmatprep.mubr.bf16.mxu0 0
      %2130 = vmatmul.mubr.bf16.gmra.mrb[0].mxu0 %v560
      %v2131 = vpop.f32.mrb[0].mxu0
      %v2132 = vadd.f32 0.0, %v2131
      %v2133 = vpop.f32.mrb[0].mxu0
      %v2134 = vadd.f32 0.0, %v2133
      %v2135 = vpop.f32.mrb[0].mxu0
      %v2136 = vadd.f32 0.0, %v2135
      %v2137 = vpop.f32.mrb[0].mxu0
      %v2138 = vadd.f32 0.0, %v2137
      %2139 = vmatprep.mubr.bf16.mxu0 0
      %2140 = vmatmul.mubr.bf16.gmra.mrb[0].mxu0 %v561
      %v2141 = vpop.f32.mrb[0].mxu0
      %v2142 = vadd.f32 0.0, %v2141
      %v2143 = vpop.f32.mrb[0].mxu0
      %v2144 = vadd.f32 0.0, %v2143
      %v2145 = vpop.f32.mrb[0].mxu0
      %v2146 = vadd.f32 0.0, %v2145
      %v2147 = vpop.f32.mrb[0].mxu0
      %v2148 = vadd.f32 0.0, %v2147
      %2149 = vmatprep.mubr.bf16.mxu0 0
      %2150 = vmatmul.mubr.bf16.gmra.mrb[0].mxu0 %v562
      %v2151 = vpop.f32.mrb[0].mxu0
      %v2152 = vadd.f32 0.0, %v2151
      %v2153 = vpop.f32.mrb[0].mxu0
      %v2154 = vadd.f32 0.0, %v2153
      %v2155 = vpop.f32.mrb[0].mxu0
      %v2156 = vadd.f32 0.0, %v2155
      %v2157 = vpop.f32.mrb[0].mxu0
      %v2158 = vadd.f32 0.0, %v2157
      %2159 = vmatprep.mubr.bf16.mxu0 0
      %2160 = vmatmul.mubr.bf16.gmra.mrb[0].mxu0 %v563
      %v2161 = vpop.f32.mrb[0].mxu0
      %v2162 = vadd.f32 0.0, %v2161
      %v2163 = vpop.f32.mrb[0].mxu0
      %v2164 = vadd.f32 0.0, %v2163
      %v2165 = vpop.f32.mrb[0].mxu0
      %v2166 = vadd.f32 0.0, %v2165
      %v2167 = vpop.f32.mrb[0].mxu0
      %v2168 = vadd.f32 0.0, %v2167
      %2169 = vmatprep.mubr.bf16.mxu0 0
      %2170 = vmatmul.mubr.bf16.gmra.mrb[0].mxu0 %v564
      %v2171 = vpop.f32.mrb[0].mxu0
      %v2172 = vadd.f32 0.0, %v2171
      %v2173 = vpop.f32.mrb[0].mxu0
      %v2174 = vadd.f32 0.0, %v2173
      %v2175 = vpop.f32.mrb[0].mxu0
      %v2176 = vadd.f32 0.0, %v2175
      %v2177 = vpop.f32.mrb[0].mxu0
      %v2178 = vadd.f32 0.0, %v2177
      %2179 = vmatprep.mubr.bf16.mxu0 0
      %2180 = vmatmul.mubr.bf16.gmra.mrb[0].mxu0 %v565
      %v2181 = vpop.f32.mrb[0].mxu0
      %v2182 = vadd.f32 0.0, %v2181
      %v2183 = vpop.f32.mrb[0].mxu0
      %v2184 = vadd.f32 0.0, %v2183
      %v2185 = vpop.f32.mrb[0].mxu0
      %v2186 = vadd.f32 0.0, %v2185
      %v2187 = vpop.f32.mrb[0].mxu0
      %v2188 = vadd.f32 0.0, %v2187
      %2189 = vmatprep.mubr.bf16.mxu0 0
      %2190 = vmatmul.mubr.bf16.gmra.mrb[0].mxu0 %v566
      %v2191 = vpop.f32.mrb[0].mxu0
      %v2192 = vadd.f32 0.0, %v2191
      %v2193 = vpop.f32.mrb[0].mxu0
      %v2194 = vadd.f32 0.0, %v2193
      %v2195 = vpop.f32.mrb[0].mxu0
      %v2196 = vadd.f32 0.0, %v2195
      %v2197 = vpop.f32.mrb[0].mxu0
      %v2198 = vadd.f32 0.0, %v2197
      %2199 = vmatprep.mubr.bf16.mxu0 0
      %2200 = vmatmul.mubr.bf16.gmra.mrb[0].mxu0 %v567
      %v2201 = vpop.f32.mrb[0].mxu0
      %v2202 = vadd.f32 0.0, %v2201
      %v2203 = vpop.f32.mrb[0].mxu0
      %v2204 = vadd.f32 0.0, %v2203
      %v2205 = vpop.f32.mrb[0].mxu0
      %v2206 = vadd.f32 0.0, %v2205
      %v2207 = vpop.f32.mrb[0].mxu0
      %v2208 = vadd.f32 0.0, %v2207
      %2209 = vmatprep.mubr.bf16.mxu0 0
      %2210 = vmatmul.mubr.bf16.gmra.mrb[0].mxu0 %v568
      %v2211 = vpop.f32.mrb[0].mxu0
      %v2212 = vadd.f32 0.0, %v2211
      %v2213 = vpop.f32.mrb[0].mxu0
      %v2214 = vadd.f32 0.0, %v2213
      %v2215 = vpop.f32.mrb[0].mxu0
      %v2216 = vadd.f32 0.0, %v2215
      %v2217 = vpop.f32.mrb[0].mxu0
      %v2218 = vadd.f32 0.0, %v2217
      %2219 = vmatprep.mubr.bf16.mxu0 0
      %2220 = vmatmul.mubr.bf16.gmra.mrb[0].mxu0 %v569
      %v2221 = vpop.f32.mrb[0].mxu0
      %v2222 = vadd.f32 0.0, %v2221
      %v2223 = vpop.f32.mrb[0].mxu0
      %v2224 = vadd.f32 0.0, %v2223
      %v2225 = vpop.f32.mrb[0].mxu0
      %v2226 = vadd.f32 0.0, %v2225
      %v2227 = vpop.f32.mrb[0].mxu0
      %v2228 = vadd.f32 0.0, %v2227
      %2229 = vmatprep.mubr.bf16.mxu0 0
      %2230 = vmatmul.mubr.bf16.gmra.mrb[0].mxu0 %v570
      %v2231 = vpop.f32.mrb[0].mxu0
      %v2232 = vadd.f32 0.0, %v2231
      %v2233 = vpop.f32.mrb[0].mxu0
      %v2234 = vadd.f32 0.0, %v2233
      %v2235 = vpop.f32.mrb[0].mxu0
      %v2236 = vadd.f32 0.0, %v2235
      %v2237 = vpop.f32.mrb[0].mxu0
      %v2238 = vadd.f32 0.0, %v2237
      %2239 = vdwg.mxu0
      %2240 = vmatprep.subr.bf16.mxu0 %v1014
      %2241 = vmatpush1.bf16.msra.mxu0 %v1013
      %2242 = vmatprep.subr.bf16.mxu0 %v1031
      %2243 = vmatpush1.bf16.msra.mxu0 %v1030
      %2244 = vmatprep.subr.bf16.mxu0 %v1048
      %2245 = vmatpush1.bf16.msra.mxu0 %v1047
      %2246 = vmatprep.subr.bf16.mxu0 %v1065
      %2247 = vmatpush1.bf16.msra.mxu0 %v1064
      %2248 = vmatprep.subr.bf16.mxu0 %v1082
      %2249 = vmatpush1.bf16.msra.mxu0 %v1081
      %2250 = vmatprep.subr.bf16.mxu0 %v1099
      %2251 = vmatpush1.bf16.msra.mxu0 %v1098
      %2252 = vmatprep.subr.bf16.mxu0 %v1116
      %2253 = vmatpush1.bf16.msra.mxu0 %v1115
      %2254 = vmatprep.subr.bf16.mxu0 %v1133
      %2255 = vmatpush1.bf16.msra.mxu0 %v1132
      %2256 = vmatprep.subr.bf16.mxu0 0
      %2257 = vmatpush1.bf16.msra.mxu0 0
      %2258 = vmatprep.subr.bf16.mxu0 0
      %2259 = vmatpush1.bf16.msra.mxu0 0
      %2260 = vmatprep.subr.bf16.mxu0 0
      %2261 = vmatpush1.bf16.msra.mxu0 0
      %2262 = vmatprep.subr.bf16.mxu0 0
      %2263 = vmatpush1.bf16.msra.mxu0 0
      %2264 = vmatprep.subr.bf16.mxu0 0
      %2265 = vmatpush1.bf16.msra.mxu0 0
      %2266 = vmatprep.subr.bf16.mxu0 0
      %2267 = vmatpush1.bf16.msra.mxu0 0
      %2268 = vmatprep.subr.bf16.mxu0 0
      %2269 = vmatpush1.bf16.msra.mxu0 0
      %2270 = vmatprep.subr.bf16.mxu0 0
      %2271 = vmatpush1.bf16.msra.mxu0 0
      %2272 = vmatprep.mubr.bf16.mxu0 0
      %2273 = vmatmul.mubr.bf16.gmra.mrb[0].mxu0 %v555
      %v2274 = vpop.f32.mrb[0].mxu0
      %v2275 = vadd.f32 0.0, %v2274
      %v2276 = vpop.f32.mrb[0].mxu0
      %v2277 = vadd.f32 0.0, %v2276
      %v2278 = vpop.f32.mrb[0].mxu0
      %v2279 = vadd.f32 0.0, %v2278
      %v2280 = vpop.f32.mrb[0].mxu0
      %v2281 = vadd.f32 0.0, %v2280
      %2282 = vmatprep.mubr.bf16.mxu0 0
      %2283 = vmatmul.mubr.bf16.gmra.mrb[0].mxu0 %v556
      %v2284 = vpop.f32.mrb[0].mxu0
      %v2285 = vadd.f32 0.0, %v2284
      %v2286 = vpop.f32.mrb[0].mxu0
      %v2287 = vadd.f32 0.0, %v2286
      %v2288 = vpop.f32.mrb[0].mxu0
      %v2289 = vadd.f32 0.0, %v2288
      %v2290 = vpop.f32.mrb[0].mxu0
      %v2291 = vadd.f32 0.0, %v2290
      %2292 = vmatprep.mubr.bf16.mxu0 0
      %2293 = vmatmul.mubr.bf16.gmra.mrb[0].mxu0 %v557
      %v2294 = vpop.f32.mrb[0].mxu0
      %v2295 = vadd.f32 0.0, %v2294
      %v2296 = vpop.f32.mrb[0].mxu0
      %v2297 = vadd.f32 0.0, %v2296
      %v2298 = vpop.f32.mrb[0].mxu0
      %v2299 = vadd.f32 0.0, %v2298
      %v2300 = vpop.f32.mrb[0].mxu0
      %v2301 = vadd.f32 0.0, %v2300
      %2302 = vmatprep.mubr.bf16.mxu0 0
      %2303 = vmatmul.mubr.bf16.gmra.mrb[0].mxu0 %v558
      %v2304 = vpop.f32.mrb[0].mxu0
      %v2305 = vadd.f32 0.0, %v2304
      %v2306 = vpop.f32.mrb[0].mxu0
      %v2307 = vadd.f32 0.0, %v2306
      %v2308 = vpop.f32.mrb[0].mxu0
      %v2309 = vadd.f32 0.0, %v2308
      %v2310 = vpop.f32.mrb[0].mxu0
      %v2311 = vadd.f32 0.0, %v2310
      %2312 = vmatprep.mubr.bf16.mxu0 0
      %2313 = vmatmul.mubr.bf16.gmra.mrb[0].mxu0 %v559
      %v2314 = vpop.f32.mrb[0].mxu0
      %v2315 = vadd.f32 0.0, %v2314
      %v2316 = vpop.f32.mrb[0].mxu0
      %v2317 = vadd.f32 0.0, %v2316
      %v2318 = vpop.f32.mrb[0].mxu0
      %v2319 = vadd.f32 0.0, %v2318
      %v2320 = vpop.f32.mrb[0].mxu0
      %v2321 = vadd.f32 0.0, %v2320
      %2322 = vmatprep.mubr.bf16.mxu0 0
      %2323 = vmatmul.mubr.bf16.gmra.mrb[0].mxu0 %v560
      %v2324 = vpop.f32.mrb[0].mxu0
      %v2325 = vadd.f32 0.0, %v2324
      %v2326 = vpop.f32.mrb[0].mxu0
      %v2327 = vadd.f32 0.0, %v2326
      %v2328 = vpop.f32.mrb[0].mxu0
      %v2329 = vadd.f32 0.0, %v2328
      %v2330 = vpop.f32.mrb[0].mxu0
      %v2331 = vadd.f32 0.0, %v2330
      %2332 = vmatprep.mubr.bf16.mxu0 0
      %2333 = vmatmul.mubr.bf16.gmra.mrb[0].mxu0 %v561
      %v2334 = vpop.f32.mrb[0].mxu0
      %v2335 = vadd.f32 0.0, %v2334
      %v2336 = vpop.f32.mrb[0].mxu0
      %v2337 = vadd.f32 0.0, %v2336
      %v2338 = vpop.f32.mrb[0].mxu0
      %v2339 = vadd.f32 0.0, %v2338
      %v2340 = vpop.f32.mrb[0].mxu0
      %v2341 = vadd.f32 0.0, %v2340
      %2342 = vmatprep.mubr.bf16.mxu0 0
      %2343 = vmatmul.mubr.bf16.gmra.mrb[0].mxu0 %v562
      %v2344 = vpop.f32.mrb[0].mxu0
      %v2345 = vadd.f32 0.0, %v2344
      %v2346 = vpop.f32.mrb[0].mxu0
      %v2347 = vadd.f32 0.0, %v2346
      %v2348 = vpop.f32.mrb[0].mxu0
      %v2349 = vadd.f32 0.0, %v2348
      %v2350 = vpop.f32.mrb[0].mxu0
      %v2351 = vadd.f32 0.0, %v2350
      %2352 = vmatprep.mubr.bf16.mxu0 0
      %2353 = vmatmul.mubr.bf16.gmra.mrb[0].mxu0 %v563
      %v2354 = vpop.f32.mrb[0].mxu0
      %v2355 = vadd.f32 0.0, %v2354
      %v2356 = vpop.f32.mrb[0].mxu0
      %v2357 = vadd.f32 0.0, %v2356
      %v2358 = vpop.f32.mrb[0].mxu0
      %v2359 = vadd.f32 0.0, %v2358
      %v2360 = vpop.f32.mrb[0].mxu0
      %v2361 = vadd.f32 0.0, %v2360
      %2362 = vmatprep.mubr.bf16.mxu0 0
      %2363 = vmatmul.mubr.bf16.gmra.mrb[0].mxu0 %v564
      %v2364 = vpop.f32.mrb[0].mxu0
      %v2365 = vadd.f32 0.0, %v2364
      %v2366 = vpop.f32.mrb[0].mxu0
      %v2367 = vadd.f32 0.0, %v2366
      %v2368 = vpop.f32.mrb[0].mxu0
      %v2369 = vadd.f32 0.0, %v2368
      %v2370 = vpop.f32.mrb[0].mxu0
      %v2371 = vadd.f32 0.0, %v2370
      %2372 = vmatprep.mubr.bf16.mxu0 0
      %2373 = vmatmul.mubr.bf16.gmra.mrb[0].mxu0 %v565
      %v2374 = vpop.f32.mrb[0].mxu0
      %v2375 = vadd.f32 0.0, %v2374
      %v2376 = vpop.f32.mrb[0].mxu0
      %v2377 = vadd.f32 0.0, %v2376
      %v2378 = vpop.f32.mrb[0].mxu0
      %v2379 = vadd.f32 0.0, %v2378
      %v2380 = vpop.f32.mrb[0].mxu0
      %v2381 = vadd.f32 0.0, %v2380
      %2382 = vmatprep.mubr.bf16.mxu0 0
      %2383 = vmatmul.mubr.bf16.gmra.mrb[0].mxu0 %v566
      %v2384 = vpop.f32.mrb[0].mxu0
      %v2385 = vadd.f32 0.0, %v2384
      %v2386 = vpop.f32.mrb[0].mxu0
      %v2387 = vadd.f32 0.0, %v2386
      %v2388 = vpop.f32.mrb[0].mxu0
      %v2389 = vadd.f32 0.0, %v2388
      %v2390 = vpop.f32.mrb[0].mxu0
      %v2391 = vadd.f32 0.0, %v2390
      %2392 = vmatprep.mubr.bf16.mxu0 0
      %2393 = vmatmul.mubr.bf16.gmra.mrb[0].mxu0 %v567
      %v2394 = vpop.f32.mrb[0].mxu0
      %v2395 = vadd.f32 0.0, %v2394
      %v2396 = vpop.f32.mrb[0].mxu0
      %v2397 = vadd.f32 0.0, %v2396
      %v2398 = vpop.f32.mrb[0].mxu0
      %v2399 = vadd.f32 0.0, %v2398
      %v2400 = vpop.f32.mrb[0].mxu0
      %v2401 = vadd.f32 0.0, %v2400
      %2402 = vmatprep.mubr.bf16.mxu0 0
      %2403 = vmatmul.mubr.bf16.gmra.mrb[0].mxu0 %v568
      %v2404 = vpop.f32.mrb[0].mxu0
      %v2405 = vadd.f32 0.0, %v2404
      %v2406 = vpop.f32.mrb[0].mxu0
      %v2407 = vadd.f32 0.0, %v2406
      %v2408 = vpop.f32.mrb[0].mxu0
      %v2409 = vadd.f32 0.0, %v2408
      %v2410 = vpop.f32.mrb[0].mxu0
      %v2411 = vadd.f32 0.0, %v2410
      %2412 = vmatprep.mubr.bf16.mxu0 0
      %2413 = vmatmul.mubr.bf16.gmra.mrb[0].mxu0 %v569
      %v2414 = vpop.f32.mrb[0].mxu0
      %v2415 = vadd.f32 0.0, %v2414
      %v2416 = vpop.f32.mrb[0].mxu0
      %v2417 = vadd.f32 0.0, %v2416
      %v2418 = vpop.f32.mrb[0].mxu0
      %v2419 = vadd.f32 0.0, %v2418
      %v2420 = vpop.f32.mrb[0].mxu0
      %v2421 = vadd.f32 0.0, %v2420
      %2422 = vmatprep.mubr.bf16.mxu0 0
      %2423 = vmatmul.mubr.bf16.gmra.mrb[0].mxu0 %v570
      %v2424 = vpop.f32.mrb[0].mxu0
      %v2425 = vadd.f32 0.0, %v2424
      %v2426 = vpop.f32.mrb[0].mxu0
      %v2427 = vadd.f32 0.0, %v2426
      %v2428 = vpop.f32.mrb[0].mxu0
      %v2429 = vadd.f32 0.0, %v2428
      %v2430 = vpop.f32.mrb[0].mxu0
      %v2431 = vadd.f32 0.0, %v2430
      %2432 = vdwg.mxu0
      %2433 = vmatprep.subr.bf16.mxu0 %v1016
      %2434 = vmatpush1.bf16.msra.mxu0 %v1015
      %2435 = vmatprep.subr.bf16.mxu0 %v1033
      %2436 = vmatpush1.bf16.msra.mxu0 %v1032
      %2437 = vmatprep.subr.bf16.mxu0 %v1050
      %2438 = vmatpush1.bf16.msra.mxu0 %v1049
      %2439 = vmatprep.subr.bf16.mxu0 %v1067
      %2440 = vmatpush1.bf16.msra.mxu0 %v1066
      %2441 = vmatprep.subr.bf16.mxu0 %v1084
      %2442 = vmatpush1.bf16.msra.mxu0 %v1083
      %2443 = vmatprep.subr.bf16.mxu0 %v1101
      %2444 = vmatpush1.bf16.msra.mxu0 %v1100
      %2445 = vmatprep.subr.bf16.mxu0 %v1118
      %2446 = vmatpush1.bf16.msra.mxu0 %v1117
      %2447 = vmatprep.subr.bf16.mxu0 %v1135
      %2448 = vmatpush1.bf16.msra.mxu0 %v1134
      %2449 = vmatprep.subr.bf16.mxu0 0
      %2450 = vmatpush1.bf16.msra.mxu0 0
      %2451 = vmatprep.subr.bf16.mxu0 0
      %2452 = vmatpush1.bf16.msra.mxu0 0
      %2453 = vmatprep.subr.bf16.mxu0 0
      %2454 = vmatpush1.bf16.msra.mxu0 0
      %2455 = vmatprep.subr.bf16.mxu0 0
      %2456 = vmatpush1.bf16.msra.mxu0 0
      %2457 = vmatprep.subr.bf16.mxu0 0
      %2458 = vmatpush1.bf16.msra.mxu0 0
      %2459 = vmatprep.subr.bf16.mxu0 0
      %2460 = vmatpush1.bf16.msra.mxu0 0
      %2461 = vmatprep.subr.bf16.mxu0 0
      %2462 = vmatpush1.bf16.msra.mxu0 0
      %2463 = vmatprep.subr.bf16.mxu0 0
      %2464 = vmatpush1.bf16.msra.mxu0 0
      %2465 = vmatprep.mubr.bf16.mxu0 0
      %2466 = vmatmul.mubr.bf16.gmra.mrb[0].mxu0 %v555
      %v2467 = vpop.f32.mrb[0].mxu0
      %v2468 = vadd.f32 0.0, %v2467
      %v2469 = vpop.f32.mrb[0].mxu0
      %v2470 = vadd.f32 0.0, %v2469
      %v2471 = vpop.f32.mrb[0].mxu0
      %v2472 = vadd.f32 0.0, %v2471
      %v2473 = vpop.f32.mrb[0].mxu0
      %v2474 = vadd.f32 0.0, %v2473
      %2475 = vmatprep.mubr.bf16.mxu0 0
      %2476 = vmatmul.mubr.bf16.gmra.mrb[0].mxu0 %v556
      %v2477 = vpop.f32.mrb[0].mxu0
      %v2478 = vadd.f32 0.0, %v2477
      %v2479 = vpop.f32.mrb[0].mxu0
      %v2480 = vadd.f32 0.0, %v2479
      %v2481 = vpop.f32.mrb[0].mxu0
      %v2482 = vadd.f32 0.0, %v2481
      %v2483 = vpop.f32.mrb[0].mxu0
      %v2484 = vadd.f32 0.0, %v2483
      %2485 = vmatprep.mubr.bf16.mxu0 0
      %2486 = vmatmul.mubr.bf16.gmra.mrb[0].mxu0 %v557
      %v2487 = vpop.f32.mrb[0].mxu0
      %v2488 = vadd.f32 0.0, %v2487
      %v2489 = vpop.f32.mrb[0].mxu0
      %v2490 = vadd.f32 0.0, %v2489
      %v2491 = vpop.f32.mrb[0].mxu0
      %v2492 = vadd.f32 0.0, %v2491
      %v2493 = vpop.f32.mrb[0].mxu0
      %v2494 = vadd.f32 0.0, %v2493
      %2495 = vmatprep.mubr.bf16.mxu0 0
      %2496 = vmatmul.mubr.bf16.gmra.mrb[0].mxu0 %v558
      %v2497 = vpop.f32.mrb[0].mxu0
      %v2498 = vadd.f32 0.0, %v2497
      %v2499 = vpop.f32.mrb[0].mxu0
      %v2500 = vadd.f32 0.0, %v2499
      %v2501 = vpop.f32.mrb[0].mxu0
      %v2502 = vadd.f32 0.0, %v2501
      %v2503 = vpop.f32.mrb[0].mxu0
      %v2504 = vadd.f32 0.0, %v2503
      %2505 = vmatprep.mubr.bf16.mxu0 0
      %2506 = vmatmul.mubr.bf16.gmra.mrb[0].mxu0 %v559
      %v2507 = vpop.f32.mrb[0].mxu0
      %v2508 = vadd.f32 0.0, %v2507
      %v2509 = vpop.f32.mrb[0].mxu0
      %v2510 = vadd.f32 0.0, %v2509
      %v2511 = vpop.f32.mrb[0].mxu0
      %v2512 = vadd.f32 0.0, %v2511
      %v2513 = vpop.f32.mrb[0].mxu0
      %v2514 = vadd.f32 0.0, %v2513
      %2515 = vmatprep.mubr.bf16.mxu0 0
      %2516 = vmatmul.mubr.bf16.gmra.mrb[0].mxu0 %v560
      %v2517 = vpop.f32.mrb[0].mxu0
      %v2518 = vadd.f32 0.0, %v2517
      %v2519 = vpop.f32.mrb[0].mxu0
      %v2520 = vadd.f32 0.0, %v2519
      %v2521 = vpop.f32.mrb[0].mxu0
      %v2522 = vadd.f32 0.0, %v2521
      %v2523 = vpop.f32.mrb[0].mxu0
      %v2524 = vadd.f32 0.0, %v2523
      %2525 = vmatprep.mubr.bf16.mxu0 0
      %2526 = vmatmul.mubr.bf16.gmra.mrb[0].mxu0 %v561
      %v2527 = vpop.f32.mrb[0].mxu0
      %v2528 = vadd.f32 0.0, %v2527
      %v2529 = vpop.f32.mrb[0].mxu0
      %v2530 = vadd.f32 0.0, %v2529
      %v2531 = vpop.f32.mrb[0].mxu0
      %v2532 = vadd.f32 0.0, %v2531
      %v2533 = vpop.f32.mrb[0].mxu0
      %v2534 = vadd.f32 0.0, %v2533
      %2535 = vmatprep.mubr.bf16.mxu0 0
      %2536 = vmatmul.mubr.bf16.gmra.mrb[0].mxu0 %v562
      %v2537 = vpop.f32.mrb[0].mxu0
      %v2538 = vadd.f32 0.0, %v2537
      %v2539 = vpop.f32.mrb[0].mxu0
      %v2540 = vadd.f32 0.0, %v2539
      %v2541 = vpop.f32.mrb[0].mxu0
      %v2542 = vadd.f32 0.0, %v2541
      %v2543 = vpop.f32.mrb[0].mxu0
      %v2544 = vadd.f32 0.0, %v2543
      %2545 = vmatprep.mubr.bf16.mxu0 0
      %2546 = vmatmul.mubr.bf16.gmra.mrb[0].mxu0 %v563
      %v2547 = vpop.f32.mrb[0].mxu0
      %v2548 = vadd.f32 0.0, %v2547
      %v2549 = vpop.f32.mrb[0].mxu0
      %v2550 = vadd.f32 0.0, %v2549
      %v2551 = vpop.f32.mrb[0].mxu0
      %v2552 = vadd.f32 0.0, %v2551
      %v2553 = vpop.f32.mrb[0].mxu0
      %v2554 = vadd.f32 0.0, %v2553
      %2555 = vmatprep.mubr.bf16.mxu0 0
      %2556 = vmatmul.mubr.bf16.gmra.mrb[0].mxu0 %v564
      %v2557 = vpop.f32.mrb[0].mxu0
      %v2558 = vadd.f32 0.0, %v2557
      %v2559 = vpop.f32.mrb[0].mxu0
      %v2560 = vadd.f32 0.0, %v2559
      %v2561 = vpop.f32.mrb[0].mxu0
      %v2562 = vadd.f32 0.0, %v2561
      %v2563 = vpop.f32.mrb[0].mxu0
      %v2564 = vadd.f32 0.0, %v2563
      %2565 = vmatprep.mubr.bf16.mxu0 0
      %2566 = vmatmul.mubr.bf16.gmra.mrb[0].mxu0 %v565
      %v2567 = vpop.f32.mrb[0].mxu0
      %v2568 = vadd.f32 0.0, %v2567
      %v2569 = vpop.f32.mrb[0].mxu0
      %v2570 = vadd.f32 0.0, %v2569
      %v2571 = vpop.f32.mrb[0].mxu0
      %v2572 = vadd.f32 0.0, %v2571
      %v2573 = vpop.f32.mrb[0].mxu0
      %v2574 = vadd.f32 0.0, %v2573
      %2575 = vmatprep.mubr.bf16.mxu0 0
      %2576 = vmatmul.mubr.bf16.gmra.mrb[0].mxu0 %v566
      %v2577 = vpop.f32.mrb[0].mxu0
      %v2578 = vadd.f32 0.0, %v2577
      %v2579 = vpop.f32.mrb[0].mxu0
      %v2580 = vadd.f32 0.0, %v2579
      %v2581 = vpop.f32.mrb[0].mxu0
      %v2582 = vadd.f32 0.0, %v2581
      %v2583 = vpop.f32.mrb[0].mxu0
      %v2584 = vadd.f32 0.0, %v2583
      %2585 = vmatprep.mubr.bf16.mxu0 0
      %2586 = vmatmul.mubr.bf16.gmra.mrb[0].mxu0 %v567
      %v2587 = vpop.f32.mrb[0].mxu0
      %v2588 = vadd.f32 0.0, %v2587
      %v2589 = vpop.f32.mrb[0].mxu0
      %v2590 = vadd.f32 0.0, %v2589
      %v2591 = vpop.f32.mrb[0].mxu0
      %v2592 = vadd.f32 0.0, %v2591
      %v2593 = vpop.f32.mrb[0].mxu0
      %v2594 = vadd.f32 0.0, %v2593
      %2595 = vmatprep.mubr.bf16.mxu0 0
      %2596 = vmatmul.mubr.bf16.gmra.mrb[0].mxu0 %v568
      %v2597 = vpop.f32.mrb[0].mxu0
      %v2598 = vadd.f32 0.0, %v2597
      %v2599 = vpop.f32.mrb[0].mxu0
      %v2600 = vadd.f32 0.0, %v2599
      %v2601 = vpop.f32.mrb[0].mxu0
      %v2602 = vadd.f32 0.0, %v2601
      %v2603 = vpop.f32.mrb[0].mxu0
      %v2604 = vadd.f32 0.0, %v2603
      %2605 = vmatprep.mubr.bf16.mxu0 0
      %2606 = vmatmul.mubr.bf16.gmra.mrb[0].mxu0 %v569
      %v2607 = vpop.f32.mrb[0].mxu0
      %v2608 = vadd.f32 0.0, %v2607
      %v2609 = vpop.f32.mrb[0].mxu0
      %v2610 = vadd.f32 0.0, %v2609
      %v2611 = vpop.f32.mrb[0].mxu0
      %v2612 = vadd.f32 0.0, %v2611
      %v2613 = vpop.f32.mrb[0].mxu0
      %v2614 = vadd.f32 0.0, %v2613
      %2615 = vmatprep.mubr.bf16.mxu0 0
      %2616 = vmatmul.mubr.bf16.gmra.mrb[0].mxu0 %v570
      %v2617 = vpop.f32.mrb[0].mxu0
      %v2618 = vadd.f32 0.0, %v2617
      %v2619 = vpop.f32.mrb[0].mxu0
      %v2620 = vadd.f32 0.0, %v2619
      %v2621 = vpop.f32.mrb[0].mxu0
      %v2622 = vadd.f32 0.0, %v2621
      %v2623 = vpop.f32.mrb[0].mxu0
      %v2624 = vadd.f32 0.0, %v2623
      %2625 = vdwg.mxu0
      %2626 = vmatprep.subr.bf16.mxu0 %v1018
      %2627 = vmatpush1.bf16.msra.mxu0 %v1017
      %2628 = vmatprep.subr.bf16.mxu0 %v1035
      %2629 = vmatpush1.bf16.msra.mxu0 %v1034
      %2630 = vmatprep.subr.bf16.mxu0 %v1052
      %2631 = vmatpush1.bf16.msra.mxu0 %v1051
      %2632 = vmatprep.subr.bf16.mxu0 %v1069
      %2633 = vmatpush1.bf16.msra.mxu0 %v1068
      %2634 = vmatprep.subr.bf16.mxu0 %v1086
      %2635 = vmatpush1.bf16.msra.mxu0 %v1085
      %2636 = vmatprep.subr.bf16.mxu0 %v1103
      %2637 = vmatpush1.bf16.msra.mxu0 %v1102
      %2638 = vmatprep.subr.bf16.mxu0 %v1120
      %2639 = vmatpush1.bf16.msra.mxu0 %v1119
      %2640 = vmatprep.subr.bf16.mxu0 %v1137
      %2641 = vmatpush1.bf16.msra.mxu0 %v1136
      %2642 = vmatprep.subr.bf16.mxu0 0
      %2643 = vmatpush1.bf16.msra.mxu0 0
      %2644 = vmatprep.subr.bf16.mxu0 0
      %2645 = vmatpush1.bf16.msra.mxu0 0
      %2646 = vmatprep.subr.bf16.mxu0 0
      %2647 = vmatpush1.bf16.msra.mxu0 0
      %2648 = vmatprep.subr.bf16.mxu0 0
      %2649 = vmatpush1.bf16.msra.mxu0 0
      %2650 = vmatprep.subr.bf16.mxu0 0
      %2651 = vmatpush1.bf16.msra.mxu0 0
      %2652 = vmatprep.subr.bf16.mxu0 0
      %2653 = vmatpush1.bf16.msra.mxu0 0
      %2654 = vmatprep.subr.bf16.mxu0 0
      %2655 = vmatpush1.bf16.msra.mxu0 0
      %2656 = vmatprep.subr.bf16.mxu0 0
      %2657 = vmatpush1.bf16.msra.mxu0 0
      %2658 = vmatprep.mubr.bf16.mxu0 0
      %2659 = vmatmul.mubr.bf16.gmra.mrb[0].mxu0 %v555
      %v2660 = vpop.f32.mrb[0].mxu0
      %v2661 = vadd.f32 0.0, %v2660
      %v2662 = vpop.f32.mrb[0].mxu0
      %v2663 = vadd.f32 0.0, %v2662
      %v2664 = vpop.f32.mrb[0].mxu0
      %v2665 = vadd.f32 0.0, %v2664
      %v2666 = vpop.f32.mrb[0].mxu0
      %v2667 = vadd.f32 0.0, %v2666
      %2668 = vmatprep.mubr.bf16.mxu0 0
      %2669 = vmatmul.mubr.bf16.gmra.mrb[0].mxu0 %v556
      %v2670 = vpop.f32.mrb[0].mxu0
      %v2671 = vadd.f32 0.0, %v2670
      %v2672 = vpop.f32.mrb[0].mxu0
      %v2673 = vadd.f32 0.0, %v2672
      %v2674 = vpop.f32.mrb[0].mxu0
      %v2675 = vadd.f32 0.0, %v2674
      %v2676 = vpop.f32.mrb[0].mxu0
      %v2677 = vadd.f32 0.0, %v2676
      %2678 = vmatprep.mubr.bf16.mxu0 0
      %2679 = vmatmul.mubr.bf16.gmra.mrb[0].mxu0 %v557
      %v2680 = vpop.f32.mrb[0].mxu0
      %v2681 = vadd.f32 0.0, %v2680
      %v2682 = vpop.f32.mrb[0].mxu0
      %v2683 = vadd.f32 0.0, %v2682
      %v2684 = vpop.f32.mrb[0].mxu0
      %v2685 = vadd.f32 0.0, %v2684
      %v2686 = vpop.f32.mrb[0].mxu0
      %v2687 = vadd.f32 0.0, %v2686
      %2688 = vmatprep.mubr.bf16.mxu0 0
      %2689 = vmatmul.mubr.bf16.gmra.mrb[0].mxu0 %v558
      %v2690 = vpop.f32.mrb[0].mxu0
      %v2691 = vadd.f32 0.0, %v2690
      %v2692 = vpop.f32.mrb[0].mxu0
      %v2693 = vadd.f32 0.0, %v2692
      %v2694 = vpop.f32.mrb[0].mxu0
      %v2695 = vadd.f32 0.0, %v2694
      %v2696 = vpop.f32.mrb[0].mxu0
      %v2697 = vadd.f32 0.0, %v2696
      %2698 = vmatprep.mubr.bf16.mxu0 0
      %2699 = vmatmul.mubr.bf16.gmra.mrb[0].mxu0 %v559
      %v2700 = vpop.f32.mrb[0].mxu0
      %v2701 = vadd.f32 0.0, %v2700
      %v2702 = vpop.f32.mrb[0].mxu0
      %v2703 = vadd.f32 0.0, %v2702
      %v2704 = vpop.f32.mrb[0].mxu0
      %v2705 = vadd.f32 0.0, %v2704
      %v2706 = vpop.f32.mrb[0].mxu0
      %v2707 = vadd.f32 0.0, %v2706
      %2708 = vmatprep.mubr.bf16.mxu0 0
      %2709 = vmatmul.mubr.bf16.gmra.mrb[0].mxu0 %v560
      %v2710 = vpop.f32.mrb[0].mxu0
      %v2711 = vadd.f32 0.0, %v2710
      %v2712 = vpop.f32.mrb[0].mxu0
      %v2713 = vadd.f32 0.0, %v2712
      %v2714 = vpop.f32.mrb[0].mxu0
      %v2715 = vadd.f32 0.0, %v2714
      %v2716 = vpop.f32.mrb[0].mxu0
      %v2717 = vadd.f32 0.0, %v2716
      %2718 = vmatprep.mubr.bf16.mxu0 0
      %2719 = vmatmul.mubr.bf16.gmra.mrb[0].mxu0 %v561
      %v2720 = vpop.f32.mrb[0].mxu0
      %v2721 = vadd.f32 0.0, %v2720
      %v2722 = vpop.f32.mrb[0].mxu0
      %v2723 = vadd.f32 0.0, %v2722
      %v2724 = vpop.f32.mrb[0].mxu0
      %v2725 = vadd.f32 0.0, %v2724
      %v2726 = vpop.f32.mrb[0].mxu0
      %v2727 = vadd.f32 0.0, %v2726
      %2728 = vmatprep.mubr.bf16.mxu0 0
      %2729 = vmatmul.mubr.bf16.gmra.mrb[0].mxu0 %v562
      %v2730 = vpop.f32.mrb[0].mxu0
      %v2731 = vadd.f32 0.0, %v2730
      %v2732 = vpop.f32.mrb[0].mxu0
      %v2733 = vadd.f32 0.0, %v2732
      %v2734 = vpop.f32.mrb[0].mxu0
      %v2735 = vadd.f32 0.0, %v2734
      %v2736 = vpop.f32.mrb[0].mxu0
      %v2737 = vadd.f32 0.0, %v2736
      %2738 = vmatprep.mubr.bf16.mxu0 0
      %2739 = vmatmul.mubr.bf16.gmra.mrb[0].mxu0 %v563
      %v2740 = vpop.f32.mrb[0].mxu0
      %v2741 = vadd.f32 0.0, %v2740
      %v2742 = vpop.f32.mrb[0].mxu0
      %v2743 = vadd.f32 0.0, %v2742
      %v2744 = vpop.f32.mrb[0].mxu0
      %v2745 = vadd.f32 0.0, %v2744
      %v2746 = vpop.f32.mrb[0].mxu0
      %v2747 = vadd.f32 0.0, %v2746
      %2748 = vmatprep.mubr.bf16.mxu0 0
      %2749 = vmatmul.mubr.bf16.gmra.mrb[0].mxu0 %v564
      %v2750 = vpop.f32.mrb[0].mxu0
      %v2751 = vadd.f32 0.0, %v2750
      %v2752 = vpop.f32.mrb[0].mxu0
      %v2753 = vadd.f32 0.0, %v2752
      %v2754 = vpop.f32.mrb[0].mxu0
      %v2755 = vadd.f32 0.0, %v2754
      %v2756 = vpop.f32.mrb[0].mxu0
      %v2757 = vadd.f32 0.0, %v2756
      %2758 = vmatprep.mubr.bf16.mxu0 0
      %2759 = vmatmul.mubr.bf16.gmra.mrb[0].mxu0 %v565
      %v2760 = vpop.f32.mrb[0].mxu0
      %v2761 = vadd.f32 0.0, %v2760
      %v2762 = vpop.f32.mrb[0].mxu0
      %v2763 = vadd.f32 0.0, %v2762
      %v2764 = vpop.f32.mrb[0].mxu0
      %v2765 = vadd.f32 0.0, %v2764
      %v2766 = vpop.f32.mrb[0].mxu0
      %v2767 = vadd.f32 0.0, %v2766
      %2768 = vmatprep.mubr.bf16.mxu0 0
      %2769 = vmatmul.mubr.bf16.gmra.mrb[0].mxu0 %v566
      %v2770 = vpop.f32.mrb[0].mxu0
      %v2771 = vadd.f32 0.0, %v2770
      %v2772 = vpop.f32.mrb[0].mxu0
      %v2773 = vadd.f32 0.0, %v2772
      %v2774 = vpop.f32.mrb[0].mxu0
      %v2775 = vadd.f32 0.0, %v2774
      %v2776 = vpop.f32.mrb[0].mxu0
      %v2777 = vadd.f32 0.0, %v2776
      %2778 = vmatprep.mubr.bf16.mxu0 0
      %2779 = vmatmul.mubr.bf16.gmra.mrb[0].mxu0 %v567
      %v2780 = vpop.f32.mrb[0].mxu0
      %v2781 = vadd.f32 0.0, %v2780
      %v2782 = vpop.f32.mrb[0].mxu0
      %v2783 = vadd.f32 0.0, %v2782
      %v2784 = vpop.f32.mrb[0].mxu0
      %v2785 = vadd.f32 0.0, %v2784
      %v2786 = vpop.f32.mrb[0].mxu0
      %v2787 = vadd.f32 0.0, %v2786
      %2788 = vmatprep.mubr.bf16.mxu0 0
      %2789 = vmatmul.mubr.bf16.gmra.mrb[0].mxu0 %v568
      %v2790 = vpop.f32.mrb[0].mxu0
      %v2791 = vadd.f32 0.0, %v2790
      %v2792 = vpop.f32.mrb[0].mxu0
      %v2793 = vadd.f32 0.0, %v2792
      %v2794 = vpop.f32.mrb[0].mxu0
      %v2795 = vadd.f32 0.0, %v2794
      %v2796 = vpop.f32.mrb[0].mxu0
      %v2797 = vadd.f32 0.0, %v2796
      %2798 = vmatprep.mubr.bf16.mxu0 0
      %2799 = vmatmul.mubr.bf16.gmra.mrb[0].mxu0 %v569
      %v2800 = vpop.f32.mrb[0].mxu0
      %v2801 = vadd.f32 0.0, %v2800
      %v2802 = vpop.f32.mrb[0].mxu0
      %v2803 = vadd.f32 0.0, %v2802
      %v2804 = vpop.f32.mrb[0].mxu0
      %v2805 = vadd.f32 0.0, %v2804
      %v2806 = vpop.f32.mrb[0].mxu0
      %v2807 = vadd.f32 0.0, %v2806
      %2808 = vmatprep.mubr.bf16.mxu0 0
      %2809 = vmatmul.mubr.bf16.gmra.mrb[0].mxu0 %v570
      %v2810 = vpop.f32.mrb[0].mxu0
      %v2811 = vadd.f32 0.0, %v2810
      %v2812 = vpop.f32.mrb[0].mxu0
      %v2813 = vadd.f32 0.0, %v2812
      %v2814 = vpop.f32.mrb[0].mxu0
      %v2815 = vadd.f32 0.0, %v2814
      %v2816 = vpop.f32.mrb[0].mxu0
      %v2817 = vadd.f32 0.0, %v2816
      %2818 = vdwg.mxu0
      %2819 = vmatprep.subr.bf16.mxu0 0
      %2820 = vmatpush1.bf16.msra.mxu0 %v1019
      %2821 = vmatprep.subr.bf16.mxu0 0
      %2822 = vmatpush1.bf16.msra.mxu0 %v1036
      %2823 = vmatprep.subr.bf16.mxu0 0
      %2824 = vmatpush1.bf16.msra.mxu0 %v1053
      %2825 = vmatprep.subr.bf16.mxu0 0
      %2826 = vmatpush1.bf16.msra.mxu0 %v1070
      %2827 = vmatprep.subr.bf16.mxu0 0
      %2828 = vmatpush1.bf16.msra.mxu0 %v1087
      %2829 = vmatprep.subr.bf16.mxu0 0
      %2830 = vmatpush1.bf16.msra.mxu0 %v1104
      %2831 = vmatprep.subr.bf16.mxu0 0
      %2832 = vmatpush1.bf16.msra.mxu0 %v1121
      %2833 = vmatprep.subr.bf16.mxu0 0
      %2834 = vmatpush1.bf16.msra.mxu0 %v1138
      %2835 = vmatprep.subr.bf16.mxu0 0
      %2836 = vmatpush1.bf16.msra.mxu0 0
      %2837 = vmatprep.subr.bf16.mxu0 0
      %2838 = vmatpush1.bf16.msra.mxu0 0
      %2839 = vmatprep.subr.bf16.mxu0 0
      %2840 = vmatpush1.bf16.msra.mxu0 0
      %2841 = vmatprep.subr.bf16.mxu0 0
      %2842 = vmatpush1.bf16.msra.mxu0 0
      %2843 = vmatprep.subr.bf16.mxu0 0
      %2844 = vmatpush1.bf16.msra.mxu0 0
      %2845 = vmatprep.subr.bf16.mxu0 0
      %2846 = vmatpush1.bf16.msra.mxu0 0
      %2847 = vmatprep.subr.bf16.mxu0 0
      %2848 = vmatpush1.bf16.msra.mxu0 0
      %2849 = vmatprep.subr.bf16.mxu0 0
      %2850 = vmatpush1.bf16.msra.mxu0 0
      %2851 = vmatprep.mubr.bf16.mxu0 0
      %2852 = vmatmul.mubr.bf16.gmra.mrb[0].mxu0 %v555
      %v2853 = vpop.f32.mrb[0].mxu0
      %v2854 = vadd.f32 0.0, %v2853
      %v2855 = vpop.f32.mrb[0].mxu0
      %v2856 = vpop.f32.mrb[0].mxu0
      %v2857 = vadd.f32 0.0, %v2856
      %v2858 = vpop.f32.mrb[0].mxu0
      %2859 = vmatprep.mubr.bf16.mxu0 0
      %2860 = vmatmul.mubr.bf16.gmra.mrb[0].mxu0 %v556
      %v2861 = vpop.f32.mrb[0].mxu0
      %v2862 = vadd.f32 0.0, %v2861
      %v2863 = vpop.f32.mrb[0].mxu0
      %v2864 = vpop.f32.mrb[0].mxu0
      %v2865 = vadd.f32 0.0, %v2864
      %v2866 = vpop.f32.mrb[0].mxu0
      %2867 = vmatprep.mubr.bf16.mxu0 0
      %2868 = vmatmul.mubr.bf16.gmra.mrb[0].mxu0 %v557
      %v2869 = vpop.f32.mrb[0].mxu0
      %v2870 = vadd.f32 0.0, %v2869
      %v2871 = vpop.f32.mrb[0].mxu0
      %v2872 = vpop.f32.mrb[0].mxu0
      %v2873 = vadd.f32 0.0, %v2872
      %v2874 = vpop.f32.mrb[0].mxu0
      %2875 = vmatprep.mubr.bf16.mxu0 0
      %2876 = vmatmul.mubr.bf16.gmra.mrb[0].mxu0 %v558
      %v2877 = vpop.f32.mrb[0].mxu0
      %v2878 = vadd.f32 0.0, %v2877
      %v2879 = vpop.f32.mrb[0].mxu0
      %v2880 = vpop.f32.mrb[0].mxu0
      %v2881 = vadd.f32 0.0, %v2880
      %v2882 = vpop.f32.mrb[0].mxu0
      %2883 = vmatprep.mubr.bf16.mxu0 0
      %2884 = vmatmul.mubr.bf16.gmra.mrb[0].mxu0 %v559
      %v2885 = vpop.f32.mrb[0].mxu0
      %v2886 = vadd.f32 0.0, %v2885
      %v2887 = vpop.f32.mrb[0].mxu0
      %v2888 = vpop.f32.mrb[0].mxu0
      %v2889 = vadd.f32 0.0, %v2888
      %v2890 = vpop.f32.mrb[0].mxu0
      %2891 = vmatprep.mubr.bf16.mxu0 0
      %2892 = vmatmul.mubr.bf16.gmra.mrb[0].mxu0 %v560
      %v2893 = vpop.f32.mrb[0].mxu0
      %v2894 = vadd.f32 0.0, %v2893
      %v2895 = vpop.f32.mrb[0].mxu0
      %v2896 = vpop.f32.mrb[0].mxu0
      %v2897 = vadd.f32 0.0, %v2896
      %v2898 = vpop.f32.mrb[0].mxu0
      %2899 = vmatprep.mubr.bf16.mxu0 0
      %2900 = vmatmul.mubr.bf16.gmra.mrb[0].mxu0 %v561
      %v2901 = vpop.f32.mrb[0].mxu0
      %v2902 = vadd.f32 0.0, %v2901
      %v2903 = vpop.f32.mrb[0].mxu0
      %v2904 = vpop.f32.mrb[0].mxu0
      %v2905 = vadd.f32 0.0, %v2904
      %v2906 = vpop.f32.mrb[0].mxu0
      %2907 = vmatprep.mubr.bf16.mxu0 0
      %2908 = vmatmul.mubr.bf16.gmra.mrb[0].mxu0 %v562
      %v2909 = vpop.f32.mrb[0].mxu0
      %v2910 = vadd.f32 0.0, %v2909
      %v2911 = vpop.f32.mrb[0].mxu0
      %v2912 = vpop.f32.mrb[0].mxu0
      %v2913 = vadd.f32 0.0, %v2912
      %v2914 = vpop.f32.mrb[0].mxu0
      %2915 = vmatprep.mubr.bf16.mxu0 0
      %2916 = vmatmul.mubr.bf16.gmra.mrb[0].mxu0 %v563
      %v2917 = vpop.f32.mrb[0].mxu0
      %v2918 = vadd.f32 0.0, %v2917
      %v2919 = vpop.f32.mrb[0].mxu0
      %v2920 = vpop.f32.mrb[0].mxu0
      %v2921 = vadd.f32 0.0, %v2920
      %v2922 = vpop.f32.mrb[0].mxu0
      %2923 = vmatprep.mubr.bf16.mxu0 0
      %2924 = vmatmul.mubr.bf16.gmra.mrb[0].mxu0 %v564
      %v2925 = vpop.f32.mrb[0].mxu0
      %v2926 = vadd.f32 0.0, %v2925
      %v2927 = vpop.f32.mrb[0].mxu0
      %v2928 = vpop.f32.mrb[0].mxu0
      %v2929 = vadd.f32 0.0, %v2928
      %v2930 = vpop.f32.mrb[0].mxu0
      %2931 = vmatprep.mubr.bf16.mxu0 0
      %2932 = vmatmul.mubr.bf16.gmra.mrb[0].mxu0 %v565
      %v2933 = vpop.f32.mrb[0].mxu0
      %v2934 = vadd.f32 0.0, %v2933
      %v2935 = vpop.f32.mrb[0].mxu0
      %v2936 = vpop.f32.mrb[0].mxu0
      %v2937 = vadd.f32 0.0, %v2936
      %v2938 = vpop.f32.mrb[0].mxu0
      %2939 = vmatprep.mubr.bf16.mxu0 0
      %2940 = vmatmul.mubr.bf16.gmra.mrb[0].mxu0 %v566
      %v2941 = vpop.f32.mrb[0].mxu0
      %v2942 = vadd.f32 0.0, %v2941
      %v2943 = vpop.f32.mrb[0].mxu0
      %v2944 = vpop.f32.mrb[0].mxu0
      %v2945 = vadd.f32 0.0, %v2944
      %v2946 = vpop.f32.mrb[0].mxu0
      %2947 = vmatprep.mubr.bf16.mxu0 0
      %2948 = vmatmul.mubr.bf16.gmra.mrb[0].mxu0 %v567
      %v2949 = vpop.f32.mrb[0].mxu0
      %v2950 = vadd.f32 0.0, %v2949
      %v2951 = vpop.f32.mrb[0].mxu0
      %v2952 = vpop.f32.mrb[0].mxu0
      %v2953 = vadd.f32 0.0, %v2952
      %v2954 = vpop.f32.mrb[0].mxu0
      %2955 = vmatprep.mubr.bf16.mxu0 0
      %2956 = vmatmul.mubr.bf16.gmra.mrb[0].mxu0 %v568
      %v2957 = vpop.f32.mrb[0].mxu0
      %v2958 = vadd.f32 0.0, %v2957
      %v2959 = vpop.f32.mrb[0].mxu0
      %v2960 = vpop.f32.mrb[0].mxu0
      %v2961 = vadd.f32 0.0, %v2960
      %v2962 = vpop.f32.mrb[0].mxu0
      %2963 = vmatprep.mubr.bf16.mxu0 0
      %2964 = vmatmul.mubr.bf16.gmra.mrb[0].mxu0 %v569
      %v2965 = vpop.f32.mrb[0].mxu0
      %v2966 = vadd.f32 0.0, %v2965
      %v2967 = vpop.f32.mrb[0].mxu0
      %v2968 = vpop.f32.mrb[0].mxu0
      %v2969 = vadd.f32 0.0, %v2968
      %v2970 = vpop.f32.mrb[0].mxu0
      %2971 = vmatprep.mubr.bf16.mxu0 0
      %2972 = vmatmul.mubr.bf16.gmra.mrb[0].mxu0 %v570
      %v2973 = vpop.f32.mrb[0].mxu0
      %v2974 = vadd.f32 0.0, %v2973
      %v2975 = vpop.f32.mrb[0].mxu0
      %v2976 = vpop.f32.mrb[0].mxu0
      %v2977 = vadd.f32 0.0, %v2976
      %v2978 = vpop.f32.mrb[0].mxu0
      %2979 = vdwg.mxu0
      %v2980 = vlaneseq
      %v2981 = vand.u32 %v2980, 127
      %v2982 = vadd.s32 %v2981, 128
      %v2983 = vadd.s32 %v2981, 256
      %v2984 = vadd.s32 %v2981, 384
      %v2985 = vadd.s32 %v2981, 512
      %v2986 = vadd.s32 %v2981, 640
      %v2987 = vadd.s32 %v2981, 768
      %v2988 = vadd.s32 %v2981, 896
      %v2989 = vadd.s32 %v2981, 1024
      %v2990 = vadd.s32 %v2981, 1152
      %v2991 = vadd.s32 %v2981, 1280
      %v2992 = vadd.s32 %v2981, 1408
      %v2993 = vadd.s32 %v2981, 1536
      %v2994 = vadd.s32 %v2981, 1664
      %v2995 = vadd.s32 %v2981, 1792
      %v2996 = vadd.s32 %v2981, 1920
      %v2997 = vmul.u32 %v283, 64
      %v2998 = vmul.u32 %v284, 64
      %v2999 = vmul.u32 %v285, 64
      %v3000 = vmul.u32 %v286, 64
      %v3001 = vmul.u32 %v287, 64
      %v3002 = vmul.u32 %v288, 64
      %v3003 = vmul.u32 %v289, 64
      %v3004 = vmul.u32 %v290, 64
      %v3005 = vmul.u32 %v291, 64
      %v3006 = vmul.u32 %v292, 64
      %v3007 = vmul.u32 %v293, 64
      %v3008 = vmul.u32 %v294, 64
      %v3009 = vmul.u32 %v295, 64
      %v3010 = vmul.u32 %v296, 64
      %v3011 = vmul.u32 %v297, 64
      %v3012 = vmul.u32 %v298, 64
      %v3013 = vmul.u32 %v299, 64
      %v3014 = vmul.u32 %v300, 64
      %v3015 = vmul.u32 %v301, 64
      %v3016 = vmul.u32 %v302, 64
      %v3017 = vmul.u32 %v303, 64
      %v3018 = vmul.u32 %v304, 64
      %v3019 = vmul.u32 %v305, 64
      %v3020 = vmul.u32 %v306, 64
      %v3021 = vmul.u32 %v307, 64
      %v3022 = vmul.u32 %v308, 64
      %v3023 = vmul.u32 %v309, 64
      %v3024 = vmul.u32 %v310, 64
      %v3025 = vmul.u32 %v311, 64
      %v3026 = vmul.u32 %v312, 64
      %v3027 = vmul.u32 %v313, 64
      %v3028 = vmul.u32 %v314, 64
      %3029 = vset.pattern.permute.xlu0 0
      %3030 = vperm.xlu0 %3029, %v2997
      %v3031 = vpop.permute.xlu0 %3030
      %3032 = vset.pattern.permute.xlu0 0
      %3033 = vperm.xlu0 %3032, %v2998
      %v3034 = vpop.permute.xlu0 %3033
      %3035 = vset.pattern.permute.xlu0 0
      %3036 = vperm.xlu0 %3035, %v2999
      %v3037 = vpop.permute.xlu0 %3036
      %3038 = vset.pattern.permute.xlu0 0
      %3039 = vperm.xlu0 %3038, %v3000
      %v3040 = vpop.permute.xlu0 %3039
      %3041 = vset.pattern.permute.xlu0 0
      %3042 = vperm.xlu0 %3041, %v3001
      %v3043 = vpop.permute.xlu0 %3042
      %3044 = vset.pattern.permute.xlu0 0
      %3045 = vperm.xlu0 %3044, %v3002
      %v3046 = vpop.permute.xlu0 %3045
      %3047 = vset.pattern.permute.xlu0 0
      %3048 = vperm.xlu0 %3047, %v3003
      %v3049 = vpop.permute.xlu0 %3048
      %3050 = vset.pattern.permute.xlu0 0
      %3051 = vperm.xlu0 %3050, %v3004
      %v3052 = vpop.permute.xlu0 %3051
      %3053 = vset.pattern.permute.xlu0 0
      %3054 = vperm.xlu0 %3053, %v3005
      %v3055 = vpop.permute.xlu0 %3054
      %3056 = vset.pattern.permute.xlu0 0
      %3057 = vperm.xlu0 %3056, %v3006
      %v3058 = vpop.permute.xlu0 %3057
      %3059 = vset.pattern.permute.xlu0 0
      %3060 = vperm.xlu0 %3059, %v3007
      %v3061 = vpop.permute.xlu0 %3060
      %3062 = vset.pattern.permute.xlu0 0
      %3063 = vperm.xlu0 %3062, %v3008
      %v3064 = vpop.permute.xlu0 %3063
      %3065 = vset.pattern.permute.xlu0 0
      %3066 = vperm.xlu0 %3065, %v3009
      %v3067 = vpop.permute.xlu0 %3066
      %3068 = vset.pattern.permute.xlu0 0
      %3069 = vperm.xlu0 %3068, %v3010
      %v3070 = vpop.permute.xlu0 %3069
      %3071 = vset.pattern.permute.xlu0 0
      %3072 = vperm.xlu0 %3071, %v3011
      %v3073 = vpop.permute.xlu0 %3072
      %3074 = vset.pattern.permute.xlu0 0
      %3075 = vperm.xlu0 %3074, %v3012
      %v3076 = vpop.permute.xlu0 %3075
      %3077 = vset.pattern.permute.xlu0 0
      %3078 = vperm.xlu0 %3077, %v3013
      %v3079 = vpop.permute.xlu0 %3078
      %3080 = vset.pattern.permute.xlu0 0
      %3081 = vperm.xlu0 %3080, %v3014
      %v3082 = vpop.permute.xlu0 %3081
      %3083 = vset.pattern.permute.xlu0 0
      %3084 = vperm.xlu0 %3083, %v3015
      %v3085 = vpop.permute.xlu0 %3084
      %3086 = vset.pattern.permute.xlu0 0
      %3087 = vperm.xlu0 %3086, %v3016
      %v3088 = vpop.permute.xlu0 %3087
      %3089 = vset.pattern.permute.xlu0 0
      %3090 = vperm.xlu0 %3089, %v3017
      %v3091 = vpop.permute.xlu0 %3090
      %3092 = vset.pattern.permute.xlu0 0
      %3093 = vperm.xlu0 %3092, %v3018
      %v3094 = vpop.permute.xlu0 %3093
      %3095 = vset.pattern.permute.xlu0 0
      %3096 = vperm.xlu0 %3095, %v3019
      %v3097 = vpop.permute.xlu0 %3096
      %3098 = vset.pattern.permute.xlu0 0
      %3099 = vperm.xlu0 %3098, %v3020
      %v3100 = vpop.permute.xlu0 %3099
      %3101 = vset.pattern.permute.xlu0 0
      %3102 = vperm.xlu0 %3101, %v3021
      %v3103 = vpop.permute.xlu0 %3102
      %3104 = vset.pattern.permute.xlu0 0
      %3105 = vperm.xlu0 %3104, %v3022
      %v3106 = vpop.permute.xlu0 %3105
      %3107 = vset.pattern.permute.xlu0 0
      %3108 = vperm.xlu0 %3107, %v3023
      %v3109 = vpop.permute.xlu0 %3108
      %3110 = vset.pattern.permute.xlu0 0
      %3111 = vperm.xlu0 %3110, %v3024
      %v3112 = vpop.permute.xlu0 %3111
      %3113 = vset.pattern.permute.xlu0 0
      %3114 = vperm.xlu0 %3113, %v3025
      %v3115 = vpop.permute.xlu0 %3114
      %3116 = vset.pattern.permute.xlu0 0
      %3117 = vperm.xlu0 %3116, %v3026
      %v3118 = vpop.permute.xlu0 %3117
      %3119 = vset.pattern.permute.xlu0 0
      %3120 = vperm.xlu0 %3119, %v3027
      %v3121 = vpop.permute.xlu0 %3120
      %3122 = vset.pattern.permute.xlu0 0
      %3123 = vperm.xlu0 %3122, %v3028
      %v3124 = vpop.permute.xlu0 %3123
      %vm3125 = vcmp.lt.s32.totalorder %v2981, %v3031
      %vm3126 = vcmp.lt.s32.totalorder %v2982, %v3031
      %vm3127 = vcmp.lt.s32.totalorder %v2983, %v3031
      %vm3128 = vcmp.lt.s32.totalorder %v2984, %v3031
      %vm3129 = vcmp.lt.s32.totalorder %v2985, %v3031
      %vm3130 = vcmp.lt.s32.totalorder %v2986, %v3031
      %vm3131 = vcmp.lt.s32.totalorder %v2987, %v3031
      %vm3132 = vcmp.lt.s32.totalorder %v2988, %v3031
      %vm3133 = vcmp.lt.s32.totalorder %v2989, %v3031
      %vm3134 = vcmp.lt.s32.totalorder %v2990, %v3031
      %vm3135 = vcmp.lt.s32.totalorder %v2991, %v3031
      %vm3136 = vcmp.lt.s32.totalorder %v2992, %v3031
      %vm3137 = vcmp.lt.s32.totalorder %v2993, %v3031
      %vm3138 = vcmp.lt.s32.totalorder %v2994, %v3031
      %vm3139 = vcmp.lt.s32.totalorder %v2995, %v3031
      %vm3140 = vcmp.lt.s32.totalorder %v2996, %v3031
      %vm3141 = vcmp.lt.s32.totalorder %v2981, %v3034
      %vm3142 = vcmp.lt.s32.totalorder %v2982, %v3034
      %vm3143 = vcmp.lt.s32.totalorder %v2983, %v3034
      %vm3144 = vcmp.lt.s32.totalorder %v2984, %v3034
      %vm3145 = vcmp.lt.s32.totalorder %v2985, %v3034
      %vm3146 = vcmp.lt.s32.totalorder %v2986, %v3034
      %vm3147 = vcmp.lt.s32.totalorder %v2987, %v3034
      %vm3148 = vcmp.lt.s32.totalorder %v2988, %v3034
      %vm3149 = vcmp.lt.s32.totalorder %v2989, %v3034
      %vm3150 = vcmp.lt.s32.totalorder %v2990, %v3034
      %vm3151 = vcmp.lt.s32.totalorder %v2991, %v3034
      %vm3152 = vcmp.lt.s32.totalorder %v2992, %v3034
      %vm3153 = vcmp.lt.s32.totalorder %v2993, %v3034
      %vm3154 = vcmp.lt.s32.totalorder %v2994, %v3034
      %vm3155 = vcmp.lt.s32.totalorder %v2995, %v3034
      %vm3156 = vcmp.lt.s32.totalorder %v2996, %v3034
      %vm3157 = vcmp.lt.s32.totalorder %v2981, %v3037
      %vm3158 = vcmp.lt.s32.totalorder %v2982, %v3037
      %vm3159 = vcmp.lt.s32.totalorder %v2983, %v3037
      %vm3160 = vcmp.lt.s32.totalorder %v2984, %v3037
      %vm3161 = vcmp.lt.s32.totalorder %v2985, %v3037
      %vm3162 = vcmp.lt.s32.totalorder %v2986, %v3037
      %vm3163 = vcmp.lt.s32.totalorder %v2987, %v3037
      %vm3164 = vcmp.lt.s32.totalorder %v2988, %v3037
      %vm3165 = vcmp.lt.s32.totalorder %v2989, %v3037
      %vm3166 = vcmp.lt.s32.totalorder %v2990, %v3037
      %vm3167 = vcmp.lt.s32.totalorder %v2991, %v3037
      %vm3168 = vcmp.lt.s32.totalorder %v2992, %v3037
      %vm3169 = vcmp.lt.s32.totalorder %v2993, %v3037
      %vm3170 = vcmp.lt.s32.totalorder %v2994, %v3037
      %vm3171 = vcmp.lt.s32.totalorder %v2995, %v3037
      %vm3172 = vcmp.lt.s32.totalorder %v2996, %v3037
      %vm3173 = vcmp.lt.s32.totalorder %v2981, %v3040
      %vm3174 = vcmp.lt.s32.totalorder %v2982, %v3040
      %vm3175 = vcmp.lt.s32.totalorder %v2983, %v3040
      %vm3176 = vcmp.lt.s32.totalorder %v2984, %v3040
      %vm3177 = vcmp.lt.s32.totalorder %v2985, %v3040
      %vm3178 = vcmp.lt.s32.totalorder %v2986, %v3040
      %vm3179 = vcmp.lt.s32.totalorder %v2987, %v3040
      %vm3180 = vcmp.lt.s32.totalorder %v2988, %v3040
      %vm3181 = vcmp.lt.s32.totalorder %v2989, %v3040
      %vm3182 = vcmp.lt.s32.totalorder %v2990, %v3040
      %vm3183 = vcmp.lt.s32.totalorder %v2991, %v3040
      %vm3184 = vcmp.lt.s32.totalorder %v2992, %v3040
      %vm3185 = vcmp.lt.s32.totalorder %v2993, %v3040
      %vm3186 = vcmp.lt.s32.totalorder %v2994, %v3040
      %vm3187 = vcmp.lt.s32.totalorder %v2995, %v3040
      %vm3188 = vcmp.lt.s32.totalorder %v2996, %v3040
      %vm3189 = vcmp.lt.s32.totalorder %v2981, %v3043
      %vm3190 = vcmp.lt.s32.totalorder %v2982, %v3043
      %vm3191 = vcmp.lt.s32.totalorder %v2983, %v3043
      %vm3192 = vcmp.lt.s32.totalorder %v2984, %v3043
      %vm3193 = vcmp.lt.s32.totalorder %v2985, %v3043
      %vm3194 = vcmp.lt.s32.totalorder %v2986, %v3043
      %vm3195 = vcmp.lt.s32.totalorder %v2987, %v3043
      %vm3196 = vcmp.lt.s32.totalorder %v2988, %v3043
      %vm3197 = vcmp.lt.s32.totalorder %v2989, %v3043
      %vm3198 = vcmp.lt.s32.totalorder %v2990, %v3043
      %vm3199 = vcmp.lt.s32.totalorder %v2991, %v3043
      %vm3200 = vcmp.lt.s32.totalorder %v2992, %v3043
      %vm3201 = vcmp.lt.s32.totalorder %v2993, %v3043
      %vm3202 = vcmp.lt.s32.totalorder %v2994, %v3043
      %vm3203 = vcmp.lt.s32.totalorder %v2995, %v3043
      %vm3204 = vcmp.lt.s32.totalorder %v2996, %v3043
      %vm3205 = vcmp.lt.s32.totalorder %v2981, %v3046
      %vm3206 = vcmp.lt.s32.totalorder %v2982, %v3046
      %vm3207 = vcmp.lt.s32.totalorder %v2983, %v3046
      %vm3208 = vcmp.lt.s32.totalorder %v2984, %v3046
      %vm3209 = vcmp.lt.s32.totalorder %v2985, %v3046
      %vm3210 = vcmp.lt.s32.totalorder %v2986, %v3046
      %vm3211 = vcmp.lt.s32.totalorder %v2987, %v3046
      %vm3212 = vcmp.lt.s32.totalorder %v2988, %v3046
      %vm3213 = vcmp.lt.s32.totalorder %v2989, %v3046
      %vm3214 = vcmp.lt.s32.totalorder %v2990, %v3046
      %vm3215 = vcmp.lt.s32.totalorder %v2991, %v3046
      %vm3216 = vcmp.lt.s32.totalorder %v2992, %v3046
      %vm3217 = vcmp.lt.s32.totalorder %v2993, %v3046
      %vm3218 = vcmp.lt.s32.totalorder %v2994, %v3046
      %vm3219 = vcmp.lt.s32.totalorder %v2995, %v3046
      %vm3220 = vcmp.lt.s32.totalorder %v2996, %v3046
      %vm3221 = vcmp.lt.s32.totalorder %v2981, %v3049
      %vm3222 = vcmp.lt.s32.totalorder %v2982, %v3049
      %vm3223 = vcmp.lt.s32.totalorder %v2983, %v3049
      %vm3224 = vcmp.lt.s32.totalorder %v2984, %v3049
      %vm3225 = vcmp.lt.s32.totalorder %v2985, %v3049
      %vm3226 = vcmp.lt.s32.totalorder %v2986, %v3049
      %vm3227 = vcmp.lt.s32.totalorder %v2987, %v3049
      %vm3228 = vcmp.lt.s32.totalorder %v2988, %v3049
      %vm3229 = vcmp.lt.s32.totalorder %v2989, %v3049
      %vm3230 = vcmp.lt.s32.totalorder %v2990, %v3049
      %vm3231 = vcmp.lt.s32.totalorder %v2991, %v3049
      %vm3232 = vcmp.lt.s32.totalorder %v2992, %v3049
      %vm3233 = vcmp.lt.s32.totalorder %v2993, %v3049
      %vm3234 = vcmp.lt.s32.totalorder %v2994, %v3049
      %vm3235 = vcmp.lt.s32.totalorder %v2995, %v3049
      %vm3236 = vcmp.lt.s32.totalorder %v2996, %v3049
      %vm3237 = vcmp.lt.s32.totalorder %v2981, %v3052
      %vm3238 = vcmp.lt.s32.totalorder %v2982, %v3052
      %vm3239 = vcmp.lt.s32.totalorder %v2983, %v3052
      %vm3240 = vcmp.lt.s32.totalorder %v2984, %v3052
      %vm3241 = vcmp.lt.s32.totalorder %v2985, %v3052
      %vm3242 = vcmp.lt.s32.totalorder %v2986, %v3052
      %vm3243 = vcmp.lt.s32.totalorder %v2987, %v3052
      %vm3244 = vcmp.lt.s32.totalorder %v2988, %v3052
      %vm3245 = vcmp.lt.s32.totalorder %v2989, %v3052
      %vm3246 = vcmp.lt.s32.totalorder %v2990, %v3052
      %vm3247 = vcmp.lt.s32.totalorder %v2991, %v3052
      %vm3248 = vcmp.lt.s32.totalorder %v2992, %v3052
      %vm3249 = vcmp.lt.s32.totalorder %v2993, %v3052
      %vm3250 = vcmp.lt.s32.totalorder %v2994, %v3052
      %vm3251 = vcmp.lt.s32.totalorder %v2995, %v3052
      %vm3252 = vcmp.lt.s32.totalorder %v2996, %v3052
      %vm3253 = vcmp.lt.s32.totalorder %v2981, %v3055
      %vm3254 = vcmp.lt.s32.totalorder %v2982, %v3055
      %vm3255 = vcmp.lt.s32.totalorder %v2983, %v3055
      %vm3256 = vcmp.lt.s32.totalorder %v2984, %v3055
      %vm3257 = vcmp.lt.s32.totalorder %v2985, %v3055
      %vm3258 = vcmp.lt.s32.totalorder %v2986, %v3055
      %vm3259 = vcmp.lt.s32.totalorder %v2987, %v3055
      %vm3260 = vcmp.lt.s32.totalorder %v2988, %v3055
      %vm3261 = vcmp.lt.s32.totalorder %v2989, %v3055
      %vm3262 = vcmp.lt.s32.totalorder %v2990, %v3055
      %vm3263 = vcmp.lt.s32.totalorder %v2991, %v3055
      %vm3264 = vcmp.lt.s32.totalorder %v2992, %v3055
      %vm3265 = vcmp.lt.s32.totalorder %v2993, %v3055
      %vm3266 = vcmp.lt.s32.totalorder %v2994, %v3055
      %vm3267 = vcmp.lt.s32.totalorder %v2995, %v3055
      %vm3268 = vcmp.lt.s32.totalorder %v2996, %v3055
      %vm3269 = vcmp.lt.s32.totalorder %v2981, %v3058
      %vm3270 = vcmp.lt.s32.totalorder %v2982, %v3058
      %vm3271 = vcmp.lt.s32.totalorder %v2983, %v3058
      %vm3272 = vcmp.lt.s32.totalorder %v2984, %v3058
      %vm3273 = vcmp.lt.s32.totalorder %v2985, %v3058
      %vm3274 = vcmp.lt.s32.totalorder %v2986, %v3058
      %vm3275 = vcmp.lt.s32.totalorder %v2987, %v3058
      %vm3276 = vcmp.lt.s32.totalorder %v2988, %v3058
      %vm3277 = vcmp.lt.s32.totalorder %v2989, %v3058
      %vm3278 = vcmp.lt.s32.totalorder %v2990, %v3058
      %vm3279 = vcmp.lt.s32.totalorder %v2991, %v3058
      %vm3280 = vcmp.lt.s32.totalorder %v2992, %v3058
      %vm3281 = vcmp.lt.s32.totalorder %v2993, %v3058
      %vm3282 = vcmp.lt.s32.totalorder %v2994, %v3058
      %vm3283 = vcmp.lt.s32.totalorder %v2995, %v3058
      %vm3284 = vcmp.lt.s32.totalorder %v2996, %v3058
      %vm3285 = vcmp.lt.s32.totalorder %v2981, %v3061
      %vm3286 = vcmp.lt.s32.totalorder %v2982, %v3061
      %vm3287 = vcmp.lt.s32.totalorder %v2983, %v3061
      %vm3288 = vcmp.lt.s32.totalorder %v2984, %v3061
      %vm3289 = vcmp.lt.s32.totalorder %v2985, %v3061
      %vm3290 = vcmp.lt.s32.totalorder %v2986, %v3061
      %vm3291 = vcmp.lt.s32.totalorder %v2987, %v3061
      %vm3292 = vcmp.lt.s32.totalorder %v2988, %v3061
      %vm3293 = vcmp.lt.s32.totalorder %v2989, %v3061
      %vm3294 = vcmp.lt.s32.totalorder %v2990, %v3061
      %vm3295 = vcmp.lt.s32.totalorder %v2991, %v3061
      %vm3296 = vcmp.lt.s32.totalorder %v2992, %v3061
      %vm3297 = vcmp.lt.s32.totalorder %v2993, %v3061
      %vm3298 = vcmp.lt.s32.totalorder %v2994, %v3061
      %vm3299 = vcmp.lt.s32.totalorder %v2995, %v3061
      %vm3300 = vcmp.lt.s32.totalorder %v2996, %v3061
      %vm3301 = vcmp.lt.s32.totalorder %v2981, %v3064
      %vm3302 = vcmp.lt.s32.totalorder %v2982, %v3064
      %vm3303 = vcmp.lt.s32.totalorder %v2983, %v3064
      %vm3304 = vcmp.lt.s32.totalorder %v2984, %v3064
      %vm3305 = vcmp.lt.s32.totalorder %v2985, %v3064
      %vm3306 = vcmp.lt.s32.totalorder %v2986, %v3064
      %vm3307 = vcmp.lt.s32.totalorder %v2987, %v3064
      %vm3308 = vcmp.lt.s32.totalorder %v2988, %v3064
      %vm3309 = vcmp.lt.s32.totalorder %v2989, %v3064
      %vm3310 = vcmp.lt.s32.totalorder %v2990, %v3064
      %vm3311 = vcmp.lt.s32.totalorder %v2991, %v3064
      %vm3312 = vcmp.lt.s32.totalorder %v2992, %v3064
      %vm3313 = vcmp.lt.s32.totalorder %v2993, %v3064
      %vm3314 = vcmp.lt.s32.totalorder %v2994, %v3064
      %vm3315 = vcmp.lt.s32.totalorder %v2995, %v3064
      %vm3316 = vcmp.lt.s32.totalorder %v2996, %v3064
      %vm3317 = vcmp.lt.s32.totalorder %v2981, %v3067
      %vm3318 = vcmp.lt.s32.totalorder %v2982, %v3067
      %vm3319 = vcmp.lt.s32.totalorder %v2983, %v3067
      %vm3320 = vcmp.lt.s32.totalorder %v2984, %v3067
      %vm3321 = vcmp.lt.s32.totalorder %v2985, %v3067
      %vm3322 = vcmp.lt.s32.totalorder %v2986, %v3067
      %vm3323 = vcmp.lt.s32.totalorder %v2987, %v3067
      %vm3324 = vcmp.lt.s32.totalorder %v2988, %v3067
      %vm3325 = vcmp.lt.s32.totalorder %v2989, %v3067
      %vm3326 = vcmp.lt.s32.totalorder %v2990, %v3067
      %vm3327 = vcmp.lt.s32.totalorder %v2991, %v3067
      %vm3328 = vcmp.lt.s32.totalorder %v2992, %v3067
      %vm3329 = vcmp.lt.s32.totalorder %v2993, %v3067
      %vm3330 = vcmp.lt.s32.totalorder %v2994, %v3067
      %vm3331 = vcmp.lt.s32.totalorder %v2995, %v3067
      %vm3332 = vcmp.lt.s32.totalorder %v2996, %v3067
      %vm3333 = vcmp.lt.s32.totalorder %v2981, %v3070
      %vm3334 = vcmp.lt.s32.totalorder %v2982, %v3070
      %vm3335 = vcmp.lt.s32.totalorder %v2983, %v3070
      %vm3336 = vcmp.lt.s32.totalorder %v2984, %v3070
      %vm3337 = vcmp.lt.s32.totalorder %v2985, %v3070
      %vm3338 = vcmp.lt.s32.totalorder %v2986, %v3070
      %vm3339 = vcmp.lt.s32.totalorder %v2987, %v3070
      %vm3340 = vcmp.lt.s32.totalorder %v2988, %v3070
      %vm3341 = vcmp.lt.s32.totalorder %v2989, %v3070
      %vm3342 = vcmp.lt.s32.totalorder %v2990, %v3070
      %vm3343 = vcmp.lt.s32.totalorder %v2991, %v3070
      %vm3344 = vcmp.lt.s32.totalorder %v2992, %v3070
      %vm3345 = vcmp.lt.s32.totalorder %v2993, %v3070
      %vm3346 = vcmp.lt.s32.totalorder %v2994, %v3070
      %vm3347 = vcmp.lt.s32.totalorder %v2995, %v3070
      %vm3348 = vcmp.lt.s32.totalorder %v2996, %v3070
      %vm3349 = vcmp.lt.s32.totalorder %v2981, %v3073
      %vm3350 = vcmp.lt.s32.totalorder %v2982, %v3073
      %vm3351 = vcmp.lt.s32.totalorder %v2983, %v3073
      %vm3352 = vcmp.lt.s32.totalorder %v2984, %v3073
      %vm3353 = vcmp.lt.s32.totalorder %v2985, %v3073
      %vm3354 = vcmp.lt.s32.totalorder %v2986, %v3073
      %vm3355 = vcmp.lt.s32.totalorder %v2987, %v3073
      %vm3356 = vcmp.lt.s32.totalorder %v2988, %v3073
      %vm3357 = vcmp.lt.s32.totalorder %v2989, %v3073
      %vm3358 = vcmp.lt.s32.totalorder %v2990, %v3073
      %vm3359 = vcmp.lt.s32.totalorder %v2991, %v3073
      %vm3360 = vcmp.lt.s32.totalorder %v2992, %v3073
      %vm3361 = vcmp.lt.s32.totalorder %v2993, %v3073
      %vm3362 = vcmp.lt.s32.totalorder %v2994, %v3073
      %vm3363 = vcmp.lt.s32.totalorder %v2995, %v3073
      %vm3364 = vcmp.lt.s32.totalorder %v2996, %v3073
      %vm3365 = vcmp.lt.s32.totalorder %v2981, %v3076
      %vm3366 = vcmp.lt.s32.totalorder %v2982, %v3076
      %vm3367 = vcmp.lt.s32.totalorder %v2983, %v3076
      %vm3368 = vcmp.lt.s32.totalorder %v2984, %v3076
      %vm3369 = vcmp.lt.s32.totalorder %v2985, %v3076
      %vm3370 = vcmp.lt.s32.totalorder %v2986, %v3076
      %vm3371 = vcmp.lt.s32.totalorder %v2987, %v3076
      %vm3372 = vcmp.lt.s32.totalorder %v2988, %v3076
      %vm3373 = vcmp.lt.s32.totalorder %v2989, %v3076
      %vm3374 = vcmp.lt.s32.totalorder %v2990, %v3076
      %vm3375 = vcmp.lt.s32.totalorder %v2991, %v3076
      %vm3376 = vcmp.lt.s32.totalorder %v2992, %v3076
      %vm3377 = vcmp.lt.s32.totalorder %v2993, %v3076
      %vm3378 = vcmp.lt.s32.totalorder %v2994, %v3076
      %vm3379 = vcmp.lt.s32.totalorder %v2995, %v3076
      %vm3380 = vcmp.lt.s32.totalorder %v2996, %v3076
      %vm3381 = vcmp.lt.s32.totalorder %v2981, %v3079
      %vm3382 = vcmp.lt.s32.totalorder %v2982, %v3079
      %vm3383 = vcmp.lt.s32.totalorder %v2983, %v3079
      %vm3384 = vcmp.lt.s32.totalorder %v2984, %v3079
      %vm3385 = vcmp.lt.s32.totalorder %v2985, %v3079
      %vm3386 = vcmp.lt.s32.totalorder %v2986, %v3079
      %vm3387 = vcmp.lt.s32.totalorder %v2987, %v3079
      %vm3388 = vcmp.lt.s32.totalorder %v2988, %v3079
      %vm3389 = vcmp.lt.s32.totalorder %v2989, %v3079
      %vm3390 = vcmp.lt.s32.totalorder %v2990, %v3079
      %vm3391 = vcmp.lt.s32.totalorder %v2991, %v3079
      %vm3392 = vcmp.lt.s32.totalorder %v2992, %v3079
      %vm3393 = vcmp.lt.s32.totalorder %v2993, %v3079
      %vm3394 = vcmp.lt.s32.totalorder %v2994, %v3079
      %vm3395 = vcmp.lt.s32.totalorder %v2995, %v3079
      %vm3396 = vcmp.lt.s32.totalorder %v2996, %v3079
      %vm3397 = vcmp.lt.s32.totalorder %v2981, %v3082
      %vm3398 = vcmp.lt.s32.totalorder %v2982, %v3082
      %vm3399 = vcmp.lt.s32.totalorder %v2983, %v3082
      %vm3400 = vcmp.lt.s32.totalorder %v2984, %v3082
      %vm3401 = vcmp.lt.s32.totalorder %v2985, %v3082
      %vm3402 = vcmp.lt.s32.totalorder %v2986, %v3082
      %vm3403 = vcmp.lt.s32.totalorder %v2987, %v3082
      %vm3404 = vcmp.lt.s32.totalorder %v2988, %v3082
      %vm3405 = vcmp.lt.s32.totalorder %v2989, %v3082
      %vm3406 = vcmp.lt.s32.totalorder %v2990, %v3082
      %vm3407 = vcmp.lt.s32.totalorder %v2991, %v3082
      %vm3408 = vcmp.lt.s32.totalorder %v2992, %v3082
      %vm3409 = vcmp.lt.s32.totalorder %v2993, %v3082
      %vm3410 = vcmp.lt.s32.totalorder %v2994, %v3082
      %vm3411 = vcmp.lt.s32.totalorder %v2995, %v3082
      %vm3412 = vcmp.lt.s32.totalorder %v2996, %v3082
      %vm3413 = vcmp.lt.s32.totalorder %v2981, %v3085
      %vm3414 = vcmp.lt.s32.totalorder %v2982, %v3085
      %vm3415 = vcmp.lt.s32.totalorder %v2983, %v3085
      %vm3416 = vcmp.lt.s32.totalorder %v2984, %v3085
      %vm3417 = vcmp.lt.s32.totalorder %v2985, %v3085
      %vm3418 = vcmp.lt.s32.totalorder %v2986, %v3085
      %vm3419 = vcmp.lt.s32.totalorder %v2987, %v3085
      %vm3420 = vcmp.lt.s32.totalorder %v2988, %v3085
      %vm3421 = vcmp.lt.s32.totalorder %v2989, %v3085
      %vm3422 = vcmp.lt.s32.totalorder %v2990, %v3085
      %vm3423 = vcmp.lt.s32.totalorder %v2991, %v3085
      %vm3424 = vcmp.lt.s32.totalorder %v2992, %v3085
      %vm3425 = vcmp.lt.s32.totalorder %v2993, %v3085
      %vm3426 = vcmp.lt.s32.totalorder %v2994, %v3085
      %vm3427 = vcmp.lt.s32.totalorder %v2995, %v3085
      %vm3428 = vcmp.lt.s32.totalorder %v2996, %v3085
      %vm3429 = vcmp.lt.s32.totalorder %v2981, %v3088
      %vm3430 = vcmp.lt.s32.totalorder %v2982, %v3088
      %vm3431 = vcmp.lt.s32.totalorder %v2983, %v3088
      %vm3432 = vcmp.lt.s32.totalorder %v2984, %v3088
      %vm3433 = vcmp.lt.s32.totalorder %v2985, %v3088
      %vm3434 = vcmp.lt.s32.totalorder %v2986, %v3088
      %vm3435 = vcmp.lt.s32.totalorder %v2987, %v3088
      %vm3436 = vcmp.lt.s32.totalorder %v2988, %v3088
      %vm3437 = vcmp.lt.s32.totalorder %v2989, %v3088
      %vm3438 = vcmp.lt.s32.totalorder %v2990, %v3088
      %vm3439 = vcmp.lt.s32.totalorder %v2991, %v3088
      %vm3440 = vcmp.lt.s32.totalorder %v2992, %v3088
      %vm3441 = vcmp.lt.s32.totalorder %v2993, %v3088
      %vm3442 = vcmp.lt.s32.totalorder %v2994, %v3088
      %vm3443 = vcmp.lt.s32.totalorder %v2995, %v3088
      %vm3444 = vcmp.lt.s32.totalorder %v2996, %v3088
      %vm3445 = vcmp.lt.s32.totalorder %v2981, %v3091
      %vm3446 = vcmp.lt.s32.totalorder %v2982, %v3091
      %vm3447 = vcmp.lt.s32.totalorder %v2983, %v3091
      %vm3448 = vcmp.lt.s32.totalorder %v2984, %v3091
      %vm3449 = vcmp.lt.s32.totalorder %v2985, %v3091
      %vm3450 = vcmp.lt.s32.totalorder %v2986, %v3091
      %vm3451 = vcmp.lt.s32.totalorder %v2987, %v3091
      %vm3452 = vcmp.lt.s32.totalorder %v2988, %v3091
      %vm3453 = vcmp.lt.s32.totalorder %v2989, %v3091
      %vm3454 = vcmp.lt.s32.totalorder %v2990, %v3091
      %vm3455 = vcmp.lt.s32.totalorder %v2991, %v3091
      %vm3456 = vcmp.lt.s32.totalorder %v2992, %v3091
      %vm3457 = vcmp.lt.s32.totalorder %v2993, %v3091
      %vm3458 = vcmp.lt.s32.totalorder %v2994, %v3091
      %vm3459 = vcmp.lt.s32.totalorder %v2995, %v3091
      %vm3460 = vcmp.lt.s32.totalorder %v2996, %v3091
      %vm3461 = vcmp.lt.s32.totalorder %v2981, %v3094
      %vm3462 = vcmp.lt.s32.totalorder %v2982, %v3094
      %vm3463 = vcmp.lt.s32.totalorder %v2983, %v3094
      %vm3464 = vcmp.lt.s32.totalorder %v2984, %v3094
      %vm3465 = vcmp.lt.s32.totalorder %v2985, %v3094
      %vm3466 = vcmp.lt.s32.totalorder %v2986, %v3094
      %vm3467 = vcmp.lt.s32.totalorder %v2987, %v3094
      %vm3468 = vcmp.lt.s32.totalorder %v2988, %v3094
      %vm3469 = vcmp.lt.s32.totalorder %v2989, %v3094
      %vm3470 = vcmp.lt.s32.totalorder %v2990, %v3094
      %vm3471 = vcmp.lt.s32.totalorder %v2991, %v3094
      %vm3472 = vcmp.lt.s32.totalorder %v2992, %v3094
      %vm3473 = vcmp.lt.s32.totalorder %v2993, %v3094
      %vm3474 = vcmp.lt.s32.totalorder %v2994, %v3094
      %vm3475 = vcmp.lt.s32.totalorder %v2995, %v3094
      %vm3476 = vcmp.lt.s32.totalorder %v2996, %v3094
      %vm3477 = vcmp.lt.s32.totalorder %v2981, %v3097
      %vm3478 = vcmp.lt.s32.totalorder %v2982, %v3097
      %vm3479 = vcmp.lt.s32.totalorder %v2983, %v3097
      %vm3480 = vcmp.lt.s32.totalorder %v2984, %v3097
      %vm3481 = vcmp.lt.s32.totalorder %v2985, %v3097
      %vm3482 = vcmp.lt.s32.totalorder %v2986, %v3097
      %vm3483 = vcmp.lt.s32.totalorder %v2987, %v3097
      %vm3484 = vcmp.lt.s32.totalorder %v2988, %v3097
      %vm3485 = vcmp.lt.s32.totalorder %v2989, %v3097
      %vm3486 = vcmp.lt.s32.totalorder %v2990, %v3097
      %vm3487 = vcmp.lt.s32.totalorder %v2991, %v3097
      %vm3488 = vcmp.lt.s32.totalorder %v2992, %v3097
      %vm3489 = vcmp.lt.s32.totalorder %v2993, %v3097
      %vm3490 = vcmp.lt.s32.totalorder %v2994, %v3097
      %vm3491 = vcmp.lt.s32.totalorder %v2995, %v3097
      %vm3492 = vcmp.lt.s32.totalorder %v2996, %v3097
      %vm3493 = vcmp.lt.s32.totalorder %v2981, %v3100
      %vm3494 = vcmp.lt.s32.totalorder %v2982, %v3100
      %vm3495 = vcmp.lt.s32.totalorder %v2983, %v3100
      %vm3496 = vcmp.lt.s32.totalorder %v2984, %v3100
      %vm3497 = vcmp.lt.s32.totalorder %v2985, %v3100
      %vm3498 = vcmp.lt.s32.totalorder %v2986, %v3100
      %vm3499 = vcmp.lt.s32.totalorder %v2987, %v3100
      %vm3500 = vcmp.lt.s32.totalorder %v2988, %v3100
      %vm3501 = vcmp.lt.s32.totalorder %v2989, %v3100
      %vm3502 = vcmp.lt.s32.totalorder %v2990, %v3100
      %vm3503 = vcmp.lt.s32.totalorder %v2991, %v3100
      %vm3504 = vcmp.lt.s32.totalorder %v2992, %v3100
      %vm3505 = vcmp.lt.s32.totalorder %v2993, %v3100
      %vm3506 = vcmp.lt.s32.totalorder %v2994, %v3100
      %vm3507 = vcmp.lt.s32.totalorder %v2995, %v3100
      %vm3508 = vcmp.lt.s32.totalorder %v2996, %v3100
      %vm3509 = vcmp.lt.s32.totalorder %v2981, %v3103
      %vm3510 = vcmp.lt.s32.totalorder %v2982, %v3103
      %vm3511 = vcmp.lt.s32.totalorder %v2983, %v3103
      %vm3512 = vcmp.lt.s32.totalorder %v2984, %v3103
      %vm3513 = vcmp.lt.s32.totalorder %v2985, %v3103
      %vm3514 = vcmp.lt.s32.totalorder %v2986, %v3103
      %vm3515 = vcmp.lt.s32.totalorder %v2987, %v3103
      %vm3516 = vcmp.lt.s32.totalorder %v2988, %v3103
      %vm3517 = vcmp.lt.s32.totalorder %v2989, %v3103
      %vm3518 = vcmp.lt.s32.totalorder %v2990, %v3103
      %vm3519 = vcmp.lt.s32.totalorder %v2991, %v3103
      %vm3520 = vcmp.lt.s32.totalorder %v2992, %v3103
      %vm3521 = vcmp.lt.s32.totalorder %v2993, %v3103
      %vm3522 = vcmp.lt.s32.totalorder %v2994, %v3103
      %vm3523 = vcmp.lt.s32.totalorder %v2995, %v3103
      %vm3524 = vcmp.lt.s32.totalorder %v2996, %v3103
      %vm3525 = vcmp.lt.s32.totalorder %v2981, %v3106
      %vm3526 = vcmp.lt.s32.totalorder %v2982, %v3106
      %vm3527 = vcmp.lt.s32.totalorder %v2983, %v3106
      %vm3528 = vcmp.lt.s32.totalorder %v2984, %v3106
      %vm3529 = vcmp.lt.s32.totalorder %v2985, %v3106
      %vm3530 = vcmp.lt.s32.totalorder %v2986, %v3106
      %vm3531 = vcmp.lt.s32.totalorder %v2987, %v3106
      %vm3532 = vcmp.lt.s32.totalorder %v2988, %v3106
      %vm3533 = vcmp.lt.s32.totalorder %v2989, %v3106
      %vm3534 = vcmp.lt.s32.totalorder %v2990, %v3106
      %vm3535 = vcmp.lt.s32.totalorder %v2991, %v3106
      %vm3536 = vcmp.lt.s32.totalorder %v2992, %v3106
      %vm3537 = vcmp.lt.s32.totalorder %v2993, %v3106
      %vm3538 = vcmp.lt.s32.totalorder %v2994, %v3106
      %vm3539 = vcmp.lt.s32.totalorder %v2995, %v3106
      %vm3540 = vcmp.lt.s32.totalorder %v2996, %v3106
      %vm3541 = vcmp.lt.s32.totalorder %v2981, %v3109
      %vm3542 = vcmp.lt.s32.totalorder %v2982, %v3109
      %vm3543 = vcmp.lt.s32.totalorder %v2983, %v3109
      %vm3544 = vcmp.lt.s32.totalorder %v2984, %v3109
      %vm3545 = vcmp.lt.s32.totalorder %v2985, %v3109
      %vm3546 = vcmp.lt.s32.totalorder %v2986, %v3109
      %vm3547 = vcmp.lt.s32.totalorder %v2987, %v3109
      %vm3548 = vcmp.lt.s32.totalorder %v2988, %v3109
      %vm3549 = vcmp.lt.s32.totalorder %v2989, %v3109
      %vm3550 = vcmp.lt.s32.totalorder %v2990, %v3109
      %vm3551 = vcmp.lt.s32.totalorder %v2991, %v3109
      %vm3552 = vcmp.lt.s32.totalorder %v2992, %v3109
      %vm3553 = vcmp.lt.s32.totalorder %v2993, %v3109
      %vm3554 = vcmp.lt.s32.totalorder %v2994, %v3109
      %vm3555 = vcmp.lt.s32.totalorder %v2995, %v3109
      %vm3556 = vcmp.lt.s32.totalorder %v2996, %v3109
      %vm3557 = vcmp.lt.s32.totalorder %v2981, %v3112
      %vm3558 = vcmp.lt.s32.totalorder %v2982, %v3112
      %vm3559 = vcmp.lt.s32.totalorder %v2983, %v3112
      %vm3560 = vcmp.lt.s32.totalorder %v2984, %v3112
      %vm3561 = vcmp.lt.s32.totalorder %v2985, %v3112
      %vm3562 = vcmp.lt.s32.totalorder %v2986, %v3112
      %vm3563 = vcmp.lt.s32.totalorder %v2987, %v3112
      %vm3564 = vcmp.lt.s32.totalorder %v2988, %v3112
      %vm3565 = vcmp.lt.s32.totalorder %v2989, %v3112
      %vm3566 = vcmp.lt.s32.totalorder %v2990, %v3112
      %vm3567 = vcmp.lt.s32.totalorder %v2991, %v3112
      %vm3568 = vcmp.lt.s32.totalorder %v2992, %v3112
      %vm3569 = vcmp.lt.s32.totalorder %v2993, %v3112
      %vm3570 = vcmp.lt.s32.totalorder %v2994, %v3112
      %vm3571 = vcmp.lt.s32.totalorder %v2995, %v3112
      %vm3572 = vcmp.lt.s32.totalorder %v2996, %v3112
      %vm3573 = vcmp.lt.s32.totalorder %v2981, %v3115
      %vm3574 = vcmp.lt.s32.totalorder %v2982, %v3115
      %vm3575 = vcmp.lt.s32.totalorder %v2983, %v3115
      %vm3576 = vcmp.lt.s32.totalorder %v2984, %v3115
      %vm3577 = vcmp.lt.s32.totalorder %v2985, %v3115
      %vm3578 = vcmp.lt.s32.totalorder %v2986, %v3115
      %vm3579 = vcmp.lt.s32.totalorder %v2987, %v3115
      %vm3580 = vcmp.lt.s32.totalorder %v2988, %v3115
      %vm3581 = vcmp.lt.s32.totalorder %v2989, %v3115
      %vm3582 = vcmp.lt.s32.totalorder %v2990, %v3115
      %vm3583 = vcmp.lt.s32.totalorder %v2991, %v3115
      %vm3584 = vcmp.lt.s32.totalorder %v2992, %v3115
      %vm3585 = vcmp.lt.s32.totalorder %v2993, %v3115
      %vm3586 = vcmp.lt.s32.totalorder %v2994, %v3115
      %vm3587 = vcmp.lt.s32.totalorder %v2995, %v3115
      %vm3588 = vcmp.lt.s32.totalorder %v2996, %v3115
      %vm3589 = vcmp.lt.s32.totalorder %v2981, %v3118
      %vm3590 = vcmp.lt.s32.totalorder %v2982, %v3118
      %vm3591 = vcmp.lt.s32.totalorder %v2983, %v3118
      %vm3592 = vcmp.lt.s32.totalorder %v2984, %v3118
      %vm3593 = vcmp.lt.s32.totalorder %v2985, %v3118
      %vm3594 = vcmp.lt.s32.totalorder %v2986, %v3118
      %vm3595 = vcmp.lt.s32.totalorder %v2987, %v3118
      %vm3596 = vcmp.lt.s32.totalorder %v2988, %v3118
      %vm3597 = vcmp.lt.s32.totalorder %v2989, %v3118
      %vm3598 = vcmp.lt.s32.totalorder %v2990, %v3118
      %vm3599 = vcmp.lt.s32.totalorder %v2991, %v3118
      %vm3600 = vcmp.lt.s32.totalorder %v2992, %v3118
      %vm3601 = vcmp.lt.s32.totalorder %v2993, %v3118
      %vm3602 = vcmp.lt.s32.totalorder %v2994, %v3118
      %vm3603 = vcmp.lt.s32.totalorder %v2995, %v3118
      %vm3604 = vcmp.lt.s32.totalorder %v2996, %v3118
      %vm3605 = vcmp.lt.s32.totalorder %v2981, %v3121
      %vm3606 = vcmp.lt.s32.totalorder %v2982, %v3121
      %vm3607 = vcmp.lt.s32.totalorder %v2983, %v3121
      %vm3608 = vcmp.lt.s32.totalorder %v2984, %v3121
      %vm3609 = vcmp.lt.s32.totalorder %v2985, %v3121
      %vm3610 = vcmp.lt.s32.totalorder %v2986, %v3121
      %vm3611 = vcmp.lt.s32.totalorder %v2987, %v3121
      %vm3612 = vcmp.lt.s32.totalorder %v2988, %v3121
      %vm3613 = vcmp.lt.s32.totalorder %v2989, %v3121
      %vm3614 = vcmp.lt.s32.totalorder %v2990, %v3121
      %vm3615 = vcmp.lt.s32.totalorder %v2991, %v3121
      %vm3616 = vcmp.lt.s32.totalorder %v2992, %v3121
      %vm3617 = vcmp.lt.s32.totalorder %v2993, %v3121
      %vm3618 = vcmp.lt.s32.totalorder %v2994, %v3121
      %vm3619 = vcmp.lt.s32.totalorder %v2995, %v3121
      %vm3620 = vcmp.lt.s32.totalorder %v2996, %v3121
      %vm3621 = vcmp.lt.s32.totalorder %v2981, %v3124
      %vm3622 = vcmp.lt.s32.totalorder %v2982, %v3124
      %vm3623 = vcmp.lt.s32.totalorder %v2983, %v3124
      %vm3624 = vcmp.lt.s32.totalorder %v2984, %v3124
      %vm3625 = vcmp.lt.s32.totalorder %v2985, %v3124
      %vm3626 = vcmp.lt.s32.totalorder %v2986, %v3124
      %vm3627 = vcmp.lt.s32.totalorder %v2987, %v3124
      %vm3628 = vcmp.lt.s32.totalorder %v2988, %v3124
      %vm3629 = vcmp.lt.s32.totalorder %v2989, %v3124
      %vm3630 = vcmp.lt.s32.totalorder %v2990, %v3124
      %vm3631 = vcmp.lt.s32.totalorder %v2991, %v3124
      %vm3632 = vcmp.lt.s32.totalorder %v2992, %v3124
      %vm3633 = vcmp.lt.s32.totalorder %v2993, %v3124
      %vm3634 = vcmp.lt.s32.totalorder %v2994, %v3124
      %vm3635 = vcmp.lt.s32.totalorder %v2995, %v3124
      %vm3636 = vcmp.lt.s32.totalorder %v2996, %v3124
      %v3637 = vsel %vm3125, %v1310, -1e+30
      %v3638 = vsel %vm3126, %v1312, -1e+30
      %v3639 = vsel %vm3127, %v1503, -1e+30
      %v3640 = vsel %vm3128, %v1505, -1e+30
      %v3641 = vsel %vm3129, %v1696, -1e+30
      %v3642 = vsel %vm3130, %v1698, -1e+30
      %v3643 = vsel %vm3131, %v1889, -1e+30
      %v3644 = vsel %vm3132, %v1891, -1e+30
      %v3645 = vsel %vm3133, %v2082, -1e+30
      %v3646 = vsel %vm3134, %v2084, -1e+30
      %v3647 = vsel %vm3135, %v2275, -1e+30
      %v3648 = vsel %vm3136, %v2277, -1e+30
      %v3649 = vsel %vm3137, %v2468, -1e+30
      %v3650 = vsel %vm3138, %v2470, -1e+30
      %v3651 = vsel %vm3139, %v2661, -1e+30
      %v3652 = vsel %vm3140, %v2663, -1e+30
      %v3653 = vsel %vm3141, %v1314, -1e+30
      %v3654 = vsel %vm3142, %v1316, -1e+30
      %v3655 = vsel %vm3143, %v1507, -1e+30
      %v3656 = vsel %vm3144, %v1509, -1e+30
      %v3657 = vsel %vm3145, %v1700, -1e+30
      %v3658 = vsel %vm3146, %v1702, -1e+30
      %v3659 = vsel %vm3147, %v1893, -1e+30
      %v3660 = vsel %vm3148, %v1895, -1e+30
      %v3661 = vsel %vm3149, %v2086, -1e+30
      %v3662 = vsel %vm3150, %v2088, -1e+30
      %v3663 = vsel %vm3151, %v2279, -1e+30
      %v3664 = vsel %vm3152, %v2281, -1e+30
      %v3665 = vsel %vm3153, %v2472, -1e+30
      %v3666 = vsel %vm3154, %v2474, -1e+30
      %v3667 = vsel %vm3155, %v2665, -1e+30
      %v3668 = vsel %vm3156, %v2667, -1e+30
      %v3669 = vsel %vm3157, %v1320, -1e+30
      %v3670 = vsel %vm3158, %v1322, -1e+30
      %v3671 = vsel %vm3159, %v1513, -1e+30
      %v3672 = vsel %vm3160, %v1515, -1e+30
      %v3673 = vsel %vm3161, %v1706, -1e+30
      %v3674 = vsel %vm3162, %v1708, -1e+30
      %v3675 = vsel %vm3163, %v1899, -1e+30
      %v3676 = vsel %vm3164, %v1901, -1e+30
      %v3677 = vsel %vm3165, %v2092, -1e+30
      %v3678 = vsel %vm3166, %v2094, -1e+30
      %v3679 = vsel %vm3167, %v2285, -1e+30
      %v3680 = vsel %vm3168, %v2287, -1e+30
      %v3681 = vsel %vm3169, %v2478, -1e+30
      %v3682 = vsel %vm3170, %v2480, -1e+30
      %v3683 = vsel %vm3171, %v2671, -1e+30
      %v3684 = vsel %vm3172, %v2673, -1e+30
      %v3685 = vsel %vm3173, %v1324, -1e+30
      %v3686 = vsel %vm3174, %v1326, -1e+30
      %v3687 = vsel %vm3175, %v1517, -1e+30
      %v3688 = vsel %vm3176, %v1519, -1e+30
      %v3689 = vsel %vm3177, %v1710, -1e+30
      %v3690 = vsel %vm3178, %v1712, -1e+30
      %v3691 = vsel %vm3179, %v1903, -1e+30
      %v3692 = vsel %vm3180, %v1905, -1e+30
      %v3693 = vsel %vm3181, %v2096, -1e+30
      %v3694 = vsel %vm3182, %v2098, -1e+30
      %v3695 = vsel %vm3183, %v2289, -1e+30
      %v3696 = vsel %vm3184, %v2291, -1e+30
      %v3697 = vsel %vm3185, %v2482, -1e+30
      %v3698 = vsel %vm3186, %v2484, -1e+30
      %v3699 = vsel %vm3187, %v2675, -1e+30
      %v3700 = vsel %vm3188, %v2677, -1e+30
      %v3701 = vsel %vm3189, %v1330, -1e+30
      %v3702 = vsel %vm3190, %v1332, -1e+30
      %v3703 = vsel %vm3191, %v1523, -1e+30
      %v3704 = vsel %vm3192, %v1525, -1e+30
      %v3705 = vsel %vm3193, %v1716, -1e+30
      %v3706 = vsel %vm3194, %v1718, -1e+30
      %v3707 = vsel %vm3195, %v1909, -1e+30
      %v3708 = vsel %vm3196, %v1911, -1e+30
      %v3709 = vsel %vm3197, %v2102, -1e+30
      %v3710 = vsel %vm3198, %v2104, -1e+30
      %v3711 = vsel %vm3199, %v2295, -1e+30
      %v3712 = vsel %vm3200, %v2297, -1e+30
      %v3713 = vsel %vm3201, %v2488, -1e+30
      %v3714 = vsel %vm3202, %v2490, -1e+30
      %v3715 = vsel %vm3203, %v2681, -1e+30
      %v3716 = vsel %vm3204, %v2683, -1e+30
      %v3717 = vsel %vm3205, %v1334, -1e+30
      %v3718 = vsel %vm3206, %v1336, -1e+30
      %v3719 = vsel %vm3207, %v1527, -1e+30
      %v3720 = vsel %vm3208, %v1529, -1e+30
      %v3721 = vsel %vm3209, %v1720, -1e+30
      %v3722 = vsel %vm3210, %v1722, -1e+30
      %v3723 = vsel %vm3211, %v1913, -1e+30
      %v3724 = vsel %vm3212, %v1915, -1e+30
      %v3725 = vsel %vm3213, %v2106, -1e+30
      %v3726 = vsel %vm3214, %v2108, -1e+30
      %v3727 = vsel %vm3215, %v2299, -1e+30
      %v3728 = vsel %vm3216, %v2301, -1e+30
      %v3729 = vsel %vm3217, %v2492, -1e+30
      %v3730 = vsel %vm3218, %v2494, -1e+30
      %v3731 = vsel %vm3219, %v2685, -1e+30
      %v3732 = vsel %vm3220, %v2687, -1e+30
      %v3733 = vsel %vm3221, %v1340, -1e+30
      %v3734 = vsel %vm3222, %v1342, -1e+30
      %v3735 = vsel %vm3223, %v1533, -1e+30
      %v3736 = vsel %vm3224, %v1535, -1e+30
      %v3737 = vsel %vm3225, %v1726, -1e+30
      %v3738 = vsel %vm3226, %v1728, -1e+30
      %v3739 = vsel %vm3227, %v1919, -1e+30
      %v3740 = vsel %vm3228, %v1921, -1e+30
      %v3741 = vsel %vm3229, %v2112, -1e+30
      %v3742 = vsel %vm3230, %v2114, -1e+30
      %v3743 = vsel %vm3231, %v2305, -1e+30
      %v3744 = vsel %vm3232, %v2307, -1e+30
      %v3745 = vsel %vm3233, %v2498, -1e+30
      %v3746 = vsel %vm3234, %v2500, -1e+30
      %v3747 = vsel %vm3235, %v2691, -1e+30
      %v3748 = vsel %vm3236, %v2693, -1e+30
      %v3749 = vsel %vm3237, %v1344, -1e+30
      %v3750 = vsel %vm3238, %v1346, -1e+30
      %v3751 = vsel %vm3239, %v1537, -1e+30
      %v3752 = vsel %vm3240, %v1539, -1e+30
      %v3753 = vsel %vm3241, %v1730, -1e+30
      %v3754 = vsel %vm3242, %v1732, -1e+30
      %v3755 = vsel %vm3243, %v1923, -1e+30
      %v3756 = vsel %vm3244, %v1925, -1e+30
      %v3757 = vsel %vm3245, %v2116, -1e+30
      %v3758 = vsel %vm3246, %v2118, -1e+30
      %v3759 = vsel %vm3247, %v2309, -1e+30
      %v3760 = vsel %vm3248, %v2311, -1e+30
      %v3761 = vsel %vm3249, %v2502, -1e+30
      %v3762 = vsel %vm3250, %v2504, -1e+30
      %v3763 = vsel %vm3251, %v2695, -1e+30
      %v3764 = vsel %vm3252, %v2697, -1e+30
      %v3765 = vsel %vm3253, %v1350, -1e+30
      %v3766 = vsel %vm3254, %v1352, -1e+30
      %v3767 = vsel %vm3255, %v1543, -1e+30
      %v3768 = vsel %vm3256, %v1545, -1e+30
      %v3769 = vsel %vm3257, %v1736, -1e+30
      %v3770 = vsel %vm3258, %v1738, -1e+30
      %v3771 = vsel %vm3259, %v1929, -1e+30
      %v3772 = vsel %vm3260, %v1931, -1e+30
      %v3773 = vsel %vm3261, %v2122, -1e+30
      %v3774 = vsel %vm3262, %v2124, -1e+30
      %v3775 = vsel %vm3263, %v2315, -1e+30
      %v3776 = vsel %vm3264, %v2317, -1e+30
      %v3777 = vsel %vm3265, %v2508, -1e+30
      %v3778 = vsel %vm3266, %v2510, -1e+30
      %v3779 = vsel %vm3267, %v2701, -1e+30
      %v3780 = vsel %vm3268, %v2703, -1e+30
      %v3781 = vsel %vm3269, %v1354, -1e+30
      %v3782 = vsel %vm3270, %v1356, -1e+30
      %v3783 = vsel %vm3271, %v1547, -1e+30
      %v3784 = vsel %vm3272, %v1549, -1e+30
      %v3785 = vsel %vm3273, %v1740, -1e+30
      %v3786 = vsel %vm3274, %v1742, -1e+30
      %v3787 = vsel %vm3275, %v1933, -1e+30
      %v3788 = vsel %vm3276, %v1935, -1e+30
      %v3789 = vsel %vm3277, %v2126, -1e+30
      %v3790 = vsel %vm3278, %v2128, -1e+30
      %v3791 = vsel %vm3279, %v2319, -1e+30
      %v3792 = vsel %vm3280, %v2321, -1e+30
      %v3793 = vsel %vm3281, %v2512, -1e+30
      %v3794 = vsel %vm3282, %v2514, -1e+30
      %v3795 = vsel %vm3283, %v2705, -1e+30
      %v3796 = vsel %vm3284, %v2707, -1e+30
      %v3797 = vsel %vm3285, %v1360, -1e+30
      %v3798 = vsel %vm3286, %v1362, -1e+30
      %v3799 = vsel %vm3287, %v1553, -1e+30
      %v3800 = vsel %vm3288, %v1555, -1e+30
      %v3801 = vsel %vm3289, %v1746, -1e+30
      %v3802 = vsel %vm3290, %v1748, -1e+30
      %v3803 = vsel %vm3291, %v1939, -1e+30
      %v3804 = vsel %vm3292, %v1941, -1e+30
      %v3805 = vsel %vm3293, %v2132, -1e+30
      %v3806 = vsel %vm3294, %v2134, -1e+30
      %v3807 = vsel %vm3295, %v2325, -1e+30
      %v3808 = vsel %vm3296, %v2327, -1e+30
      %v3809 = vsel %vm3297, %v2518, -1e+30
      %v3810 = vsel %vm3298, %v2520, -1e+30
      %v3811 = vsel %vm3299, %v2711, -1e+30
      %v3812 = vsel %vm3300, %v2713, -1e+30
      %v3813 = vsel %vm3301, %v1364, -1e+30
      %v3814 = vsel %vm3302, %v1366, -1e+30
      %v3815 = vsel %vm3303, %v1557, -1e+30
      %v3816 = vsel %vm3304, %v1559, -1e+30
      %v3817 = vsel %vm3305, %v1750, -1e+30
      %v3818 = vsel %vm3306, %v1752, -1e+30
      %v3819 = vsel %vm3307, %v1943, -1e+30
      %v3820 = vsel %vm3308, %v1945, -1e+30
      %v3821 = vsel %vm3309, %v2136, -1e+30
      %v3822 = vsel %vm3310, %v2138, -1e+30
      %v3823 = vsel %vm3311, %v2329, -1e+30
      %v3824 = vsel %vm3312, %v2331, -1e+30
      %v3825 = vsel %vm3313, %v2522, -1e+30
      %v3826 = vsel %vm3314, %v2524, -1e+30
      %v3827 = vsel %vm3315, %v2715, -1e+30
      %v3828 = vsel %vm3316, %v2717, -1e+30
      %v3829 = vsel %vm3317, %v1370, -1e+30
      %v3830 = vsel %vm3318, %v1372, -1e+30
      %v3831 = vsel %vm3319, %v1563, -1e+30
      %v3832 = vsel %vm3320, %v1565, -1e+30
      %v3833 = vsel %vm3321, %v1756, -1e+30
      %v3834 = vsel %vm3322, %v1758, -1e+30
      %v3835 = vsel %vm3323, %v1949, -1e+30
      %v3836 = vsel %vm3324, %v1951, -1e+30
      %v3837 = vsel %vm3325, %v2142, -1e+30
      %v3838 = vsel %vm3326, %v2144, -1e+30
      %v3839 = vsel %vm3327, %v2335, -1e+30
      %v3840 = vsel %vm3328, %v2337, -1e+30
      %v3841 = vsel %vm3329, %v2528, -1e+30
      %v3842 = vsel %vm3330, %v2530, -1e+30
      %v3843 = vsel %vm3331, %v2721, -1e+30
      %v3844 = vsel %vm3332, %v2723, -1e+30
      %v3845 = vsel %vm3333, %v1374, -1e+30
      %v3846 = vsel %vm3334, %v1376, -1e+30
      %v3847 = vsel %vm3335, %v1567, -1e+30
      %v3848 = vsel %vm3336, %v1569, -1e+30
      %v3849 = vsel %vm3337, %v1760, -1e+30
      %v3850 = vsel %vm3338, %v1762, -1e+30
      %v3851 = vsel %vm3339, %v1953, -1e+30
      %v3852 = vsel %vm3340, %v1955, -1e+30
      %v3853 = vsel %vm3341, %v2146, -1e+30
      %v3854 = vsel %vm3342, %v2148, -1e+30
      %v3855 = vsel %vm3343, %v2339, -1e+30
      %v3856 = vsel %vm3344, %v2341, -1e+30
      %v3857 = vsel %vm3345, %v2532, -1e+30
      %v3858 = vsel %vm3346, %v2534, -1e+30
      %v3859 = vsel %vm3347, %v2725, -1e+30
      %v3860 = vsel %vm3348, %v2727, -1e+30
      %v3861 = vsel %vm3349, %v1380, -1e+30
      %v3862 = vsel %vm3350, %v1382, -1e+30
      %v3863 = vsel %vm3351, %v1573, -1e+30
      %v3864 = vsel %vm3352, %v1575, -1e+30
      %v3865 = vsel %vm3353, %v1766, -1e+30
      %v3866 = vsel %vm3354, %v1768, -1e+30
      %v3867 = vsel %vm3355, %v1959, -1e+30
      %v3868 = vsel %vm3356, %v1961, -1e+30
      %v3869 = vsel %vm3357, %v2152, -1e+30
      %v3870 = vsel %vm3358, %v2154, -1e+30
      %v3871 = vsel %vm3359, %v2345, -1e+30
      %v3872 = vsel %vm3360, %v2347, -1e+30
      %v3873 = vsel %vm3361, %v2538, -1e+30
      %v3874 = vsel %vm3362, %v2540, -1e+30
      %v3875 = vsel %vm3363, %v2731, -1e+30
      %v3876 = vsel %vm3364, %v2733, -1e+30
      %v3877 = vsel %vm3365, %v1384, -1e+30
      %v3878 = vsel %vm3366, %v1386, -1e+30
      %v3879 = vsel %vm3367, %v1577, -1e+30
      %v3880 = vsel %vm3368, %v1579, -1e+30
      %v3881 = vsel %vm3369, %v1770, -1e+30
      %v3882 = vsel %vm3370, %v1772, -1e+30
      %v3883 = vsel %vm3371, %v1963, -1e+30
      %v3884 = vsel %vm3372, %v1965, -1e+30
      %v3885 = vsel %vm3373, %v2156, -1e+30
      %v3886 = vsel %vm3374, %v2158, -1e+30
      %v3887 = vsel %vm3375, %v2349, -1e+30
      %v3888 = vsel %vm3376, %v2351, -1e+30
      %v3889 = vsel %vm3377, %v2542, -1e+30
      %v3890 = vsel %vm3378, %v2544, -1e+30
      %v3891 = vsel %vm3379, %v2735, -1e+30
      %v3892 = vsel %vm3380, %v2737, -1e+30
      %v3893 = vsel %vm3381, %v1390, -1e+30
      %v3894 = vsel %vm3382, %v1392, -1e+30
      %v3895 = vsel %vm3383, %v1583, -1e+30
      %v3896 = vsel %vm3384, %v1585, -1e+30
      %v3897 = vsel %vm3385, %v1776, -1e+30
      %v3898 = vsel %vm3386, %v1778, -1e+30
      %v3899 = vsel %vm3387, %v1969, -1e+30
      %v3900 = vsel %vm3388, %v1971, -1e+30
      %v3901 = vsel %vm3389, %v2162, -1e+30
      %v3902 = vsel %vm3390, %v2164, -1e+30
      %v3903 = vsel %vm3391, %v2355, -1e+30
      %v3904 = vsel %vm3392, %v2357, -1e+30
      %v3905 = vsel %vm3393, %v2548, -1e+30
      %v3906 = vsel %vm3394, %v2550, -1e+30
      %v3907 = vsel %vm3395, %v2741, -1e+30
      %v3908 = vsel %vm3396, %v2743, -1e+30
      %v3909 = vsel %vm3397, %v1394, -1e+30
      %v3910 = vsel %vm3398, %v1396, -1e+30
      %v3911 = vsel %vm3399, %v1587, -1e+30
      %v3912 = vsel %vm3400, %v1589, -1e+30
      %v3913 = vsel %vm3401, %v1780, -1e+30
      %v3914 = vsel %vm3402, %v1782, -1e+30
      %v3915 = vsel %vm3403, %v1973, -1e+30
      %v3916 = vsel %vm3404, %v1975, -1e+30
      %v3917 = vsel %vm3405, %v2166, -1e+30
      %v3918 = vsel %vm3406, %v2168, -1e+30
      %v3919 = vsel %vm3407, %v2359, -1e+30
      %v3920 = vsel %vm3408, %v2361, -1e+30
      %v3921 = vsel %vm3409, %v2552, -1e+30
      %v3922 = vsel %vm3410, %v2554, -1e+30
      %v3923 = vsel %vm3411, %v2745, -1e+30
      %v3924 = vsel %vm3412, %v2747, -1e+30
      %v3925 = vsel %vm3413, %v1400, -1e+30
      %v3926 = vsel %vm3414, %v1402, -1e+30
      %v3927 = vsel %vm3415, %v1593, -1e+30
      %v3928 = vsel %vm3416, %v1595, -1e+30
      %v3929 = vsel %vm3417, %v1786, -1e+30
      %v3930 = vsel %vm3418, %v1788, -1e+30
      %v3931 = vsel %vm3419, %v1979, -1e+30
      %v3932 = vsel %vm3420, %v1981, -1e+30
      %v3933 = vsel %vm3421, %v2172, -1e+30
      %v3934 = vsel %vm3422, %v2174, -1e+30
      %v3935 = vsel %vm3423, %v2365, -1e+30
      %v3936 = vsel %vm3424, %v2367, -1e+30
      %v3937 = vsel %vm3425, %v2558, -1e+30
      %v3938 = vsel %vm3426, %v2560, -1e+30
      %v3939 = vsel %vm3427, %v2751, -1e+30
      %v3940 = vsel %vm3428, %v2753, -1e+30
      %v3941 = vsel %vm3429, %v1404, -1e+30
      %v3942 = vsel %vm3430, %v1406, -1e+30
      %v3943 = vsel %vm3431, %v1597, -1e+30
      %v3944 = vsel %vm3432, %v1599, -1e+30
      %v3945 = vsel %vm3433, %v1790, -1e+30
      %v3946 = vsel %vm3434, %v1792, -1e+30
      %v3947 = vsel %vm3435, %v1983, -1e+30
      %v3948 = vsel %vm3436, %v1985, -1e+30
      %v3949 = vsel %vm3437, %v2176, -1e+30
      %v3950 = vsel %vm3438, %v2178, -1e+30
      %v3951 = vsel %vm3439, %v2369, -1e+30
      %v3952 = vsel %vm3440, %v2371, -1e+30
      %v3953 = vsel %vm3441, %v2562, -1e+30
      %v3954 = vsel %vm3442, %v2564, -1e+30
      %v3955 = vsel %vm3443, %v2755, -1e+30
      %v3956 = vsel %vm3444, %v2757, -1e+30
      %v3957 = vsel %vm3445, %v1410, -1e+30
      %v3958 = vsel %vm3446, %v1412, -1e+30
      %v3959 = vsel %vm3447, %v1603, -1e+30
      %v3960 = vsel %vm3448, %v1605, -1e+30
      %v3961 = vsel %vm3449, %v1796, -1e+30
      %v3962 = vsel %vm3450, %v1798, -1e+30
      %v3963 = vsel %vm3451, %v1989, -1e+30
      %v3964 = vsel %vm3452, %v1991, -1e+30
      %v3965 = vsel %vm3453, %v2182, -1e+30
      %v3966 = vsel %vm3454, %v2184, -1e+30
      %v3967 = vsel %vm3455, %v2375, -1e+30
      %v3968 = vsel %vm3456, %v2377, -1e+30
      %v3969 = vsel %vm3457, %v2568, -1e+30
      %v3970 = vsel %vm3458, %v2570, -1e+30
      %v3971 = vsel %vm3459, %v2761, -1e+30
      %v3972 = vsel %vm3460, %v2763, -1e+30
      %v3973 = vsel %vm3461, %v1414, -1e+30
      %v3974 = vsel %vm3462, %v1416, -1e+30
      %v3975 = vsel %vm3463, %v1607, -1e+30
      %v3976 = vsel %vm3464, %v1609, -1e+30
      %v3977 = vsel %vm3465, %v1800, -1e+30
      %v3978 = vsel %vm3466, %v1802, -1e+30
      %v3979 = vsel %vm3467, %v1993, -1e+30
      %v3980 = vsel %vm3468, %v1995, -1e+30
      %v3981 = vsel %vm3469, %v2186, -1e+30
      %v3982 = vsel %vm3470, %v2188, -1e+30
      %v3983 = vsel %vm3471, %v2379, -1e+30
      %v3984 = vsel %vm3472, %v2381, -1e+30
      %v3985 = vsel %vm3473, %v2572, -1e+30
      %v3986 = vsel %vm3474, %v2574, -1e+30
      %v3987 = vsel %vm3475, %v2765, -1e+30
      %v3988 = vsel %vm3476, %v2767, -1e+30
      %v3989 = vsel %vm3477, %v1420, -1e+30
      %v3990 = vsel %vm3478, %v1422, -1e+30
      %v3991 = vsel %vm3479, %v1613, -1e+30
      %v3992 = vsel %vm3480, %v1615, -1e+30
      %v3993 = vsel %vm3481, %v1806, -1e+30
      %v3994 = vsel %vm3482, %v1808, -1e+30
      %v3995 = vsel %vm3483, %v1999, -1e+30
      %v3996 = vsel %vm3484, %v2001, -1e+30
      %v3997 = vsel %vm3485, %v2192, -1e+30
      %v3998 = vsel %vm3486, %v2194, -1e+30
      %v3999 = vsel %vm3487, %v2385, -1e+30
      %v4000 = vsel %vm3488, %v2387, -1e+30
      %v4001 = vsel %vm3489, %v2578, -1e+30
      %v4002 = vsel %vm3490, %v2580, -1e+30
      %v4003 = vsel %vm3491, %v2771, -1e+30
      %v4004 = vsel %vm3492, %v2773, -1e+30
      %v4005 = vsel %vm3493, %v1424, -1e+30
      %v4006 = vsel %vm3494, %v1426, -1e+30
      %v4007 = vsel %vm3495, %v1617, -1e+30
      %v4008 = vsel %vm3496, %v1619, -1e+30
      %v4009 = vsel %vm3497, %v1810, -1e+30
      %v4010 = vsel %vm3498, %v1812, -1e+30
      %v4011 = vsel %vm3499, %v2003, -1e+30
      %v4012 = vsel %vm3500, %v2005, -1e+30
      %v4013 = vsel %vm3501, %v2196, -1e+30
      %v4014 = vsel %vm3502, %v2198, -1e+30
      %v4015 = vsel %vm3503, %v2389, -1e+30
      %v4016 = vsel %vm3504, %v2391, -1e+30
      %v4017 = vsel %vm3505, %v2582, -1e+30
      %v4018 = vsel %vm3506, %v2584, -1e+30
      %v4019 = vsel %vm3507, %v2775, -1e+30
      %v4020 = vsel %vm3508, %v2777, -1e+30
      %v4021 = vsel %vm3509, %v1430, -1e+30
      %v4022 = vsel %vm3510, %v1432, -1e+30
      %v4023 = vsel %vm3511, %v1623, -1e+30
      %v4024 = vsel %vm3512, %v1625, -1e+30
      %v4025 = vsel %vm3513, %v1816, -1e+30
      %v4026 = vsel %vm3514, %v1818, -1e+30
      %v4027 = vsel %vm3515, %v2009, -1e+30
      %v4028 = vsel %vm3516, %v2011, -1e+30
      %v4029 = vsel %vm3517, %v2202, -1e+30
      %v4030 = vsel %vm3518, %v2204, -1e+30
      %v4031 = vsel %vm3519, %v2395, -1e+30
      %v4032 = vsel %vm3520, %v2397, -1e+30
      %v4033 = vsel %vm3521, %v2588, -1e+30
      %v4034 = vsel %vm3522, %v2590, -1e+30
      %v4035 = vsel %vm3523, %v2781, -1e+30
      %v4036 = vsel %vm3524, %v2783, -1e+30
      %v4037 = vsel %vm3525, %v1434, -1e+30
      %v4038 = vsel %vm3526, %v1436, -1e+30
      %v4039 = vsel %vm3527, %v1627, -1e+30
      %v4040 = vsel %vm3528, %v1629, -1e+30
      %v4041 = vsel %vm3529, %v1820, -1e+30
      %v4042 = vsel %vm3530, %v1822, -1e+30
      %v4043 = vsel %vm3531, %v2013, -1e+30
      %v4044 = vsel %vm3532, %v2015, -1e+30
      %v4045 = vsel %vm3533, %v2206, -1e+30
      %v4046 = vsel %vm3534, %v2208, -1e+30
      %v4047 = vsel %vm3535, %v2399, -1e+30
      %v4048 = vsel %vm3536, %v2401, -1e+30
      %v4049 = vsel %vm3537, %v2592, -1e+30
      %v4050 = vsel %vm3538, %v2594, -1e+30
      %v4051 = vsel %vm3539, %v2785, -1e+30
      %v4052 = vsel %vm3540, %v2787, -1e+30
      %v4053 = vsel %vm3541, %v1440, -1e+30
      %v4054 = vsel %vm3542, %v1442, -1e+30
      %v4055 = vsel %vm3543, %v1633, -1e+30
      %v4056 = vsel %vm3544, %v1635, -1e+30
      %v4057 = vsel %vm3545, %v1826, -1e+30
      %v4058 = vsel %vm3546, %v1828, -1e+30
      %v4059 = vsel %vm3547, %v2019, -1e+30
      %v4060 = vsel %vm3548, %v2021, -1e+30
      %v4061 = vsel %vm3549, %v2212, -1e+30
      %v4062 = vsel %vm3550, %v2214, -1e+30
      %v4063 = vsel %vm3551, %v2405, -1e+30
      %v4064 = vsel %vm3552, %v2407, -1e+30
      %v4065 = vsel %vm3553, %v2598, -1e+30
      %v4066 = vsel %vm3554, %v2600, -1e+30
      %v4067 = vsel %vm3555, %v2791, -1e+30
      %v4068 = vsel %vm3556, %v2793, -1e+30
      %v4069 = vsel %vm3557, %v1444, -1e+30
      %v4070 = vsel %vm3558, %v1446, -1e+30
      %v4071 = vsel %vm3559, %v1637, -1e+30
      %v4072 = vsel %vm3560, %v1639, -1e+30
      %v4073 = vsel %vm3561, %v1830, -1e+30
      %v4074 = vsel %vm3562, %v1832, -1e+30
      %v4075 = vsel %vm3563, %v2023, -1e+30
      %v4076 = vsel %vm3564, %v2025, -1e+30
      %v4077 = vsel %vm3565, %v2216, -1e+30
      %v4078 = vsel %vm3566, %v2218, -1e+30
      %v4079 = vsel %vm3567, %v2409, -1e+30
      %v4080 = vsel %vm3568, %v2411, -1e+30
      %v4081 = vsel %vm3569, %v2602, -1e+30
      %v4082 = vsel %vm3570, %v2604, -1e+30
      %v4083 = vsel %vm3571, %v2795, -1e+30
      %v4084 = vsel %vm3572, %v2797, -1e+30
      %v4085 = vsel %vm3573, %v1450, -1e+30
      %v4086 = vsel %vm3574, %v1452, -1e+30
      %v4087 = vsel %vm3575, %v1643, -1e+30
      %v4088 = vsel %vm3576, %v1645, -1e+30
      %v4089 = vsel %vm3577, %v1836, -1e+30
      %v4090 = vsel %vm3578, %v1838, -1e+30
      %v4091 = vsel %vm3579, %v2029, -1e+30
      %v4092 = vsel %vm3580, %v2031, -1e+30
      %v4093 = vsel %vm3581, %v2222, -1e+30
      %v4094 = vsel %vm3582, %v2224, -1e+30
      %v4095 = vsel %vm3583, %v2415, -1e+30
      %v4096 = vsel %vm3584, %v2417, -1e+30
      %v4097 = vsel %vm3585, %v2608, -1e+30
      %v4098 = vsel %vm3586, %v2610, -1e+30
      %v4099 = vsel %vm3587, %v2801, -1e+30
      %v4100 = vsel %vm3588, %v2803, -1e+30
      %v4101 = vsel %vm3589, %v1454, -1e+30
      %v4102 = vsel %vm3590, %v1456, -1e+30
      %v4103 = vsel %vm3591, %v1647, -1e+30
      %v4104 = vsel %vm3592, %v1649, -1e+30
      %v4105 = vsel %vm3593, %v1840, -1e+30
      %v4106 = vsel %vm3594, %v1842, -1e+30
      %v4107 = vsel %vm3595, %v2033, -1e+30
      %v4108 = vsel %vm3596, %v2035, -1e+30
      %v4109 = vsel %vm3597, %v2226, -1e+30
      %v4110 = vsel %vm3598, %v2228, -1e+30
      %v4111 = vsel %vm3599, %v2419, -1e+30
      %v4112 = vsel %vm3600, %v2421, -1e+30
      %v4113 = vsel %vm3601, %v2612, -1e+30
      %v4114 = vsel %vm3602, %v2614, -1e+30
      %v4115 = vsel %vm3603, %v2805, -1e+30
      %v4116 = vsel %vm3604, %v2807, -1e+30
      %v4117 = vsel %vm3605, %v1460, -1e+30
      %v4118 = vsel %vm3606, %v1462, -1e+30
      %v4119 = vsel %vm3607, %v1653, -1e+30
      %v4120 = vsel %vm3608, %v1655, -1e+30
      %v4121 = vsel %vm3609, %v1846, -1e+30
      %v4122 = vsel %vm3610, %v1848, -1e+30
      %v4123 = vsel %vm3611, %v2039, -1e+30
      %v4124 = vsel %vm3612, %v2041, -1e+30
      %v4125 = vsel %vm3613, %v2232, -1e+30
      %v4126 = vsel %vm3614, %v2234, -1e+30
      %v4127 = vsel %vm3615, %v2425, -1e+30
      %v4128 = vsel %vm3616, %v2427, -1e+30
      %v4129 = vsel %vm3617, %v2618, -1e+30
      %v4130 = vsel %vm3618, %v2620, -1e+30
      %v4131 = vsel %vm3619, %v2811, -1e+30
      %v4132 = vsel %vm3620, %v2813, -1e+30
      %v4133 = vsel %vm3621, %v1464, -1e+30
      %v4134 = vsel %vm3622, %v1466, -1e+30
      %v4135 = vsel %vm3623, %v1657, -1e+30
      %v4136 = vsel %vm3624, %v1659, -1e+30
      %v4137 = vsel %vm3625, %v1850, -1e+30
      %v4138 = vsel %vm3626, %v1852, -1e+30
      %v4139 = vsel %vm3627, %v2043, -1e+30
      %v4140 = vsel %vm3628, %v2045, -1e+30
      %v4141 = vsel %vm3629, %v2236, -1e+30
      %v4142 = vsel %vm3630, %v2238, -1e+30
      %v4143 = vsel %vm3631, %v2429, -1e+30
      %v4144 = vsel %vm3632, %v2431, -1e+30
      %v4145 = vsel %vm3633, %v2622, -1e+30
      %v4146 = vsel %vm3634, %v2624, -1e+30
      %v4147 = vsel %vm3635, %v2815, -1e+30
      %v4148 = vsel %vm3636, %v2817, -1e+30
      %v4149 = vmax.f32 %v3637, %v3645
      %v4150 = vmax.f32 %v3638, %v3646
      %v4151 = vmax.f32 %v3639, %v3647
      %v4152 = vmax.f32 %v3640, %v3648
      %v4153 = vmax.f32 %v3641, %v3649
      %v4154 = vmax.f32 %v3642, %v3650
      %v4155 = vmax.f32 %v3643, %v3651
      %v4156 = vmax.f32 %v3644, %v3652
      %v4157 = vmax.f32 %v3653, %v3661
      %v4158 = vmax.f32 %v3654, %v3662
      %v4159 = vmax.f32 %v3655, %v3663
      %v4160 = vmax.f32 %v3656, %v3664
      %v4161 = vmax.f32 %v3657, %v3665
      %v4162 = vmax.f32 %v3658, %v3666
      %v4163 = vmax.f32 %v3659, %v3667
      %v4164 = vmax.f32 %v3660, %v3668
      %v4165 = vmax.f32 %v3669, %v3677
      %v4166 = vmax.f32 %v3670, %v3678
      %v4167 = vmax.f32 %v3671, %v3679
      %v4168 = vmax.f32 %v3672, %v3680
      %v4169 = vmax.f32 %v3673, %v3681
      %v4170 = vmax.f32 %v3674, %v3682
      %v4171 = vmax.f32 %v3675, %v3683
      %v4172 = vmax.f32 %v3676, %v3684
      %v4173 = vmax.f32 %v3685, %v3693
      %v4174 = vmax.f32 %v3686, %v3694
      %v4175 = vmax.f32 %v3687, %v3695
      %v4176 = vmax.f32 %v3688, %v3696
      %v4177 = vmax.f32 %v3689, %v3697
      %v4178 = vmax.f32 %v3690, %v3698
      %v4179 = vmax.f32 %v3691, %v3699
      %v4180 = vmax.f32 %v3692, %v3700
      %v4181 = vmax.f32 %v3701, %v3709
      %v4182 = vmax.f32 %v3702, %v3710
      %v4183 = vmax.f32 %v3703, %v3711
      %v4184 = vmax.f32 %v3704, %v3712
      %v4185 = vmax.f32 %v3705, %v3713
      %v4186 = vmax.f32 %v3706, %v3714
      %v4187 = vmax.f32 %v3707, %v3715
      %v4188 = vmax.f32 %v3708, %v3716
      %v4189 = vmax.f32 %v3717, %v3725
      %v4190 = vmax.f32 %v3718, %v3726
      %v4191 = vmax.f32 %v3719, %v3727
      %v4192 = vmax.f32 %v3720, %v3728
      %v4193 = vmax.f32 %v3721, %v3729
      %v4194 = vmax.f32 %v3722, %v3730
      %v4195 = vmax.f32 %v3723, %v3731
      %v4196 = vmax.f32 %v3724, %v3732
      %v4197 = vmax.f32 %v3733, %v3741
      %v4198 = vmax.f32 %v3734, %v3742
      %v4199 = vmax.f32 %v3735, %v3743
      %v4200 = vmax.f32 %v3736, %v3744
      %v4201 = vmax.f32 %v3737, %v3745
      %v4202 = vmax.f32 %v3738, %v3746
      %v4203 = vmax.f32 %v3739, %v3747
      %v4204 = vmax.f32 %v3740, %v3748
      %v4205 = vmax.f32 %v3749, %v3757
      %v4206 = vmax.f32 %v3750, %v3758
      %v4207 = vmax.f32 %v3751, %v3759
      %v4208 = vmax.f32 %v3752, %v3760
      %v4209 = vmax.f32 %v3753, %v3761
      %v4210 = vmax.f32 %v3754, %v3762
      %v4211 = vmax.f32 %v3755, %v3763
      %v4212 = vmax.f32 %v3756, %v3764
      %v4213 = vmax.f32 %v3765, %v3773
      %v4214 = vmax.f32 %v3766, %v3774
      %v4215 = vmax.f32 %v3767, %v3775
      %v4216 = vmax.f32 %v3768, %v3776
      %v4217 = vmax.f32 %v3769, %v3777
      %v4218 = vmax.f32 %v3770, %v3778
      %v4219 = vmax.f32 %v3771, %v3779
      %v4220 = vmax.f32 %v3772, %v3780
      %v4221 = vmax.f32 %v3781, %v3789
      %v4222 = vmax.f32 %v3782, %v3790
      %v4223 = vmax.f32 %v3783, %v3791
      %v4224 = vmax.f32 %v3784, %v3792
      %v4225 = vmax.f32 %v3785, %v3793
      %v4226 = vmax.f32 %v3786, %v3794
      %v4227 = vmax.f32 %v3787, %v3795
      %v4228 = vmax.f32 %v3788, %v3796
      %v4229 = vmax.f32 %v3797, %v3805
      %v4230 = vmax.f32 %v3798, %v3806
      %v4231 = vmax.f32 %v3799, %v3807
      %v4232 = vmax.f32 %v3800, %v3808
      %v4233 = vmax.f32 %v3801, %v3809
      %v4234 = vmax.f32 %v3802, %v3810
      %v4235 = vmax.f32 %v3803, %v3811
      %v4236 = vmax.f32 %v3804, %v3812
      %v4237 = vmax.f32 %v3813, %v3821
      %v4238 = vmax.f32 %v3814, %v3822
      %v4239 = vmax.f32 %v3815, %v3823
      %v4240 = vmax.f32 %v3816, %v3824
      %v4241 = vmax.f32 %v3817, %v3825
      %v4242 = vmax.f32 %v3818, %v3826
      %v4243 = vmax.f32 %v3819, %v3827
      %v4244 = vmax.f32 %v3820, %v3828
      %v4245 = vmax.f32 %v3829, %v3837
      %v4246 = vmax.f32 %v3830, %v3838
      %v4247 = vmax.f32 %v3831, %v3839
      %v4248 = vmax.f32 %v3832, %v3840
      %v4249 = vmax.f32 %v3833, %v3841
      %v4250 = vmax.f32 %v3834, %v3842
      %v4251 = vmax.f32 %v3835, %v3843
      %v4252 = vmax.f32 %v3836, %v3844
      %v4253 = vmax.f32 %v3845, %v3853
      %v4254 = vmax.f32 %v3846, %v3854
      %v4255 = vmax.f32 %v3847, %v3855
      %v4256 = vmax.f32 %v3848, %v3856
      %v4257 = vmax.f32 %v3849, %v3857
      %v4258 = vmax.f32 %v3850, %v3858
      %v4259 = vmax.f32 %v3851, %v3859
      %v4260 = vmax.f32 %v3852, %v3860
      %v4261 = vmax.f32 %v3861, %v3869
      %v4262 = vmax.f32 %v3862, %v3870
      %v4263 = vmax.f32 %v3863, %v3871
      %v4264 = vmax.f32 %v3864, %v3872
      %v4265 = vmax.f32 %v3865, %v3873
      %v4266 = vmax.f32 %v3866, %v3874
      %v4267 = vmax.f32 %v3867, %v3875
      %v4268 = vmax.f32 %v3868, %v3876
      %v4269 = vmax.f32 %v3877, %v3885
      %v4270 = vmax.f32 %v3878, %v3886
      %v4271 = vmax.f32 %v3879, %v3887
      %v4272 = vmax.f32 %v3880, %v3888
      %v4273 = vmax.f32 %v3881, %v3889
      %v4274 = vmax.f32 %v3882, %v3890
      %v4275 = vmax.f32 %v3883, %v3891
      %v4276 = vmax.f32 %v3884, %v3892
      %v4277 = vmax.f32 %v3893, %v3901
      %v4278 = vmax.f32 %v3894, %v3902
      %v4279 = vmax.f32 %v3895, %v3903
      %v4280 = vmax.f32 %v3896, %v3904
      %v4281 = vmax.f32 %v3897, %v3905
      %v4282 = vmax.f32 %v3898, %v3906
      %v4283 = vmax.f32 %v3899, %v3907
      %v4284 = vmax.f32 %v3900, %v3908
      %v4285 = vmax.f32 %v3909, %v3917
      %v4286 = vmax.f32 %v3910, %v3918
      %v4287 = vmax.f32 %v3911, %v3919
      %v4288 = vmax.f32 %v3912, %v3920
      %v4289 = vmax.f32 %v3913, %v3921
      %v4290 = vmax.f32 %v3914, %v3922
      %v4291 = vmax.f32 %v3915, %v3923
      %v4292 = vmax.f32 %v3916, %v3924
      %v4293 = vmax.f32 %v3925, %v3933
      %v4294 = vmax.f32 %v3926, %v3934
      %v4295 = vmax.f32 %v3927, %v3935
      %v4296 = vmax.f32 %v3928, %v3936
      %v4297 = vmax.f32 %v3929, %v3937
      %v4298 = vmax.f32 %v3930, %v3938
      %v4299 = vmax.f32 %v3931, %v3939
      %v4300 = vmax.f32 %v3932, %v3940
      %v4301 = vmax.f32 %v3941, %v3949
      %v4302 = vmax.f32 %v3942, %v3950
      %v4303 = vmax.f32 %v3943, %v3951
      %v4304 = vmax.f32 %v3944, %v3952
      %v4305 = vmax.f32 %v3945, %v3953
      %v4306 = vmax.f32 %v3946, %v3954
      %v4307 = vmax.f32 %v3947, %v3955
      %v4308 = vmax.f32 %v3948, %v3956
      %v4309 = vmax.f32 %v3957, %v3965
      %v4310 = vmax.f32 %v3958, %v3966
      %v4311 = vmax.f32 %v3959, %v3967
      %v4312 = vmax.f32 %v3960, %v3968
      %v4313 = vmax.f32 %v3961, %v3969
      %v4314 = vmax.f32 %v3962, %v3970
      %v4315 = vmax.f32 %v3963, %v3971
      %v4316 = vmax.f32 %v3964, %v3972
      %v4317 = vmax.f32 %v3973, %v3981
      %v4318 = vmax.f32 %v3974, %v3982
      %v4319 = vmax.f32 %v3975, %v3983
      %v4320 = vmax.f32 %v3976, %v3984
      %v4321 = vmax.f32 %v3977, %v3985
      %v4322 = vmax.f32 %v3978, %v3986
      %v4323 = vmax.f32 %v3979, %v3987
      %v4324 = vmax.f32 %v3980, %v3988
      %v4325 = vmax.f32 %v3989, %v3997
      %v4326 = vmax.f32 %v3990, %v3998
      %v4327 = vmax.f32 %v3991, %v3999
      %v4328 = vmax.f32 %v3992, %v4000
      %v4329 = vmax.f32 %v3993, %v4001
      %v4330 = vmax.f32 %v3994, %v4002
      %v4331 = vmax.f32 %v3995, %v4003
      %v4332 = vmax.f32 %v3996, %v4004
      %v4333 = vmax.f32 %v4005, %v4013
      %v4334 = vmax.f32 %v4006, %v4014
      %v4335 = vmax.f32 %v4007, %v4015
      %v4336 = vmax.f32 %v4008, %v4016
      %v4337 = vmax.f32 %v4009, %v4017
      %v4338 = vmax.f32 %v4010, %v4018
      %v4339 = vmax.f32 %v4011, %v4019
      %v4340 = vmax.f32 %v4012, %v4020
      %v4341 = vmax.f32 %v4021, %v4029
      %v4342 = vmax.f32 %v4022, %v4030
      %v4343 = vmax.f32 %v4023, %v4031
      %v4344 = vmax.f32 %v4024, %v4032
      %v4345 = vmax.f32 %v4025, %v4033
      %v4346 = vmax.f32 %v4026, %v4034
      %v4347 = vmax.f32 %v4027, %v4035
      %v4348 = vmax.f32 %v4028, %v4036
      %v4349 = vmax.f32 %v4037, %v4045
      %v4350 = vmax.f32 %v4038, %v4046
      %v4351 = vmax.f32 %v4039, %v4047
      %v4352 = vmax.f32 %v4040, %v4048
      %v4353 = vmax.f32 %v4041, %v4049
      %v4354 = vmax.f32 %v4042, %v4050
      %v4355 = vmax.f32 %v4043, %v4051
      %v4356 = vmax.f32 %v4044, %v4052
      %v4357 = vmax.f32 %v4053, %v4061
      %v4358 = vmax.f32 %v4054, %v4062
      %v4359 = vmax.f32 %v4055, %v4063
      %v4360 = vmax.f32 %v4056, %v4064
      %v4361 = vmax.f32 %v4057, %v4065
      %v4362 = vmax.f32 %v4058, %v4066
      %v4363 = vmax.f32 %v4059, %v4067
      %v4364 = vmax.f32 %v4060, %v4068
      %v4365 = vmax.f32 %v4069, %v4077
      %v4366 = vmax.f32 %v4070, %v4078
      %v4367 = vmax.f32 %v4071, %v4079
      %v4368 = vmax.f32 %v4072, %v4080
      %v4369 = vmax.f32 %v4073, %v4081
      %v4370 = vmax.f32 %v4074, %v4082
      %v4371 = vmax.f32 %v4075, %v4083
      %v4372 = vmax.f32 %v4076, %v4084
      %v4373 = vmax.f32 %v4085, %v4093
      %v4374 = vmax.f32 %v4086, %v4094
      %v4375 = vmax.f32 %v4087, %v4095
      %v4376 = vmax.f32 %v4088, %v4096
      %v4377 = vmax.f32 %v4089, %v4097
      %v4378 = vmax.f32 %v4090, %v4098
      %v4379 = vmax.f32 %v4091, %v4099
      %v4380 = vmax.f32 %v4092, %v4100
      %v4381 = vmax.f32 %v4101, %v4109
      %v4382 = vmax.f32 %v4102, %v4110
      %v4383 = vmax.f32 %v4103, %v4111
      %v4384 = vmax.f32 %v4104, %v4112
      %v4385 = vmax.f32 %v4105, %v4113
      %v4386 = vmax.f32 %v4106, %v4114
      %v4387 = vmax.f32 %v4107, %v4115
      %v4388 = vmax.f32 %v4108, %v4116
      %v4389 = vmax.f32 %v4117, %v4125
      %v4390 = vmax.f32 %v4118, %v4126
      %v4391 = vmax.f32 %v4119, %v4127
      %v4392 = vmax.f32 %v4120, %v4128
      %v4393 = vmax.f32 %v4121, %v4129
      %v4394 = vmax.f32 %v4122, %v4130
      %v4395 = vmax.f32 %v4123, %v4131
      %v4396 = vmax.f32 %v4124, %v4132
      %v4397 = vmax.f32 %v4133, %v4141
      %v4398 = vmax.f32 %v4134, %v4142
      %v4399 = vmax.f32 %v4135, %v4143
      %v4400 = vmax.f32 %v4136, %v4144
      %v4401 = vmax.f32 %v4137, %v4145
      %v4402 = vmax.f32 %v4138, %v4146
      %v4403 = vmax.f32 %v4139, %v4147
      %v4404 = vmax.f32 %v4140, %v4148
      %v4405 = vmax.f32 %v4149, %v4153
      %v4406 = vmax.f32 %v4150, %v4154
      %v4407 = vmax.f32 %v4151, %v4155
      %v4408 = vmax.f32 %v4152, %v4156
      %v4409 = vmax.f32 %v4157, %v4161
      %v4410 = vmax.f32 %v4158, %v4162
      %v4411 = vmax.f32 %v4159, %v4163
      %v4412 = vmax.f32 %v4160, %v4164
      %v4413 = vmax.f32 %v4165, %v4169
      %v4414 = vmax.f32 %v4166, %v4170
      %v4415 = vmax.f32 %v4167, %v4171
      %v4416 = vmax.f32 %v4168, %v4172
      %v4417 = vmax.f32 %v4173, %v4177
      %v4418 = vmax.f32 %v4174, %v4178
      %v4419 = vmax.f32 %v4175, %v4179
      %v4420 = vmax.f32 %v4176, %v4180
      %v4421 = vmax.f32 %v4181, %v4185
      %v4422 = vmax.f32 %v4182, %v4186
      %v4423 = vmax.f32 %v4183, %v4187
      %v4424 = vmax.f32 %v4184, %v4188
      %v4425 = vmax.f32 %v4189, %v4193
      %v4426 = vmax.f32 %v4190, %v4194
      %v4427 = vmax.f32 %v4191, %v4195
      %v4428 = vmax.f32 %v4192, %v4196
      %v4429 = vmax.f32 %v4197, %v4201
      %v4430 = vmax.f32 %v4198, %v4202
      %v4431 = vmax.f32 %v4199, %v4203
      %v4432 = vmax.f32 %v4200, %v4204
      %v4433 = vmax.f32 %v4205, %v4209
      %v4434 = vmax.f32 %v4206, %v4210
      %v4435 = vmax.f32 %v4207, %v4211
      %v4436 = vmax.f32 %v4208, %v4212
      %v4437 = vmax.f32 %v4213, %v4217
      %v4438 = vmax.f32 %v4214, %v4218
      %v4439 = vmax.f32 %v4215, %v4219
      %v4440 = vmax.f32 %v4216, %v4220
      %v4441 = vmax.f32 %v4221, %v4225
      %v4442 = vmax.f32 %v4222, %v4226
      %v4443 = vmax.f32 %v4223, %v4227
      %v4444 = vmax.f32 %v4224, %v4228
      %v4445 = vmax.f32 %v4229, %v4233
      %v4446 = vmax.f32 %v4230, %v4234
      %v4447 = vmax.f32 %v4231, %v4235
      %v4448 = vmax.f32 %v4232, %v4236
      %v4449 = vmax.f32 %v4237, %v4241
      %v4450 = vmax.f32 %v4238, %v4242
      %v4451 = vmax.f32 %v4239, %v4243
      %v4452 = vmax.f32 %v4240, %v4244
      %v4453 = vmax.f32 %v4245, %v4249
      %v4454 = vmax.f32 %v4246, %v4250
      %v4455 = vmax.f32 %v4247, %v4251
      %v4456 = vmax.f32 %v4248, %v4252
      %v4457 = vmax.f32 %v4253, %v4257
      %v4458 = vmax.f32 %v4254, %v4258
      %v4459 = vmax.f32 %v4255, %v4259
      %v4460 = vmax.f32 %v4256, %v4260
      %v4461 = vmax.f32 %v4261, %v4265
      %v4462 = vmax.f32 %v4262, %v4266
      %v4463 = vmax.f32 %v4263, %v4267
      %v4464 = vmax.f32 %v4264, %v4268
      %v4465 = vmax.f32 %v4269, %v4273
      %v4466 = vmax.f32 %v4270, %v4274
      %v4467 = vmax.f32 %v4271, %v4275
      %v4468 = vmax.f32 %v4272, %v4276
      %v4469 = vmax.f32 %v4277, %v4281
      %v4470 = vmax.f32 %v4278, %v4282
      %v4471 = vmax.f32 %v4279, %v4283
      %v4472 = vmax.f32 %v4280, %v4284
      %v4473 = vmax.f32 %v4285, %v4289
      %v4474 = vmax.f32 %v4286, %v4290
      %v4475 = vmax.f32 %v4287, %v4291
      %v4476 = vmax.f32 %v4288, %v4292
      %v4477 = vmax.f32 %v4293, %v4297
      %v4478 = vmax.f32 %v4294, %v4298
      %v4479 = vmax.f32 %v4295, %v4299
      %v4480 = vmax.f32 %v4296, %v4300
      %v4481 = vmax.f32 %v4301, %v4305
      %v4482 = vmax.f32 %v4302, %v4306
      %v4483 = vmax.f32 %v4303, %v4307
      %v4484 = vmax.f32 %v4304, %v4308
      %v4485 = vmax.f32 %v4309, %v4313
      %v4486 = vmax.f32 %v4310, %v4314
      %v4487 = vmax.f32 %v4311, %v4315
      %v4488 = vmax.f32 %v4312, %v4316
      %v4489 = vmax.f32 %v4317, %v4321
      %v4490 = vmax.f32 %v4318, %v4322
      %v4491 = vmax.f32 %v4319, %v4323
      %v4492 = vmax.f32 %v4320, %v4324
      %v4493 = vmax.f32 %v4325, %v4329
      %v4494 = vmax.f32 %v4326, %v4330
      %v4495 = vmax.f32 %v4327, %v4331
      %v4496 = vmax.f32 %v4328, %v4332
      %v4497 = vmax.f32 %v4333, %v4337
      %v4498 = vmax.f32 %v4334, %v4338
      %v4499 = vmax.f32 %v4335, %v4339
      %v4500 = vmax.f32 %v4336, %v4340
      %v4501 = vmax.f32 %v4341, %v4345
      %v4502 = vmax.f32 %v4342, %v4346
      %v4503 = vmax.f32 %v4343, %v4347
      %v4504 = vmax.f32 %v4344, %v4348
      %v4505 = vmax.f32 %v4349, %v4353
      %v4506 = vmax.f32 %v4350, %v4354
      %v4507 = vmax.f32 %v4351, %v4355
      %v4508 = vmax.f32 %v4352, %v4356
      %v4509 = vmax.f32 %v4357, %v4361
      %v4510 = vmax.f32 %v4358, %v4362
      %v4511 = vmax.f32 %v4359, %v4363
      %v4512 = vmax.f32 %v4360, %v4364
      %v4513 = vmax.f32 %v4365, %v4369
      %v4514 = vmax.f32 %v4366, %v4370
      %v4515 = vmax.f32 %v4367, %v4371
      %v4516 = vmax.f32 %v4368, %v4372
      %v4517 = vmax.f32 %v4373, %v4377
      %v4518 = vmax.f32 %v4374, %v4378
      %v4519 = vmax.f32 %v4375, %v4379
      %v4520 = vmax.f32 %v4376, %v4380
      %v4521 = vmax.f32 %v4381, %v4385
      %v4522 = vmax.f32 %v4382, %v4386
      %v4523 = vmax.f32 %v4383, %v4387
      %v4524 = vmax.f32 %v4384, %v4388
      %v4525 = vmax.f32 %v4389, %v4393
      %v4526 = vmax.f32 %v4390, %v4394
      %v4527 = vmax.f32 %v4391, %v4395
      %v4528 = vmax.f32 %v4392, %v4396
      %v4529 = vmax.f32 %v4397, %v4401
      %v4530 = vmax.f32 %v4398, %v4402
      %v4531 = vmax.f32 %v4399, %v4403
      %v4532 = vmax.f32 %v4400, %v4404
      %v4533 = vmax.f32 %v4405, %v4407
      %v4534 = vmax.f32 %v4406, %v4408
      %v4535 = vmax.f32 %v4409, %v4411
      %v4536 = vmax.f32 %v4410, %v4412
      %v4537 = vmax.f32 %v4413, %v4415
      %v4538 = vmax.f32 %v4414, %v4416
      %v4539 = vmax.f32 %v4417, %v4419
      %v4540 = vmax.f32 %v4418, %v4420
      %v4541 = vmax.f32 %v4421, %v4423
      %v4542 = vmax.f32 %v4422, %v4424
      %v4543 = vmax.f32 %v4425, %v4427
      %v4544 = vmax.f32 %v4426, %v4428
      %v4545 = vmax.f32 %v4429, %v4431
      %v4546 = vmax.f32 %v4430, %v4432
      %v4547 = vmax.f32 %v4433, %v4435
      %v4548 = vmax.f32 %v4434, %v4436
      %v4549 = vmax.f32 %v4437, %v4439
      %v4550 = vmax.f32 %v4438, %v4440
      %v4551 = vmax.f32 %v4441, %v4443
      %v4552 = vmax.f32 %v4442, %v4444
      %v4553 = vmax.f32 %v4445, %v4447
      %v4554 = vmax.f32 %v4446, %v4448
      %v4555 = vmax.f32 %v4449, %v4451
      %v4556 = vmax.f32 %v4450, %v4452
      %v4557 = vmax.f32 %v4453, %v4455
      %v4558 = vmax.f32 %v4454, %v4456
      %v4559 = vmax.f32 %v4457, %v4459
      %v4560 = vmax.f32 %v4458, %v4460
      %v4561 = vmax.f32 %v4461, %v4463
      %v4562 = vmax.f32 %v4462, %v4464
      %v4563 = vmax.f32 %v4465, %v4467
      %v4564 = vmax.f32 %v4466, %v4468
      %v4565 = vmax.f32 %v4469, %v4471
      %v4566 = vmax.f32 %v4470, %v4472
      %v4567 = vmax.f32 %v4473, %v4475
      %v4568 = vmax.f32 %v4474, %v4476
      %v4569 = vmax.f32 %v4477, %v4479
      %v4570 = vmax.f32 %v4478, %v4480
      %v4571 = vmax.f32 %v4481, %v4483
      %v4572 = vmax.f32 %v4482, %v4484
      %v4573 = vmax.f32 %v4485, %v4487
      %v4574 = vmax.f32 %v4486, %v4488
      %v4575 = vmax.f32 %v4489, %v4491
      %v4576 = vmax.f32 %v4490, %v4492
      %v4577 = vmax.f32 %v4493, %v4495
      %v4578 = vmax.f32 %v4494, %v4496
      %v4579 = vmax.f32 %v4497, %v4499
      %v4580 = vmax.f32 %v4498, %v4500
      %v4581 = vmax.f32 %v4501, %v4503
      %v4582 = vmax.f32 %v4502, %v4504
      %v4583 = vmax.f32 %v4505, %v4507
      %v4584 = vmax.f32 %v4506, %v4508
      %v4585 = vmax.f32 %v4509, %v4511
      %v4586 = vmax.f32 %v4510, %v4512
      %v4587 = vmax.f32 %v4513, %v4515
      %v4588 = vmax.f32 %v4514, %v4516
      %v4589 = vmax.f32 %v4517, %v4519
      %v4590 = vmax.f32 %v4518, %v4520
      %v4591 = vmax.f32 %v4521, %v4523
      %v4592 = vmax.f32 %v4522, %v4524
      %v4593 = vmax.f32 %v4525, %v4527
      %v4594 = vmax.f32 %v4526, %v4528
      %v4595 = vmax.f32 %v4529, %v4531
      %v4596 = vmax.f32 %v4530, %v4532
      %v4597 = vmax.f32 %v4533, %v4534
      %v4598 = vmax.f32 %v4535, %v4536
      %v4599 = vmax.f32 %v4537, %v4538
      %v4600 = vmax.f32 %v4539, %v4540
      %v4601 = vmax.f32 %v4541, %v4542
      %v4602 = vmax.f32 %v4543, %v4544
      %v4603 = vmax.f32 %v4545, %v4546
      %v4604 = vmax.f32 %v4547, %v4548
      %v4605 = vmax.f32 %v4549, %v4550
      %v4606 = vmax.f32 %v4551, %v4552
      %v4607 = vmax.f32 %v4553, %v4554
      %v4608 = vmax.f32 %v4555, %v4556
      %v4609 = vmax.f32 %v4557, %v4558
      %v4610 = vmax.f32 %v4559, %v4560
      %v4611 = vmax.f32 %v4561, %v4562
      %v4612 = vmax.f32 %v4563, %v4564
      %v4613 = vmax.f32 %v4565, %v4566
      %v4614 = vmax.f32 %v4567, %v4568
      %v4615 = vmax.f32 %v4569, %v4570
      %v4616 = vmax.f32 %v4571, %v4572
      %v4617 = vmax.f32 %v4573, %v4574
      %v4618 = vmax.f32 %v4575, %v4576
      %v4619 = vmax.f32 %v4577, %v4578
      %v4620 = vmax.f32 %v4579, %v4580
      %v4621 = vmax.f32 %v4581, %v4582
      %v4622 = vmax.f32 %v4583, %v4584
      %v4623 = vmax.f32 %v4585, %v4586
      %v4624 = vmax.f32 %v4587, %v4588
      %v4625 = vmax.f32 %v4589, %v4590
      %v4626 = vmax.f32 %v4591, %v4592
      %v4627 = vmax.f32 %v4593, %v4594
      %v4628 = vmax.f32 %v4595, %v4596
      %4661 = vrot.lane.b32.xlu0 %v4597, 64
      %v4662 = vpop.permute.xlu0 %4661
      %4663 = vrot.lane.b32.xlu0 %v4598, 64
      %v4664 = vpop.permute.xlu0 %4663
      %4665 = vrot.lane.b32.xlu0 %v4599, 64
      %v4666 = vpop.permute.xlu0 %4665
      %4667 = vrot.lane.b32.xlu0 %v4600, 64
      %v4668 = vpop.permute.xlu0 %4667
      %4669 = vrot.lane.b32.xlu0 %v4601, 64
      %v4670 = vpop.permute.xlu0 %4669
      %4671 = vrot.lane.b32.xlu0 %v4602, 64
      %v4672 = vpop.permute.xlu0 %4671
      %4673 = vrot.lane.b32.xlu0 %v4603, 64
      %v4674 = vpop.permute.xlu0 %4673
      %4675 = vrot.lane.b32.xlu0 %v4604, 64
      %v4676 = vpop.permute.xlu0 %4675
      %4677 = vrot.lane.b32.xlu0 %v4605, 64
      %v4678 = vpop.permute.xlu0 %4677
      %4679 = vrot.lane.b32.xlu0 %v4606, 64
      %v4680 = vpop.permute.xlu0 %4679
      %4681 = vrot.lane.b32.xlu0 %v4607, 64
      %v4682 = vpop.permute.xlu0 %4681
      %4683 = vrot.lane.b32.xlu0 %v4608, 64
      %v4684 = vpop.permute.xlu0 %4683
      %4685 = vrot.lane.b32.xlu0 %v4609, 64
      %v4686 = vpop.permute.xlu0 %4685
      %4687 = vrot.lane.b32.xlu0 %v4610, 64
      %v4688 = vpop.permute.xlu0 %4687
      %4689 = vrot.lane.b32.xlu0 %v4611, 64
      %v4690 = vpop.permute.xlu0 %4689
      %4691 = vrot.lane.b32.xlu0 %v4612, 64
      %v4692 = vpop.permute.xlu0 %4691
      %4693 = vrot.lane.b32.xlu0 %v4613, 64
      %v4694 = vpop.permute.xlu0 %4693
      %4695 = vrot.lane.b32.xlu0 %v4614, 64
      %v4696 = vpop.permute.xlu0 %4695
      %4697 = vrot.lane.b32.xlu0 %v4615, 64
      %v4698 = vpop.permute.xlu0 %4697
      %4699 = vrot.lane.b32.xlu0 %v4616, 64
      %v4700 = vpop.permute.xlu0 %4699
      %4701 = vrot.lane.b32.xlu0 %v4617, 64
      %v4702 = vpop.permute.xlu0 %4701
      %4703 = vrot.lane.b32.xlu0 %v4618, 64
      %v4704 = vpop.permute.xlu0 %4703
      %4705 = vrot.lane.b32.xlu0 %v4619, 64
      %v4706 = vpop.permute.xlu0 %4705
      %4707 = vrot.lane.b32.xlu0 %v4620, 64
      %v4708 = vpop.permute.xlu0 %4707
      %4709 = vrot.lane.b32.xlu0 %v4621, 64
      %v4710 = vpop.permute.xlu0 %4709
      %4711 = vrot.lane.b32.xlu0 %v4622, 64
      %v4712 = vpop.permute.xlu0 %4711
      %4713 = vrot.lane.b32.xlu0 %v4623, 64
      %v4714 = vpop.permute.xlu0 %4713
      %4715 = vrot.lane.b32.xlu0 %v4624, 64
      %v4716 = vpop.permute.xlu0 %4715
      %4717 = vrot.lane.b32.xlu0 %v4625, 64
      %v4718 = vpop.permute.xlu0 %4717
      %4719 = vrot.lane.b32.xlu0 %v4626, 64
      %v4720 = vpop.permute.xlu0 %4719
      %4721 = vrot.lane.b32.xlu0 %v4627, 64
      %v4722 = vpop.permute.xlu0 %4721
      %4723 = vrot.lane.b32.xlu0 %v4628, 64
      %v4724 = vpop.permute.xlu0 %4723
      %v4757 = vmax.f32 %v4597, %v4662
      %v4758 = vmax.f32 %v4598, %v4664
      %v4759 = vmax.f32 %v4599, %v4666
      %v4760 = vmax.f32 %v4600, %v4668
      %v4761 = vmax.f32 %v4601, %v4670
      %v4762 = vmax.f32 %v4602, %v4672
      %v4763 = vmax.f32 %v4603, %v4674
      %v4764 = vmax.f32 %v4604, %v4676
      %v4765 = vmax.f32 %v4605, %v4678
      %v4766 = vmax.f32 %v4606, %v4680
      %v4767 = vmax.f32 %v4607, %v4682
      %v4768 = vmax.f32 %v4608, %v4684
      %v4769 = vmax.f32 %v4609, %v4686
      %v4770 = vmax.f32 %v4610, %v4688
      %v4771 = vmax.f32 %v4611, %v4690
      %v4772 = vmax.f32 %v4612, %v4692
      %v4773 = vmax.f32 %v4613, %v4694
      %v4774 = vmax.f32 %v4614, %v4696
      %v4775 = vmax.f32 %v4615, %v4698
      %v4776 = vmax.f32 %v4616, %v4700
      %v4777 = vmax.f32 %v4617, %v4702
      %v4778 = vmax.f32 %v4618, %v4704
      %v4779 = vmax.f32 %v4619, %v4706
      %v4780 = vmax.f32 %v4620, %v4708
      %v4781 = vmax.f32 %v4621, %v4710
      %v4782 = vmax.f32 %v4622, %v4712
      %v4783 = vmax.f32 %v4623, %v4714
      %v4784 = vmax.f32 %v4624, %v4716
      %v4785 = vmax.f32 %v4625, %v4718
      %v4786 = vmax.f32 %v4626, %v4720
      %v4787 = vmax.f32 %v4627, %v4722
      %v4788 = vmax.f32 %v4628, %v4724
      %v4789 = vmax.f32 %v251, 1.0
      %v4790 = vmax.f32 %v252, 1.0
      %v4791 = vmax.f32 %v253, 1.0
      %v4792 = vmax.f32 %v254, 1.0
      %v4793 = vmax.f32 %v255, 1.0
      %v4794 = vmax.f32 %v256, 1.0
      %v4795 = vmax.f32 %v257, 1.0
      %v4796 = vmax.f32 %v258, 1.0
      %v4797 = vmax.f32 %v259, 1.0
      %v4798 = vmax.f32 %v260, 1.0
      %v4799 = vmax.f32 %v261, 1.0
      %v4800 = vmax.f32 %v262, 1.0
      %v4801 = vmax.f32 %v263, 1.0
      %v4802 = vmax.f32 %v264, 1.0
      %v4803 = vmax.f32 %v265, 1.0
      %v4804 = vmax.f32 %v266, 1.0
      %v4805 = vmax.f32 %v267, 1.0
      %v4806 = vmax.f32 %v268, 1.0
      %v4807 = vmax.f32 %v269, 1.0
      %v4808 = vmax.f32 %v270, 1.0
      %v4809 = vmax.f32 %v271, 1.0
      %v4810 = vmax.f32 %v272, 1.0
      %v4811 = vmax.f32 %v273, 1.0
      %v4812 = vmax.f32 %v274, 1.0
      %v4813 = vmax.f32 %v275, 1.0
      %v4814 = vmax.f32 %v276, 1.0
      %v4815 = vmax.f32 %v277, 1.0
      %v4816 = vmax.f32 %v278, 1.0
      %v4817 = vmax.f32 %v279, 1.0
      %v4818 = vmax.f32 %v280, 1.0
      %v4819 = vmax.f32 %v281, 1.0
      %v4820 = vmax.f32 %v282, 1.0
      %v4821 = vrcp.pop %v4789
      %v4822 = vmul.f32 1.0, %v4821
      %v4823 = vrcp.pop %v4790
      %v4824 = vmul.f32 1.0, %v4823
      %v4825 = vrcp.pop %v4791
      %v4826 = vmul.f32 1.0, %v4825
      %v4827 = vrcp.pop %v4792
      %v4828 = vmul.f32 1.0, %v4827
      %v4829 = vrcp.pop %v4793
      %v4830 = vmul.f32 1.0, %v4829
      %v4831 = vrcp.pop %v4794
      %v4832 = vmul.f32 1.0, %v4831
      %v4833 = vrcp.pop %v4795
      %v4834 = vmul.f32 1.0, %v4833
      %v4835 = vrcp.pop %v4796
      %v4836 = vmul.f32 1.0, %v4835
      %v4837 = vrcp.pop %v4797
      %v4838 = vmul.f32 1.0, %v4837
      %v4839 = vrcp.pop %v4798
      %v4840 = vmul.f32 1.0, %v4839
      %v4841 = vrcp.pop %v4799
      %v4842 = vmul.f32 1.0, %v4841
      %v4843 = vrcp.pop %v4800
      %v4844 = vmul.f32 1.0, %v4843
      %v4845 = vrcp.pop %v4801
      %v4846 = vmul.f32 1.0, %v4845
      %v4847 = vrcp.pop %v4802
      %v4848 = vmul.f32 1.0, %v4847
      %v4849 = vrcp.pop %v4803
      %v4850 = vmul.f32 1.0, %v4849
      %v4851 = vrcp.pop %v4804
      %v4852 = vmul.f32 1.0, %v4851
      %v4853 = vrcp.pop %v4805
      %v4854 = vmul.f32 1.0, %v4853
      %v4855 = vrcp.pop %v4806
      %v4856 = vmul.f32 1.0, %v4855
      %v4857 = vrcp.pop %v4807
      %v4858 = vmul.f32 1.0, %v4857
      %v4859 = vrcp.pop %v4808
      %v4860 = vmul.f32 1.0, %v4859
      %v4861 = vrcp.pop %v4809
      %v4862 = vmul.f32 1.0, %v4861
      %v4863 = vrcp.pop %v4810
      %v4864 = vmul.f32 1.0, %v4863
      %v4865 = vrcp.pop %v4811
      %v4866 = vmul.f32 1.0, %v4865
      %v4867 = vrcp.pop %v4812
      %v4868 = vmul.f32 1.0, %v4867
      %v4869 = vrcp.pop %v4813
      %v4870 = vmul.f32 1.0, %v4869
      %v4871 = vrcp.pop %v4814
      %v4872 = vmul.f32 1.0, %v4871
      %v4873 = vrcp.pop %v4815
      %v4874 = vmul.f32 1.0, %v4873
      %v4875 = vrcp.pop %v4816
      %v4876 = vmul.f32 1.0, %v4875
      %v4877 = vrcp.pop %v4817
      %v4878 = vmul.f32 1.0, %v4877
      %v4879 = vrcp.pop %v4818
      %v4880 = vmul.f32 1.0, %v4879
      %v4881 = vrcp.pop %v4819
      %v4882 = vmul.f32 1.0, %v4881
      %v4883 = vrcp.pop %v4820
      %v4884 = vmul.f32 1.0, %v4883
      %4886 = vset.pattern.permute.xlu0 0
      %4887 = vperm.xlu0 %4886, %v4822
      %v4888 = vpop.permute.xlu0 %4887
      %4891 = vset.pattern.permute.xlu0 0
      %4892 = vperm.xlu0 %4891, %v4824
      %v4893 = vpop.permute.xlu0 %4892
      %4896 = vset.pattern.permute.xlu0 0
      %4897 = vperm.xlu0 %4896, %v4826
      %v4898 = vpop.permute.xlu0 %4897
      %4901 = vset.pattern.permute.xlu0 0
      %4902 = vperm.xlu0 %4901, %v4828
      %v4903 = vpop.permute.xlu0 %4902
      %4906 = vset.pattern.permute.xlu0 0
      %4907 = vperm.xlu0 %4906, %v4830
      %v4908 = vpop.permute.xlu0 %4907
      %4911 = vset.pattern.permute.xlu0 0
      %4912 = vperm.xlu0 %4911, %v4832
      %v4913 = vpop.permute.xlu0 %4912
      %4916 = vset.pattern.permute.xlu0 0
      %4917 = vperm.xlu0 %4916, %v4834
      %v4918 = vpop.permute.xlu0 %4917
      %4921 = vset.pattern.permute.xlu0 0
      %4922 = vperm.xlu0 %4921, %v4836
      %v4923 = vpop.permute.xlu0 %4922
      %4926 = vset.pattern.permute.xlu0 0
      %4927 = vperm.xlu0 %4926, %v4838
      %v4928 = vpop.permute.xlu0 %4927
      %4931 = vset.pattern.permute.xlu0 0
      %4932 = vperm.xlu0 %4931, %v4840
      %v4933 = vpop.permute.xlu0 %4932
      %4936 = vset.pattern.permute.xlu0 0
      %4937 = vperm.xlu0 %4936, %v4842
      %v4938 = vpop.permute.xlu0 %4937
      %4941 = vset.pattern.permute.xlu0 0
      %4942 = vperm.xlu0 %4941, %v4844
      %v4943 = vpop.permute.xlu0 %4942
      %4946 = vset.pattern.permute.xlu0 0
      %4947 = vperm.xlu0 %4946, %v4846
      %v4948 = vpop.permute.xlu0 %4947
      %4951 = vset.pattern.permute.xlu0 0
      %4952 = vperm.xlu0 %4951, %v4848
      %v4953 = vpop.permute.xlu0 %4952
      %4956 = vset.pattern.permute.xlu0 0
      %4957 = vperm.xlu0 %4956, %v4850
      %v4958 = vpop.permute.xlu0 %4957
      %4961 = vset.pattern.permute.xlu0 0
      %4962 = vperm.xlu0 %4961, %v4852
      %v4963 = vpop.permute.xlu0 %4962
      %4966 = vset.pattern.permute.xlu0 0
      %4967 = vperm.xlu0 %4966, %v4854
      %v4968 = vpop.permute.xlu0 %4967
      %4971 = vset.pattern.permute.xlu0 0
      %4972 = vperm.xlu0 %4971, %v4856
      %v4973 = vpop.permute.xlu0 %4972
      %4976 = vset.pattern.permute.xlu0 0
      %4977 = vperm.xlu0 %4976, %v4858
      %v4978 = vpop.permute.xlu0 %4977
      %4981 = vset.pattern.permute.xlu0 0
      %4982 = vperm.xlu0 %4981, %v4860
      %v4983 = vpop.permute.xlu0 %4982
      %4986 = vset.pattern.permute.xlu0 0
      %4987 = vperm.xlu0 %4986, %v4862
      %v4988 = vpop.permute.xlu0 %4987
      %4991 = vset.pattern.permute.xlu0 0
      %4992 = vperm.xlu0 %4991, %v4864
      %v4993 = vpop.permute.xlu0 %4992
      %4996 = vset.pattern.permute.xlu0 0
      %4997 = vperm.xlu0 %4996, %v4866
      %v4998 = vpop.permute.xlu0 %4997
      %5001 = vset.pattern.permute.xlu0 0
      %5002 = vperm.xlu0 %5001, %v4868
      %v5003 = vpop.permute.xlu0 %5002
      %5006 = vset.pattern.permute.xlu0 0
      %5007 = vperm.xlu0 %5006, %v4870
      %v5008 = vpop.permute.xlu0 %5007
      %5011 = vset.pattern.permute.xlu0 0
      %5012 = vperm.xlu0 %5011, %v4872
      %v5013 = vpop.permute.xlu0 %5012
      %5016 = vset.pattern.permute.xlu0 0
      %5017 = vperm.xlu0 %5016, %v4874
      %v5018 = vpop.permute.xlu0 %5017
      %5021 = vset.pattern.permute.xlu0 0
      %5022 = vperm.xlu0 %5021, %v4876
      %v5023 = vpop.permute.xlu0 %5022
      %5026 = vset.pattern.permute.xlu0 0
      %5027 = vperm.xlu0 %5026, %v4878
      %v5028 = vpop.permute.xlu0 %5027
      %5031 = vset.pattern.permute.xlu0 0
      %5032 = vperm.xlu0 %5031, %v4880
      %v5033 = vpop.permute.xlu0 %5032
      %5036 = vset.pattern.permute.xlu0 0
      %5037 = vperm.xlu0 %5036, %v4882
      %v5038 = vpop.permute.xlu0 %5037
      %5041 = vset.pattern.permute.xlu0 0
      %5042 = vperm.xlu0 %5041, %v4884
      %v5043 = vpop.permute.xlu0 %5042
      %v5045 = vmul.f32 %v2854, %v4888
      %v5046 = vmul.f32 %v2857, %v4893
      %v5047 = vmul.f32 %v2862, %v4898
      %v5048 = vmul.f32 %v2865, %v4903
      %v5049 = vmul.f32 %v2870, %v4908
      %v5050 = vmul.f32 %v2873, %v4913
      %v5051 = vmul.f32 %v2878, %v4918
      %v5052 = vmul.f32 %v2881, %v4923
      %v5053 = vmul.f32 %v2886, %v4928
      %v5054 = vmul.f32 %v2889, %v4933
      %v5055 = vmul.f32 %v2894, %v4938
      %v5056 = vmul.f32 %v2897, %v4943
      %v5057 = vmul.f32 %v2902, %v4948
      %v5058 = vmul.f32 %v2905, %v4953
      %v5059 = vmul.f32 %v2910, %v4958
      %v5060 = vmul.f32 %v2913, %v4963
      %v5061 = vmul.f32 %v2918, %v4968
      %v5062 = vmul.f32 %v2921, %v4973
      %v5063 = vmul.f32 %v2926, %v4978
      %v5064 = vmul.f32 %v2929, %v4983
      %v5065 = vmul.f32 %v2934, %v4988
      %v5066 = vmul.f32 %v2937, %v4993
      %v5067 = vmul.f32 %v2942, %v4998
      %v5068 = vmul.f32 %v2945, %v5003
      %v5069 = vmul.f32 %v2950, %v5008
      %v5070 = vmul.f32 %v2953, %v5013
      %v5071 = vmul.f32 %v2958, %v5018
      %v5072 = vmul.f32 %v2961, %v5023
      %v5073 = vmul.f32 %v2966, %v5028
      %v5074 = vmul.f32 %v2969, %v5033
      %v5075 = vmul.f32 %v2974, %v5038
      %v5076 = vmul.f32 %v2977, %v5043
      %v5077 = vld [vmem:[%s3] sm:$0x1]
      %5079 = vset.pattern.permute.xlu0 1
      %5080 = vperm.xlu0 %5079, %v251
      %v5081 = vpop.permute.xlu0 %5080
      %5084 = vset.pattern.permute.xlu0 1
      %5085 = vperm.xlu0 %5084, %v252
      %v5086 = vpop.permute.xlu0 %5085
      %5089 = vset.pattern.permute.xlu0 1
      %5090 = vperm.xlu0 %5089, %v253
      %v5091 = vpop.permute.xlu0 %5090
      %5094 = vset.pattern.permute.xlu0 1
      %5095 = vperm.xlu0 %5094, %v254
      %v5096 = vpop.permute.xlu0 %5095
      %5099 = vset.pattern.permute.xlu0 1
      %5100 = vperm.xlu0 %5099, %v255
      %v5101 = vpop.permute.xlu0 %5100
      %5104 = vset.pattern.permute.xlu0 1
      %5105 = vperm.xlu0 %5104, %v256
      %v5106 = vpop.permute.xlu0 %5105
      %5109 = vset.pattern.permute.xlu0 1
      %5110 = vperm.xlu0 %5109, %v257
      %v5111 = vpop.permute.xlu0 %5110
      %5114 = vset.pattern.permute.xlu0 1
      %5115 = vperm.xlu0 %5114, %v258
      %v5116 = vpop.permute.xlu0 %5115
      %5119 = vset.pattern.permute.xlu0 1
      %5120 = vperm.xlu0 %5119, %v259
      %v5121 = vpop.permute.xlu0 %5120
      %5124 = vset.pattern.permute.xlu0 1
      %5125 = vperm.xlu0 %5124, %v260
      %v5126 = vpop.permute.xlu0 %5125
      %5129 = vset.pattern.permute.xlu0 1
      %5130 = vperm.xlu0 %5129, %v261
      %v5131 = vpop.permute.xlu0 %5130
      %5134 = vset.pattern.permute.xlu0 1
      %5135 = vperm.xlu0 %5134, %v262
      %v5136 = vpop.permute.xlu0 %5135
      %5139 = vset.pattern.permute.xlu0 1
      %5140 = vperm.xlu0 %5139, %v263
      %v5141 = vpop.permute.xlu0 %5140
      %5144 = vset.pattern.permute.xlu0 1
      %5145 = vperm.xlu0 %5144, %v264
      %v5146 = vpop.permute.xlu0 %5145
      %5149 = vset.pattern.permute.xlu0 1
      %5150 = vperm.xlu0 %5149, %v265
      %v5151 = vpop.permute.xlu0 %5150
      %5154 = vset.pattern.permute.xlu0 1
      %5155 = vperm.xlu0 %5154, %v266
      %v5156 = vpop.permute.xlu0 %5155
      %5159 = vset.pattern.permute.xlu0 1
      %5160 = vperm.xlu0 %5159, %v267
      %v5161 = vpop.permute.xlu0 %5160
      %5164 = vset.pattern.permute.xlu0 1
      %5165 = vperm.xlu0 %5164, %v268
      %v5166 = vpop.permute.xlu0 %5165
      %5169 = vset.pattern.permute.xlu0 1
      %5170 = vperm.xlu0 %5169, %v269
      %v5171 = vpop.permute.xlu0 %5170
      %5174 = vset.pattern.permute.xlu0 1
      %5175 = vperm.xlu0 %5174, %v270
      %v5176 = vpop.permute.xlu0 %5175
      %5179 = vset.pattern.permute.xlu0 1
      %5180 = vperm.xlu0 %5179, %v271
      %v5181 = vpop.permute.xlu0 %5180
      %5184 = vset.pattern.permute.xlu0 1
      %5185 = vperm.xlu0 %5184, %v272
      %v5186 = vpop.permute.xlu0 %5185
      %5189 = vset.pattern.permute.xlu0 1
      %5190 = vperm.xlu0 %5189, %v273
      %v5191 = vpop.permute.xlu0 %5190
      %5194 = vset.pattern.permute.xlu0 1
      %5195 = vperm.xlu0 %5194, %v274
      %v5196 = vpop.permute.xlu0 %5195
      %5199 = vset.pattern.permute.xlu0 1
      %5200 = vperm.xlu0 %5199, %v275
      %v5201 = vpop.permute.xlu0 %5200
      %5204 = vset.pattern.permute.xlu0 1
      %5205 = vperm.xlu0 %5204, %v276
      %v5206 = vpop.permute.xlu0 %5205
      %5209 = vset.pattern.permute.xlu0 1
      %5210 = vperm.xlu0 %5209, %v277
      %v5211 = vpop.permute.xlu0 %5210
      %5214 = vset.pattern.permute.xlu0 1
      %5215 = vperm.xlu0 %5214, %v278
      %v5216 = vpop.permute.xlu0 %5215
      %5219 = vset.pattern.permute.xlu0 1
      %5220 = vperm.xlu0 %5219, %v279
      %v5221 = vpop.permute.xlu0 %5220
      %5224 = vset.pattern.permute.xlu0 1
      %5225 = vperm.xlu0 %5224, %v280
      %v5226 = vpop.permute.xlu0 %5225
      %5229 = vset.pattern.permute.xlu0 1
      %5230 = vperm.xlu0 %5229, %v281
      %v5231 = vpop.permute.xlu0 %5230
      %5234 = vset.pattern.permute.xlu0 1
      %5235 = vperm.xlu0 %5234, %v282
      %v5236 = vpop.permute.xlu0 %5235
      %v5238 = vlaneseq
      %v5239 = vshrl.u32 %v5238, 7
      %v5240 = vsub.s32 0, %v5239
      %v5241 = vrot.slane %v5077, %v5240
      %v5242 = vmul.f32 %v5081, %v5241
      %v5243 = vmul.f32 %v5086, %v5241
      %v5244 = vmul.f32 %v5091, %v5241
      %v5245 = vmul.f32 %v5096, %v5241
      %v5246 = vmul.f32 %v5101, %v5241
      %v5247 = vmul.f32 %v5106, %v5241
      %v5248 = vmul.f32 %v5111, %v5241
      %v5249 = vmul.f32 %v5116, %v5241
      %v5250 = vmul.f32 %v5121, %v5241
      %v5251 = vmul.f32 %v5126, %v5241
      %v5252 = vmul.f32 %v5131, %v5241
      %v5253 = vmul.f32 %v5136, %v5241
      %v5254 = vmul.f32 %v5141, %v5241
      %v5255 = vmul.f32 %v5146, %v5241
      %v5256 = vmul.f32 %v5151, %v5241
      %v5257 = vmul.f32 %v5156, %v5241
      %v5258 = vmul.f32 %v5161, %v5241
      %v5259 = vmul.f32 %v5166, %v5241
      %v5260 = vmul.f32 %v5171, %v5241
      %v5261 = vmul.f32 %v5176, %v5241
      %v5262 = vmul.f32 %v5181, %v5241
      %v5263 = vmul.f32 %v5186, %v5241
      %v5264 = vmul.f32 %v5191, %v5241
      %v5265 = vmul.f32 %v5196, %v5241
      %v5266 = vmul.f32 %v5201, %v5241
      %v5267 = vmul.f32 %v5206, %v5241
      %v5268 = vmul.f32 %v5211, %v5241
      %v5269 = vmul.f32 %v5216, %v5241
      %v5270 = vmul.f32 %v5221, %v5241
      %v5271 = vmul.f32 %v5226, %v5241
      %v5272 = vmul.f32 %v5231, %v5241
      %v5273 = vmul.f32 %v5236, %v5241
      %v5274 = vadd.f32 %v5045, %v5242
      %v5275 = vadd.f32 %v5046, %v5243
      %v5276 = vadd.f32 %v5047, %v5244
      %v5277 = vadd.f32 %v5048, %v5245
      %v5278 = vadd.f32 %v5049, %v5246
      %v5279 = vadd.f32 %v5050, %v5247
      %v5280 = vadd.f32 %v5051, %v5248
      %v5281 = vadd.f32 %v5052, %v5249
      %v5282 = vadd.f32 %v5053, %v5250
      %v5283 = vadd.f32 %v5054, %v5251
      %v5284 = vadd.f32 %v5055, %v5252
      %v5285 = vadd.f32 %v5056, %v5253
      %v5286 = vadd.f32 %v5057, %v5254
      %v5287 = vadd.f32 %v5058, %v5255
      %v5288 = vadd.f32 %v5059, %v5256
      %v5289 = vadd.f32 %v5060, %v5257
      %v5290 = vadd.f32 %v5061, %v5258
      %v5291 = vadd.f32 %v5062, %v5259
      %v5292 = vadd.f32 %v5063, %v5260
      %v5293 = vadd.f32 %v5064, %v5261
      %v5294 = vadd.f32 %v5065, %v5262
      %v5295 = vadd.f32 %v5066, %v5263
      %v5296 = vadd.f32 %v5067, %v5264
      %v5297 = vadd.f32 %v5068, %v5265
      %v5298 = vadd.f32 %v5069, %v5266
      %v5299 = vadd.f32 %v5070, %v5267
      %v5300 = vadd.f32 %v5071, %v5268
      %v5301 = vadd.f32 %v5072, %v5269
      %v5302 = vadd.f32 %v5073, %v5270
      %v5303 = vadd.f32 %v5074, %v5271
      %v5304 = vadd.f32 %v5075, %v5272
      %v5305 = vadd.f32 %v5076, %v5273
      %v5306 = vld [vmem:[%s3 + $0x1] sm:$0x1]
      %5307 = vset.pattern.permute.xlu0 2
      %5308 = vperm.xlu0 %5307, %v251
      %v5309 = vpop.permute.xlu0 %5308
      %5311 = vset.pattern.permute.xlu0 2
      %5312 = vperm.xlu0 %5311, %v252
      %v5313 = vpop.permute.xlu0 %5312
      %5315 = vset.pattern.permute.xlu0 2
      %5316 = vperm.xlu0 %5315, %v253
      %v5317 = vpop.permute.xlu0 %5316
      %5319 = vset.pattern.permute.xlu0 2
      %5320 = vperm.xlu0 %5319, %v254
      %v5321 = vpop.permute.xlu0 %5320
      %5323 = vset.pattern.permute.xlu0 2
      %5324 = vperm.xlu0 %5323, %v255
      %v5325 = vpop.permute.xlu0 %5324
      %5327 = vset.pattern.permute.xlu0 2
      %5328 = vperm.xlu0 %5327, %v256
      %v5329 = vpop.permute.xlu0 %5328
      %5331 = vset.pattern.permute.xlu0 2
      %5332 = vperm.xlu0 %5331, %v257
      %v5333 = vpop.permute.xlu0 %5332
      %5335 = vset.pattern.permute.xlu0 2
      %5336 = vperm.xlu0 %5335, %v258
      %v5337 = vpop.permute.xlu0 %5336
      %5339 = vset.pattern.permute.xlu0 2
      %5340 = vperm.xlu0 %5339, %v259
      %v5341 = vpop.permute.xlu0 %5340
      %5343 = vset.pattern.permute.xlu0 2
      %5344 = vperm.xlu0 %5343, %v260
      %v5345 = vpop.permute.xlu0 %5344
      %5347 = vset.pattern.permute.xlu0 2
      %5348 = vperm.xlu0 %5347, %v261
      %v5349 = vpop.permute.xlu0 %5348
      %5351 = vset.pattern.permute.xlu0 2
      %5352 = vperm.xlu0 %5351, %v262
      %v5353 = vpop.permute.xlu0 %5352
      %5355 = vset.pattern.permute.xlu0 2
      %5356 = vperm.xlu0 %5355, %v263
      %v5357 = vpop.permute.xlu0 %5356
      %5359 = vset.pattern.permute.xlu0 2
      %5360 = vperm.xlu0 %5359, %v264
      %v5361 = vpop.permute.xlu0 %5360
      %5363 = vset.pattern.permute.xlu0 2
      %5364 = vperm.xlu0 %5363, %v265
      %v5365 = vpop.permute.xlu0 %5364
      %5367 = vset.pattern.permute.xlu0 2
      %5368 = vperm.xlu0 %5367, %v266
      %v5369 = vpop.permute.xlu0 %5368
      %5371 = vset.pattern.permute.xlu0 2
      %5372 = vperm.xlu0 %5371, %v267
      %v5373 = vpop.permute.xlu0 %5372
      %5375 = vset.pattern.permute.xlu0 2
      %5376 = vperm.xlu0 %5375, %v268
      %v5377 = vpop.permute.xlu0 %5376
      %5379 = vset.pattern.permute.xlu0 2
      %5380 = vperm.xlu0 %5379, %v269
      %v5381 = vpop.permute.xlu0 %5380
      %5383 = vset.pattern.permute.xlu0 2
      %5384 = vperm.xlu0 %5383, %v270
      %v5385 = vpop.permute.xlu0 %5384
      %5387 = vset.pattern.permute.xlu0 2
      %5388 = vperm.xlu0 %5387, %v271
      %v5389 = vpop.permute.xlu0 %5388
      %5391 = vset.pattern.permute.xlu0 2
      %5392 = vperm.xlu0 %5391, %v272
      %v5393 = vpop.permute.xlu0 %5392
      %5395 = vset.pattern.permute.xlu0 2
      %5396 = vperm.xlu0 %5395, %v273
      %v5397 = vpop.permute.xlu0 %5396
      %5399 = vset.pattern.permute.xlu0 2
      %5400 = vperm.xlu0 %5399, %v274
      %v5401 = vpop.permute.xlu0 %5400
      %5403 = vset.pattern.permute.xlu0 2
      %5404 = vperm.xlu0 %5403, %v275
      %v5405 = vpop.permute.xlu0 %5404
      %5407 = vset.pattern.permute.xlu0 2
      %5408 = vperm.xlu0 %5407, %v276
      %v5409 = vpop.permute.xlu0 %5408
      %5411 = vset.pattern.permute.xlu0 2
      %5412 = vperm.xlu0 %5411, %v277
      %v5413 = vpop.permute.xlu0 %5412
      %5415 = vset.pattern.permute.xlu0 2
      %5416 = vperm.xlu0 %5415, %v278
      %v5417 = vpop.permute.xlu0 %5416
      %5419 = vset.pattern.permute.xlu0 2
      %5420 = vperm.xlu0 %5419, %v279
      %v5421 = vpop.permute.xlu0 %5420
      %5423 = vset.pattern.permute.xlu0 2
      %5424 = vperm.xlu0 %5423, %v280
      %v5425 = vpop.permute.xlu0 %5424
      %5427 = vset.pattern.permute.xlu0 2
      %5428 = vperm.xlu0 %5427, %v281
      %v5429 = vpop.permute.xlu0 %5428
      %5431 = vset.pattern.permute.xlu0 2
      %5432 = vperm.xlu0 %5431, %v282
      %v5433 = vpop.permute.xlu0 %5432
      %v5435 = vlaneseq
      %v5436 = vshrl.u32 %v5435, 7
      %v5437 = vsub.s32 0, %v5436
      %v5438 = vrot.slane %v5306, %v5437
      %v5439 = vmul.f32 %v5309, %v5438
      %v5440 = vmul.f32 %v5313, %v5438
      %v5441 = vmul.f32 %v5317, %v5438
      %v5442 = vmul.f32 %v5321, %v5438
      %v5443 = vmul.f32 %v5325, %v5438
      %v5444 = vmul.f32 %v5329, %v5438
      %v5445 = vmul.f32 %v5333, %v5438
      %v5446 = vmul.f32 %v5337, %v5438
      %v5447 = vmul.f32 %v5341, %v5438
      %v5448 = vmul.f32 %v5345, %v5438
      %v5449 = vmul.f32 %v5349, %v5438
      %v5450 = vmul.f32 %v5353, %v5438
      %v5451 = vmul.f32 %v5357, %v5438
      %v5452 = vmul.f32 %v5361, %v5438
      %v5453 = vmul.f32 %v5365, %v5438
      %v5454 = vmul.f32 %v5369, %v5438
      %v5455 = vmul.f32 %v5373, %v5438
      %v5456 = vmul.f32 %v5377, %v5438
      %v5457 = vmul.f32 %v5381, %v5438
      %v5458 = vmul.f32 %v5385, %v5438
      %v5459 = vmul.f32 %v5389, %v5438
      %v5460 = vmul.f32 %v5393, %v5438
      %v5461 = vmul.f32 %v5397, %v5438
      %v5462 = vmul.f32 %v5401, %v5438
      %v5463 = vmul.f32 %v5405, %v5438
      %v5464 = vmul.f32 %v5409, %v5438
      %v5465 = vmul.f32 %v5413, %v5438
      %v5466 = vmul.f32 %v5417, %v5438
      %v5467 = vmul.f32 %v5421, %v5438
      %v5468 = vmul.f32 %v5425, %v5438
      %v5469 = vmul.f32 %v5429, %v5438
      %v5470 = vmul.f32 %v5433, %v5438
      %v5471 = vadd.f32 %v5274, %v5439
      %v5472 = vadd.f32 %v5275, %v5440
      %v5473 = vadd.f32 %v5276, %v5441
      %v5474 = vadd.f32 %v5277, %v5442
      %v5475 = vadd.f32 %v5278, %v5443
      %v5476 = vadd.f32 %v5279, %v5444
      %v5477 = vadd.f32 %v5280, %v5445
      %v5478 = vadd.f32 %v5281, %v5446
      %v5479 = vadd.f32 %v5282, %v5447
      %v5480 = vadd.f32 %v5283, %v5448
      %v5481 = vadd.f32 %v5284, %v5449
      %v5482 = vadd.f32 %v5285, %v5450
      %v5483 = vadd.f32 %v5286, %v5451
      %v5484 = vadd.f32 %v5287, %v5452
      %v5485 = vadd.f32 %v5288, %v5453
      %v5486 = vadd.f32 %v5289, %v5454
      %v5487 = vadd.f32 %v5290, %v5455
      %v5488 = vadd.f32 %v5291, %v5456
      %v5489 = vadd.f32 %v5292, %v5457
      %v5490 = vadd.f32 %v5293, %v5458
      %v5491 = vadd.f32 %v5294, %v5459
      %v5492 = vadd.f32 %v5295, %v5460
      %v5493 = vadd.f32 %v5296, %v5461
      %v5494 = vadd.f32 %v5297, %v5462
      %v5495 = vadd.f32 %v5298, %v5463
      %v5496 = vadd.f32 %v5299, %v5464
      %v5497 = vadd.f32 %v5300, %v5465
      %v5498 = vadd.f32 %v5301, %v5466
      %v5499 = vadd.f32 %v5302, %v5467
      %v5500 = vadd.f32 %v5303, %v5468
      %v5501 = vadd.f32 %v5304, %v5469
      %v5502 = vadd.f32 %v5305, %v5470
      %v5503 = vsub.f32 %v4757, %v5471
      %v5504 = vsub.f32 %v4758, %v5472
      %v5505 = vsub.f32 %v4759, %v5473
      %v5506 = vsub.f32 %v4760, %v5474
      %v5507 = vsub.f32 %v4761, %v5475
      %v5508 = vsub.f32 %v4762, %v5476
      %v5509 = vsub.f32 %v4763, %v5477
      %v5510 = vsub.f32 %v4764, %v5478
      %v5511 = vsub.f32 %v4765, %v5479
      %v5512 = vsub.f32 %v4766, %v5480
      %v5513 = vsub.f32 %v4767, %v5481
      %v5514 = vsub.f32 %v4768, %v5482
      %v5515 = vsub.f32 %v4769, %v5483
      %v5516 = vsub.f32 %v4770, %v5484
      %v5517 = vsub.f32 %v4771, %v5485
      %v5518 = vsub.f32 %v4772, %v5486
      %v5519 = vsub.f32 %v4773, %v5487
      %v5520 = vsub.f32 %v4774, %v5488
      %v5521 = vsub.f32 %v4775, %v5489
      %v5522 = vsub.f32 %v4776, %v5490
      %v5523 = vsub.f32 %v4777, %v5491
      %v5524 = vsub.f32 %v4778, %v5492
      %v5525 = vsub.f32 %v4779, %v5493
      %v5526 = vsub.f32 %v4780, %v5494
      %v5527 = vsub.f32 %v4781, %v5495
      %v5528 = vsub.f32 %v4782, %v5496
      %v5529 = vsub.f32 %v4783, %v5497
      %v5530 = vsub.f32 %v4784, %v5498
      %v5531 = vsub.f32 %v4785, %v5499
      %v5532 = vsub.f32 %v4786, %v5500
      %v5533 = vsub.f32 %v4787, %v5501
      %v5534 = vsub.f32 %v4788, %v5502
      %vm5535 = vcmp.lt.f32.partialorder %v251, 32.0
      %vm5536 = vcmp.lt.f32.partialorder %v252, 32.0
      %vm5537 = vcmp.lt.f32.partialorder %v253, 32.0
      %vm5538 = vcmp.lt.f32.partialorder %v254, 32.0
      %vm5539 = vcmp.lt.f32.partialorder %v255, 32.0
      %vm5540 = vcmp.lt.f32.partialorder %v256, 32.0
      %vm5541 = vcmp.lt.f32.partialorder %v257, 32.0
      %vm5542 = vcmp.lt.f32.partialorder %v258, 32.0
      %vm5543 = vcmp.lt.f32.partialorder %v259, 32.0
      %vm5544 = vcmp.lt.f32.partialorder %v260, 32.0
      %vm5545 = vcmp.lt.f32.partialorder %v261, 32.0
      %vm5546 = vcmp.lt.f32.partialorder %v262, 32.0
      %vm5547 = vcmp.lt.f32.partialorder %v263, 32.0
      %vm5548 = vcmp.lt.f32.partialorder %v264, 32.0
      %vm5549 = vcmp.lt.f32.partialorder %v265, 32.0
      %vm5550 = vcmp.lt.f32.partialorder %v266, 32.0
      %vm5551 = vcmp.lt.f32.partialorder %v267, 32.0
      %vm5552 = vcmp.lt.f32.partialorder %v268, 32.0
      %vm5553 = vcmp.lt.f32.partialorder %v269, 32.0
      %vm5554 = vcmp.lt.f32.partialorder %v270, 32.0
      %vm5555 = vcmp.lt.f32.partialorder %v271, 32.0
      %vm5556 = vcmp.lt.f32.partialorder %v272, 32.0
      %vm5557 = vcmp.lt.f32.partialorder %v273, 32.0
      %vm5558 = vcmp.lt.f32.partialorder %v274, 32.0
      %vm5559 = vcmp.lt.f32.partialorder %v275, 32.0
      %vm5560 = vcmp.lt.f32.partialorder %v276, 32.0
      %vm5561 = vcmp.lt.f32.partialorder %v277, 32.0
      %vm5562 = vcmp.lt.f32.partialorder %v278, 32.0
      %vm5563 = vcmp.lt.f32.partialorder %v279, 32.0
      %vm5564 = vcmp.lt.f32.partialorder %v280, 32.0
      %vm5565 = vcmp.lt.f32.partialorder %v281, 32.0
      %vm5566 = vcmp.lt.f32.partialorder %v282, 32.0
      %v5567 = vmax.f32 %v5503, 0.0
      %v5568 = vmax.f32 %v5504, 0.0
      %v5569 = vmax.f32 %v5505, 0.0
      %v5570 = vmax.f32 %v5506, 0.0
      %v5571 = vmax.f32 %v5507, 0.0
      %v5572 = vmax.f32 %v5508, 0.0
      %v5573 = vmax.f32 %v5509, 0.0
      %v5574 = vmax.f32 %v5510, 0.0
      %v5575 = vmax.f32 %v5511, 0.0
      %v5576 = vmax.f32 %v5512, 0.0
      %v5577 = vmax.f32 %v5513, 0.0
      %v5578 = vmax.f32 %v5514, 0.0
      %v5579 = vmax.f32 %v5515, 0.0
      %v5580 = vmax.f32 %v5516, 0.0
      %v5581 = vmax.f32 %v5517, 0.0
      %v5582 = vmax.f32 %v5518, 0.0
      %v5583 = vmax.f32 %v5519, 0.0
      %v5584 = vmax.f32 %v5520, 0.0
      %v5585 = vmax.f32 %v5521, 0.0
      %v5586 = vmax.f32 %v5522, 0.0
      %v5587 = vmax.f32 %v5523, 0.0
      %v5588 = vmax.f32 %v5524, 0.0
      %v5589 = vmax.f32 %v5525, 0.0
      %v5590 = vmax.f32 %v5526, 0.0
      %v5591 = vmax.f32 %v5527, 0.0
      %v5592 = vmax.f32 %v5528, 0.0
      %v5593 = vmax.f32 %v5529, 0.0
      %v5594 = vmax.f32 %v5530, 0.0
      %v5595 = vmax.f32 %v5531, 0.0
      %v5596 = vmax.f32 %v5532, 0.0
      %v5597 = vmax.f32 %v5533, 0.0
      %v5598 = vmax.f32 %v5534, 0.0
      %v5599 = vsel %vm5535, 1, 0
      %v5600 = vsel %vm5536, 1, 0
      %v5601 = vsel %vm5537, 1, 0
      %v5602 = vsel %vm5538, 1, 0
      %v5603 = vsel %vm5539, 1, 0
      %v5604 = vsel %vm5540, 1, 0
      %v5605 = vsel %vm5541, 1, 0
      %v5606 = vsel %vm5542, 1, 0
      %v5607 = vsel %vm5543, 1, 0
      %v5608 = vsel %vm5544, 1, 0
      %v5609 = vsel %vm5545, 1, 0
      %v5610 = vsel %vm5546, 1, 0
      %v5611 = vsel %vm5547, 1, 0
      %v5612 = vsel %vm5548, 1, 0
      %v5613 = vsel %vm5549, 1, 0
      %v5614 = vsel %vm5550, 1, 0
      %v5615 = vsel %vm5551, 1, 0
      %v5616 = vsel %vm5552, 1, 0
      %v5617 = vsel %vm5553, 1, 0
      %v5618 = vsel %vm5554, 1, 0
      %v5619 = vsel %vm5555, 1, 0
      %v5620 = vsel %vm5556, 1, 0
      %v5621 = vsel %vm5557, 1, 0
      %v5622 = vsel %vm5558, 1, 0
      %v5623 = vsel %vm5559, 1, 0
      %v5624 = vsel %vm5560, 1, 0
      %v5625 = vsel %vm5561, 1, 0
      %v5626 = vsel %vm5562, 1, 0
      %v5627 = vsel %vm5563, 1, 0
      %v5628 = vsel %vm5564, 1, 0
      %v5629 = vsel %vm5565, 1, 0
      %v5630 = vsel %vm5566, 1, 0
      %5631 = vset.pattern.permute.xlu0 0
      %5632 = vperm.xlu0 %5631, %v5599
      %v5633 = vpop.permute.xlu0 %5632
      %5634 = vset.pattern.permute.xlu0 0
      %5635 = vperm.xlu0 %5634, %v5600
      %v5636 = vpop.permute.xlu0 %5635
      %5637 = vset.pattern.permute.xlu0 0
      %5638 = vperm.xlu0 %5637, %v5601
      %v5639 = vpop.permute.xlu0 %5638
      %5640 = vset.pattern.permute.xlu0 0
      %5641 = vperm.xlu0 %5640, %v5602
      %v5642 = vpop.permute.xlu0 %5641
      %5643 = vset.pattern.permute.xlu0 0
      %5644 = vperm.xlu0 %5643, %v5603
      %v5645 = vpop.permute.xlu0 %5644
      %5646 = vset.pattern.permute.xlu0 0
      %5647 = vperm.xlu0 %5646, %v5604
      %v5648 = vpop.permute.xlu0 %5647
      %5649 = vset.pattern.permute.xlu0 0
      %5650 = vperm.xlu0 %5649, %v5605
      %v5651 = vpop.permute.xlu0 %5650
      %5652 = vset.pattern.permute.xlu0 0
      %5653 = vperm.xlu0 %5652, %v5606
      %v5654 = vpop.permute.xlu0 %5653
      %5655 = vset.pattern.permute.xlu0 0
      %5656 = vperm.xlu0 %5655, %v5607
      %v5657 = vpop.permute.xlu0 %5656
      %5658 = vset.pattern.permute.xlu0 0
      %5659 = vperm.xlu0 %5658, %v5608
      %v5660 = vpop.permute.xlu0 %5659
      %5661 = vset.pattern.permute.xlu0 0
      %5662 = vperm.xlu0 %5661, %v5609
      %v5663 = vpop.permute.xlu0 %5662
      %5664 = vset.pattern.permute.xlu0 0
      %5665 = vperm.xlu0 %5664, %v5610
      %v5666 = vpop.permute.xlu0 %5665
      %5667 = vset.pattern.permute.xlu0 0
      %5668 = vperm.xlu0 %5667, %v5611
      %v5669 = vpop.permute.xlu0 %5668
      %5670 = vset.pattern.permute.xlu0 0
      %5671 = vperm.xlu0 %5670, %v5612
      %v5672 = vpop.permute.xlu0 %5671
      %5673 = vset.pattern.permute.xlu0 0
      %5674 = vperm.xlu0 %5673, %v5613
      %v5675 = vpop.permute.xlu0 %5674
      %5676 = vset.pattern.permute.xlu0 0
      %5677 = vperm.xlu0 %5676, %v5614
      %v5678 = vpop.permute.xlu0 %5677
      %5679 = vset.pattern.permute.xlu0 0
      %5680 = vperm.xlu0 %5679, %v5615
      %v5681 = vpop.permute.xlu0 %5680
      %5682 = vset.pattern.permute.xlu0 0
      %5683 = vperm.xlu0 %5682, %v5616
      %v5684 = vpop.permute.xlu0 %5683
      %5685 = vset.pattern.permute.xlu0 0
      %5686 = vperm.xlu0 %5685, %v5617
      %v5687 = vpop.permute.xlu0 %5686
      %5688 = vset.pattern.permute.xlu0 0
      %5689 = vperm.xlu0 %5688, %v5618
      %v5690 = vpop.permute.xlu0 %5689
      %5691 = vset.pattern.permute.xlu0 0
      %5692 = vperm.xlu0 %5691, %v5619
      %v5693 = vpop.permute.xlu0 %5692
      %5694 = vset.pattern.permute.xlu0 0
      %5695 = vperm.xlu0 %5694, %v5620
      %v5696 = vpop.permute.xlu0 %5695
      %5697 = vset.pattern.permute.xlu0 0
      %5698 = vperm.xlu0 %5697, %v5621
      %v5699 = vpop.permute.xlu0 %5698
      %5700 = vset.pattern.permute.xlu0 0
      %5701 = vperm.xlu0 %5700, %v5622
      %v5702 = vpop.permute.xlu0 %5701
      %5703 = vset.pattern.permute.xlu0 0
      %5704 = vperm.xlu0 %5703, %v5623
      %v5705 = vpop.permute.xlu0 %5704
      %5706 = vset.pattern.permute.xlu0 0
      %5707 = vperm.xlu0 %5706, %v5624
      %v5708 = vpop.permute.xlu0 %5707
      %5709 = vset.pattern.permute.xlu0 0
      %5710 = vperm.xlu0 %5709, %v5625
      %v5711 = vpop.permute.xlu0 %5710
      %5712 = vset.pattern.permute.xlu0 0
      %5713 = vperm.xlu0 %5712, %v5626
      %v5714 = vpop.permute.xlu0 %5713
      %5715 = vset.pattern.permute.xlu0 0
      %5716 = vperm.xlu0 %5715, %v5627
      %v5717 = vpop.permute.xlu0 %5716
      %5718 = vset.pattern.permute.xlu0 0
      %5719 = vperm.xlu0 %5718, %v5628
      %v5720 = vpop.permute.xlu0 %5719
      %5721 = vset.pattern.permute.xlu0 0
      %5722 = vperm.xlu0 %5721, %v5629
      %v5723 = vpop.permute.xlu0 %5722
      %5724 = vset.pattern.permute.xlu0 0
      %5725 = vperm.xlu0 %5724, %v5630
      %v5726 = vpop.permute.xlu0 %5725
      %vm5727 = vcmp.eq.s32.totalorder %v5633, 1
      %vm5728 = vcmp.eq.s32.totalorder %v5636, 1
      %vm5729 = vcmp.eq.s32.totalorder %v5639, 1
      %vm5730 = vcmp.eq.s32.totalorder %v5642, 1
      %vm5731 = vcmp.eq.s32.totalorder %v5645, 1
      %vm5732 = vcmp.eq.s32.totalorder %v5648, 1
      %vm5733 = vcmp.eq.s32.totalorder %v5651, 1
      %vm5734 = vcmp.eq.s32.totalorder %v5654, 1
      %vm5735 = vcmp.eq.s32.totalorder %v5657, 1
      %vm5736 = vcmp.eq.s32.totalorder %v5660, 1
      %vm5737 = vcmp.eq.s32.totalorder %v5663, 1
      %vm5738 = vcmp.eq.s32.totalorder %v5666, 1
      %vm5739 = vcmp.eq.s32.totalorder %v5669, 1
      %vm5740 = vcmp.eq.s32.totalorder %v5672, 1
      %vm5741 = vcmp.eq.s32.totalorder %v5675, 1
      %vm5742 = vcmp.eq.s32.totalorder %v5678, 1
      %vm5743 = vcmp.eq.s32.totalorder %v5681, 1
      %vm5744 = vcmp.eq.s32.totalorder %v5684, 1
      %vm5745 = vcmp.eq.s32.totalorder %v5687, 1
      %vm5746 = vcmp.eq.s32.totalorder %v5690, 1
      %vm5747 = vcmp.eq.s32.totalorder %v5693, 1
      %vm5748 = vcmp.eq.s32.totalorder %v5696, 1
      %vm5749 = vcmp.eq.s32.totalorder %v5699, 1
      %vm5750 = vcmp.eq.s32.totalorder %v5702, 1
      %vm5751 = vcmp.eq.s32.totalorder %v5705, 1
      %vm5752 = vcmp.eq.s32.totalorder %v5708, 1
      %vm5753 = vcmp.eq.s32.totalorder %v5711, 1
      %vm5754 = vcmp.eq.s32.totalorder %v5714, 1
      %vm5755 = vcmp.eq.s32.totalorder %v5717, 1
      %vm5756 = vcmp.eq.s32.totalorder %v5720, 1
      %vm5757 = vcmp.eq.s32.totalorder %v5723, 1
      %vm5758 = vcmp.eq.s32.totalorder %v5726, 1
      %v5759 = vsel %vm5727, %v5567, %v5503
      %v5760 = vsel %vm5728, %v5568, %v5504
      %v5761 = vsel %vm5729, %v5569, %v5505
      %v5762 = vsel %vm5730, %v5570, %v5506
      %v5763 = vsel %vm5731, %v5571, %v5507
      %v5764 = vsel %vm5732, %v5572, %v5508
      %v5765 = vsel %vm5733, %v5573, %v5509
      %v5766 = vsel %vm5734, %v5574, %v5510
      %v5767 = vsel %vm5735, %v5575, %v5511
      %v5768 = vsel %vm5736, %v5576, %v5512
      %v5769 = vsel %vm5737, %v5577, %v5513
      %v5770 = vsel %vm5738, %v5578, %v5514
      %v5771 = vsel %vm5739, %v5579, %v5515
      %v5772 = vsel %vm5740, %v5580, %v5516
      %v5773 = vsel %vm5741, %v5581, %v5517
      %v5774 = vsel %vm5742, %v5582, %v5518
      %v5775 = vsel %vm5743, %v5583, %v5519
      %v5776 = vsel %vm5744, %v5584, %v5520
      %v5777 = vsel %vm5745, %v5585, %v5521
      %v5778 = vsel %vm5746, %v5586, %v5522
      %v5779 = vsel %vm5747, %v5587, %v5523
      %v5780 = vsel %vm5748, %v5588, %v5524
      %v5781 = vsel %vm5749, %v5589, %v5525
      %v5782 = vsel %vm5750, %v5590, %v5526
      %v5783 = vsel %vm5751, %v5591, %v5527
      %v5784 = vsel %vm5752, %v5592, %v5528
      %v5785 = vsel %vm5753, %v5593, %v5529
      %v5786 = vsel %vm5754, %v5594, %v5530
      %v5787 = vsel %vm5755, %v5595, %v5531
      %v5788 = vsel %vm5756, %v5596, %v5532
      %v5789 = vsel %vm5757, %v5597, %v5533
      %v5790 = vsel %vm5758, %v5598, %v5534
      %v5791 = vld [vmem:[%s4] sm:$0x1]
      %v5793 = vlaneseq
      %v5794 = vshrl.u32 %v5793, 7
      %v5795 = vsub.s32 0, %v5794
      %v5796 = vrot.slane %v5791, %v5795
      %v5798 = vadd.f32 %v5759, %v5796
      %v5799 = vadd.f32 %v5760, %v5796
      %v5800 = vadd.f32 %v5761, %v5796
      %v5801 = vadd.f32 %v5762, %v5796
      %v5802 = vadd.f32 %v5763, %v5796
      %v5803 = vadd.f32 %v5764, %v5796
      %v5804 = vadd.f32 %v5765, %v5796
      %v5805 = vadd.f32 %v5766, %v5796
      %v5806 = vadd.f32 %v5767, %v5796
      %v5807 = vadd.f32 %v5768, %v5796
      %v5808 = vadd.f32 %v5769, %v5796
      %v5809 = vadd.f32 %v5770, %v5796
      %v5810 = vadd.f32 %v5771, %v5796
      %v5811 = vadd.f32 %v5772, %v5796
      %v5812 = vadd.f32 %v5773, %v5796
      %v5813 = vadd.f32 %v5774, %v5796
      %v5814 = vadd.f32 %v5775, %v5796
      %v5815 = vadd.f32 %v5776, %v5796
      %v5816 = vadd.f32 %v5777, %v5796
      %v5817 = vadd.f32 %v5778, %v5796
      %v5818 = vadd.f32 %v5779, %v5796
      %v5819 = vadd.f32 %v5780, %v5796
      %v5820 = vadd.f32 %v5781, %v5796
      %v5821 = vadd.f32 %v5782, %v5796
      %v5822 = vadd.f32 %v5783, %v5796
      %v5823 = vadd.f32 %v5784, %v5796
      %v5824 = vadd.f32 %v5785, %v5796
      %v5825 = vadd.f32 %v5786, %v5796
      %v5826 = vadd.f32 %v5787, %v5796
      %v5827 = vadd.f32 %v5788, %v5796
      %v5828 = vadd.f32 %v5789, %v5796
      %v5829 = vadd.f32 %v5790, %v5796
      %v5830 = vmax.f32 %v5798, 0.0
      %v5831 = vmax.f32 %v5799, 0.0
      %v5832 = vmax.f32 %v5800, 0.0
      %v5833 = vmax.f32 %v5801, 0.0
      %v5834 = vmax.f32 %v5802, 0.0
      %v5835 = vmax.f32 %v5803, 0.0
      %v5836 = vmax.f32 %v5804, 0.0
      %v5837 = vmax.f32 %v5805, 0.0
      %v5838 = vmax.f32 %v5806, 0.0
      %v5839 = vmax.f32 %v5807, 0.0
      %v5840 = vmax.f32 %v5808, 0.0
      %v5841 = vmax.f32 %v5809, 0.0
      %v5842 = vmax.f32 %v5810, 0.0
      %v5843 = vmax.f32 %v5811, 0.0
      %v5844 = vmax.f32 %v5812, 0.0
      %v5845 = vmax.f32 %v5813, 0.0
      %v5846 = vmax.f32 %v5814, 0.0
      %v5847 = vmax.f32 %v5815, 0.0
      %v5848 = vmax.f32 %v5816, 0.0
      %v5849 = vmax.f32 %v5817, 0.0
      %v5850 = vmax.f32 %v5818, 0.0
      %v5851 = vmax.f32 %v5819, 0.0
      %v5852 = vmax.f32 %v5820, 0.0
      %v5853 = vmax.f32 %v5821, 0.0
      %v5854 = vmax.f32 %v5822, 0.0
      %v5855 = vmax.f32 %v5823, 0.0
      %v5856 = vmax.f32 %v5824, 0.0
      %v5857 = vmax.f32 %v5825, 0.0
      %v5858 = vmax.f32 %v5826, 0.0
      %v5859 = vmax.f32 %v5827, 0.0
      %v5860 = vmax.f32 %v5828, 0.0
      %v5861 = vmax.f32 %v5829, 0.0
      %vm5862 = vcmask 523264
      %5863 = vst.msk [vmem:[%s248] sm:$0xff] %vm5862, %v5830
      %5864 = vst.msk [vmem:[%s248 + $0x8] sm:$0xff] %vm5862, %v5831
      %5865 = vst.msk [vmem:[%s248 + $0x10] sm:$0xff] %vm5862, %v5832
      %5866 = vst.msk [vmem:[%s248 + $0x18] sm:$0xff] %vm5862, %v5833
      %5867 = vst.msk [vmem:[%s248 + $0x20] sm:$0xff] %vm5862, %v5834
      %5868 = vst.msk [vmem:[%s248 + $0x28] sm:$0xff] %vm5862, %v5835
      %5869 = vst.msk [vmem:[%s248 + $0x30] sm:$0xff] %vm5862, %v5836
      %5870 = vst.msk [vmem:[%s248 + $0x38] sm:$0xff] %vm5862, %v5837
      %5871 = vst.msk [vmem:[%s248 + $0x40] sm:$0xff] %vm5862, %v5838
      %5872 = vst.msk [vmem:[%s248 + $0x48] sm:$0xff] %vm5862, %v5839
      %5873 = vst.msk [vmem:[%s248 + $0x50] sm:$0xff] %vm5862, %v5840
      %5874 = vst.msk [vmem:[%s248 + $0x58] sm:$0xff] %vm5862, %v5841
      %5875 = vst.msk [vmem:[%s248 + $0x60] sm:$0xff] %vm5862, %v5842
      %5876 = vst.msk [vmem:[%s248 + $0x68] sm:$0xff] %vm5862, %v5843
      %5877 = vst.msk [vmem:[%s248 + $0x70] sm:$0xff] %vm5862, %v5844
      %5878 = vst.msk [vmem:[%s248 + $0x78] sm:$0xff] %vm5862, %v5845
      %5879 = vst.msk [vmem:[%s248 + $0x80] sm:$0xff] %vm5862, %v5846
      %5880 = vst.msk [vmem:[%s248 + $0x88] sm:$0xff] %vm5862, %v5847
      %5881 = vst.msk [vmem:[%s248 + $0x90] sm:$0xff] %vm5862, %v5848
      %5882 = vst.msk [vmem:[%s248 + $0x98] sm:$0xff] %vm5862, %v5849
      %5883 = vst.msk [vmem:[%s248 + $0xa0] sm:$0xff] %vm5862, %v5850
      %5884 = vst.msk [vmem:[%s248 + $0xa8] sm:$0xff] %vm5862, %v5851
      %5885 = vst.msk [vmem:[%s248 + $0xb0] sm:$0xff] %vm5862, %v5852
      %5886 = vst.msk [vmem:[%s248 + $0xb8] sm:$0xff] %vm5862, %v5853
      %5887 = vst.msk [vmem:[%s248 + $0xc0] sm:$0xff] %vm5862, %v5854
      %5888 = vst.msk [vmem:[%s248 + $0xc8] sm:$0xff] %vm5862, %v5855
      %5889 = vst.msk [vmem:[%s248 + $0xd0] sm:$0xff] %vm5862, %v5856
      %5890 = vst.msk [vmem:[%s248 + $0xd8] sm:$0xff] %vm5862, %v5857
      %5891 = vst.msk [vmem:[%s248 + $0xe0] sm:$0xff] %vm5862, %v5858
      %5892 = vst.msk [vmem:[%s248 + $0xe8] sm:$0xff] %vm5862, %v5859
      %5893 = vst.msk [vmem:[%s248 + $0xf0] sm:$0xff] %vm5862, %v5860
      %5894 = vst.msk [vmem:[%s248 + $0xf8] sm:$0xff] %vm5862, %v5861
      %s5895 = smul.u32 32, %s16
      %p5896 = scmp.lt.s32.totalorder %s5895, 127
      %s5897 = scalar_select %p5896, %s5895, 127
      %s5898 = smul.addr %s5897, 8
      %s5899 = scalar_lea.vmem %s5, %s5898
      // Predicated region
      $region41: #{tpu_custom_call.1} parent=39 // pred_check
        %p5900 = pneg %p149
      $region42: #{tpu_custom_call.1} parent=39 // pred_check_branch
        %5902 = sbr.rel (%p5900) target = $region44
      $region43: #{tpu_custom_call.1} parent=39 // pred_region
        %s5903 = smul.u32 32, %s16
      $region44: #{tpu_custom_call.1} parent=39 // pred_fallthru
        _
    $region40: #{tpu_custom_call.1} parent=5 // pred_fallthru
      _
    %p5904 = scmp.le.s32.totalorder 2, %s11
    // Predicated region
    $region45: #{tpu_custom_call.1} parent=5 // pred_check
      %p5905 = pneg %p5904
    $region46: #{tpu_custom_call.1} parent=5 // pred_check_branch
      %5907 = sbr.rel (%p5905) target = $region48
    $region47: #{tpu_custom_call.1} parent=5 // pred_region
      %s5908 = ssub.s32 %s11, 2
      // Predicated region
      $region49: #{tpu_custom_call.1} parent=47 // pred_check
        %p5909 = pneg %p155
      $region50: #{tpu_custom_call.1} parent=47 // pred_check_branch
        %5911 = sbr.rel (%p5909) target = $region52
      $region51: #{tpu_custom_call.1} parent=47 // pred_region
        %s5912 = smul.u32 32, %s17
        %p5913 = scmp.lt.s32.totalorder %s5912, 127
        %s5914 = scalar_select %p5913, %s5912, 127
        %s5915 = smul.addr %s5914, 8
        %s5916 = scalar_lea.vmem %s5, %s5915
      $region52: #{tpu_custom_call.1} parent=47 // pred_fallthru
        _
    $region48: #{tpu_custom_call.1} parent=5 // pred_fallthru
      _
  $region6: #{tpu_custom_call.1} parent=0 // loop_footer
    %s15 = sadd.s32 1, %s11
  $region7: #{tpu_custom_call.1} parent=0 // loop_footer_branch
    %10 = sbr.rel target = $region3
  $region8: #{tpu_custom_call.1} parent=0 // loop_exit
    _

</llo_original>
